<compile_context>
chip_gen: v6e
topology: v6e:2x2x1
jax: 0.10.0
libtpu: 0.0.40
codegen_flags: <defaults>
</compile_context>

<pallas_src>
import jax
import jax.numpy as jnp
from jax.experimental import pallas as pl
from jax.experimental.pallas import tpu as pltpu


def _round_up(x, m):
    return (x + m - 1) // m * m


def _mlp_kernel(idx_ref, attr_ref, node_ref,
                w1_ref, b1_ref, w2_ref, b2_ref, w3_ref, b3_ref,
                out_ref):
    """One edge tile: in-VMEM one-hot gather of both endpoints + fused MLP."""
    node = node_ref[...]                      # (N, H) bf16, already relu'd
    n_nodes = node.shape[0]
    tile = idx_ref.shape[0]

    # One-hot row selection of the two endpoint embeddings.  Never indexes
    # memory with the (possibly garbage, ragged-tail) edge ids -> OOB-safe;
    # an invalid id yields an all-zero row which Pallas drops on writeback.
    node_ids = jax.lax.broadcasted_iota(jnp.int32, (tile, n_nodes), 1)
    src_oh = jnp.where(idx_ref[:, 0:1] == node_ids, 1.0, 0.0).astype(node.dtype)
    dst_oh = jnp.where(idx_ref[:, 1:2] == node_ids, 1.0, 0.0).astype(node.dtype)
    src = jnp.dot(src_oh, node, preferred_element_type=jnp.float32).astype(jnp.bfloat16)
    dst = jnp.dot(dst_oh, node, preferred_element_type=jnp.float32).astype(jnp.bfloat16)

    # (tile, 3H) activation built in registers; one K=3H MXU pass for layer 1.
    x = jnp.concatenate([src, dst, attr_ref[...]], axis=1)

    # Linear(3H -> H) + bias + ReLU   (Dropout = identity, eval mode)
    h1 = jnp.dot(x, w1_ref[...], preferred_element_type=jnp.float32) + b1_ref[...]
    h1 = jnp.maximum(h1, 0.0).astype(jnp.bfloat16)

    # Linear(H -> H/2) + bias + ReLU  (Dropout = identity, eval mode)
    h2 = jnp.dot(h1, w2_ref[...], preferred_element_type=jnp.float32) + b2_ref[...]
    h2 = jnp.maximum(h2, 0.0).astype(jnp.bfloat16)

    # Linear(H/2 -> num_labels) — narrow (num_labels-wide) store, no lane padding.
    out_ref[...] = (jnp.dot(h2, w3_ref[...], preferred_element_type=jnp.float32)
                    + b3_ref[...]).astype(out_ref.dtype)


def coherence_relations_classifier(node_embeddings, edge_index, edge_attr, params,
                                    *, max_edge_tile=2048):
    """Forward pass of CoherenceRelationsClassifier (eval mode).

    node_embeddings: (N, H) float; edge_index: (2, E) int (torch convention);
    edge_attr: (E, H) float/bf16.  Returns (E, num_edge_labels) float32 logits.
    """
    N, H = node_embeddings.shape
    E = edge_index.shape[1]
    w1, b1, w2, b2, w3, b3 = params            # [in, out] layout
    num_labels = w3.shape[1]

    # relu commutes with the per-edge row gather, so apply it once to the tiny
    # (N, H) node table instead of per edge.  MXU operands in bf16, biases f32.
    node_tbl = jnp.maximum(node_embeddings, 0.0).astype(jnp.bfloat16)
    edge_attr = edge_attr.astype(jnp.bfloat16)        # no-op if already bf16
    edge_idx = edge_index.T.astype(jnp.int32)         # (E, 2): 8 B/edge streamed

    w1b, w2b, w3b = (w.astype(jnp.bfloat16) for w in (w1, w2, w3))
    b1f, b2f, b3f = (b.astype(jnp.float32) for b in (b1, b2, b3))

    # Large tiles for DMA efficiency; keep >= 2 grid steps so the "parallel"
    # axis can span both v7x TensorCores.
    edge_tile = min(max_edge_tile, _round_up(max(pl.cdiv(E, 2), 8), 256))
    grid = (pl.cdiv(E, edge_tile),)

    full = lambda a: pl.BlockSpec(a.shape, lambda i: (0,) * a.ndim)  # resident block

    out = pl.pallas_call(
        _mlp_kernel,
        out_shape=jax.ShapeDtypeStruct((E, num_labels), jnp.float32),
        grid_spec=pltpu.PrefetchScalarGridSpec(
            num_scalar_prefetch=0,
            grid=grid,
            in_specs=[
                pl.BlockSpec((edge_tile, 2), lambda i: (i, 0)),   # endpoint ids
                pl.BlockSpec((edge_tile, H), lambda i: (i, 0)),   # edge_attr
                full(node_tbl),                                    # relu'd node table
                full(w1b), full(b1f),
                full(w2b), full(b2f),
                full(w3b), full(b3f),
            ],
            out_specs=pl.BlockSpec((edge_tile, num_labels), lambda i: (i, 0)),
        ),
        compiler_params=pltpu.CompilerParams(
            dimension_semantics=("parallel",),
            vmem_limit_bytes=32 * 1024 * 1024,
        ),
    )(edge_idx, edge_attr, node_tbl, w1b, b1f, w2b, b2f, w3b, b3f)

    return out


def init_params(key, hidden_dim, num_edge_labels):
    """Deterministic synthetic params.  Weights stored as [in, out] (i.e. W.T
    relative to torch.nn.Linear's [out, in])."""
    H, H2 = hidden_dim, hidden_dim // 2
    ks = jax.random.split(key, 6)
    scale = 0.05
    w1 = scale * jax.random.normal(ks[0], (3 * H, H), jnp.float32)
    b1 = scale * jax.random.normal(ks[1], (1, H), jnp.float32)
    w2 = scale * jax.random.normal(ks[2], (H, H2), jnp.float32)
    b2 = scale * jax.random.normal(ks[3], (1, H2), jnp.float32)
    w3 = scale * jax.random.normal(ks[4], (H2, num_edge_labels), jnp.float32)
    b3 = scale * jax.random.normal(ks[5], (1, num_edge_labels), jnp.float32)
    return (w1, b1, w2, b2, w3, b3)


def reference_forward(node_embeddings, edge_index, edge_attr, params):
    """Plain-JAX f32 mirror of the PyTorch forward (eval mode) for validation."""
    w1, b1, w2, b2, w3, b3 = params
    H = node_embeddings.shape[1]
    gathered = node_embeddings[edge_index.T].reshape(-1, 2 * H)
    x = jax.nn.relu(gathered)
    x = jnp.concatenate([x, edge_attr.astype(x.dtype)], axis=1)
    h = jax.nn.relu(x @ w1 + b1)
    h = jax.nn.relu(h @ w2 + b2)
    return h @ w3 + b3


if __name__ == "__main__":
    hidden_dim = 32
    num_edge_labels = 6
    num_nodes = 50
    num_edges = 600       # not a multiple of the tile -> exercises the ragged last block

    key = jax.random.PRNGKey(0)
    k_emb, k_idx, k_attr, k_par = jax.random.split(key, 4)

    node_embeddings = jax.random.normal(k_emb, (num_nodes, hidden_dim), jnp.float32)
    edge_index = jax.random.randint(k_idx, (2, num_edges), 0, num_nodes, jnp.int32)
    # Streamed activations arrive in bf16 (the kernel's native streaming dtype).
    edge_attr = jax.random.normal(
        k_attr, (num_edges, hidden_dim), jnp.float32).astype(jnp.bfloat16)
    params = init_params(k_par, hidden_dim, num_edge_labels)

    out = coherence_relations_classifier(node_embeddings, edge_index, edge_attr, params)
    out = jax.block_until_ready(out)

    ref = reference_forward(node_embeddings, edge_index, edge_attr, params)
    assert out.shape == (num_edges, num_edge_labels)
    err = float(jnp.max(jnp.abs(out - ref)))
    # bf16 streaming operands vs f32 reference -> loosened tolerance.
    assert err < 3e-2, err

    print("KERNEL_OK")
</pallas_src>

<mosaic_0001>
module attributes {stable_mosaic.version = 11 : i64} {
  func.func @_mlp_kernel(%arg0: i32, %arg1: memref<512x2xi32, #tpu.memory_space<vmem>>, %arg2: memref<512x32xbf16, #tpu.memory_space<vmem>>, %arg3: memref<50x32xbf16, #tpu.memory_space<vmem>>, %arg4: memref<96x32xbf16, #tpu.memory_space<vmem>>, %arg5: memref<1x32xf32, #tpu.memory_space<vmem>>, %arg6: memref<32x16xbf16, #tpu.memory_space<vmem>>, %arg7: memref<1x16xf32, #tpu.memory_space<vmem>>, %arg8: memref<16x6xbf16, #tpu.memory_space<vmem>>, %arg9: memref<1x6xf32, #tpu.memory_space<vmem>>, %arg10: memref<512x6xf32, #tpu.memory_space<vmem>>) attributes {dimension_semantics = [#tpu.dimension_semantics<parallel>], iteration_bounds = array<i64: 2>, scalar_prefetch = 0 : i64, scratch_operands = 0 : i64, tpu.core_type = #tpu.core_type<tc>, window_params = [{transform_indices = @transform_0, window_bounds = array<i64: 512, 2>}, {transform_indices = @transform_1, window_bounds = array<i64: 512, 32>}, {pipeline_mode = #tpu.pipeline_mode<synchronous>, transform_indices = @transform_2, window_bounds = array<i64: 50, 32>}, {pipeline_mode = #tpu.pipeline_mode<synchronous>, transform_indices = @transform_3, window_bounds = array<i64: 96, 32>}, {pipeline_mode = #tpu.pipeline_mode<synchronous>, transform_indices = @transform_4, window_bounds = array<i64: 1, 32>}, {pipeline_mode = #tpu.pipeline_mode<synchronous>, transform_indices = @transform_5, window_bounds = array<i64: 32, 16>}, {pipeline_mode = #tpu.pipeline_mode<synchronous>, transform_indices = @transform_6, window_bounds = array<i64: 1, 16>}, {pipeline_mode = #tpu.pipeline_mode<synchronous>, transform_indices = @transform_7, window_bounds = array<i64: 16, 6>}, {pipeline_mode = #tpu.pipeline_mode<synchronous>, transform_indices = @transform_8, window_bounds = array<i64: 1, 6>}, {transform_indices = @transform_9, window_bounds = array<i64: 512, 6>}]} {
    %c0 = arith.constant 0 : index
    %c0_0 = arith.constant 0 : index
    %0 = vector.load %arg3[%c0, %c0_0] : memref<50x32xbf16, #tpu.memory_space<vmem>>, vector<50x32xbf16>
    %1 = tpu.iota {dimensions = array<i32: 1>} : vector<512x50xi32>
    %c0_1 = arith.constant 0 : index
    %c0_2 = arith.constant 0 : index
    %2 = vector.load %arg1[%c0_1, %c0_2] : memref<512x2xi32, #tpu.memory_space<vmem>>, vector<512x1xi32>
    %3 = vector.broadcast %2 : vector<512x1xi32> to vector<512x50xi32>
    %4 = arith.cmpi eq, %3, %1 : vector<512x50xi32>
    %cst = arith.constant 1.000000e+00 : f32
    %cst_3 = arith.constant 0.000000e+00 : f32
    %5 = vector.broadcast %cst : f32 to vector<512x50xf32>
    %6 = vector.broadcast %cst_3 : f32 to vector<512x50xf32>
    %7 = arith.select %4, %5, %6 : vector<512x50xi1>, vector<512x50xf32>
    %8 = arith.truncf %7 : vector<512x50xf32> to vector<512x50xbf16>
    %c0_4 = arith.constant 0 : index
    %c1 = arith.constant 1 : index
    %9 = vector.load %arg1[%c0_4, %c1] : memref<512x2xi32, #tpu.memory_space<vmem>>, vector<512x1xi32>
    %10 = vector.broadcast %9 : vector<512x1xi32> to vector<512x50xi32>
    %11 = arith.cmpi eq, %10, %1 : vector<512x50xi32>
    %cst_5 = arith.constant 1.000000e+00 : f32
    %cst_6 = arith.constant 0.000000e+00 : f32
    %12 = vector.broadcast %cst_5 : f32 to vector<512x50xf32>
    %13 = vector.broadcast %cst_6 : f32 to vector<512x50xf32>
    %14 = arith.select %11, %12, %13 : vector<512x50xi1>, vector<512x50xf32>
    %15 = arith.truncf %14 : vector<512x50xf32> to vector<512x50xbf16>
    %cst_7 = arith.constant dense<0.000000e+00> : vector<512x32xf32>
    %16 = tpu.matmul %8, %0, %cst_7 {dimension_numbers = #tpu.dot_dimension_numbers<[1], [0], [0], [1], [0, 0, 1, 1], [], []>} : vector<512x50xbf16>, vector<50x32xbf16>, vector<512x32xf32> -> vector<512x32xf32>
    %17 = arith.truncf %16 : vector<512x32xf32> to vector<512x32xbf16>
    %cst_8 = arith.constant dense<0.000000e+00> : vector<512x32xf32>
    %18 = tpu.matmul %15, %0, %cst_8 {dimension_numbers = #tpu.dot_dimension_numbers<[1], [0], [0], [1], [0, 0, 1, 1], [], []>} : vector<512x50xbf16>, vector<50x32xbf16>, vector<512x32xf32> -> vector<512x32xf32>
    %19 = arith.truncf %18 : vector<512x32xf32> to vector<512x32xbf16>
    %c0_9 = arith.constant 0 : index
    %c0_10 = arith.constant 0 : index
    %20 = vector.load %arg2[%c0_9, %c0_10] : memref<512x32xbf16, #tpu.memory_space<vmem>>, vector<512x32xbf16>
    %21 = tpu.concatenate %17, %19, %20 in 1 : vector<512x32xbf16>, vector<512x32xbf16>, vector<512x32xbf16> -> vector<512x96xbf16>
    %c0_11 = arith.constant 0 : index
    %c0_12 = arith.constant 0 : index
    %22 = vector.load %arg4[%c0_11, %c0_12] : memref<96x32xbf16, #tpu.memory_space<vmem>>, vector<96x32xbf16>
    %cst_13 = arith.constant dense<0.000000e+00> : vector<512x32xf32>
    %23 = tpu.matmul %21, %22, %cst_13 {dimension_numbers = #tpu.dot_dimension_numbers<[1], [0], [0], [1], [0, 0, 1, 1], [], []>} : vector<512x96xbf16>, vector<96x32xbf16>, vector<512x32xf32> -> vector<512x32xf32>
    %c0_14 = arith.constant 0 : index
    %c0_15 = arith.constant 0 : index
    %24 = vector.load %arg5[%c0_14, %c0_15] : memref<1x32xf32, #tpu.memory_space<vmem>>, vector<1x32xf32>
    %25 = vector.broadcast %24 : vector<1x32xf32> to vector<512x32xf32>
    %26 = arith.addf %23, %25 : vector<512x32xf32>
    %cst_16 = arith.constant 0.000000e+00 : f32
    %27 = vector.broadcast %cst_16 : f32 to vector<512x32xf32>
    %28 = arith.maximumf %26, %27 : vector<512x32xf32>
    %29 = arith.truncf %28 : vector<512x32xf32> to vector<512x32xbf16>
    %c0_17 = arith.constant 0 : index
    %c0_18 = arith.constant 0 : index
    %30 = vector.load %arg6[%c0_17, %c0_18] : memref<32x16xbf16, #tpu.memory_space<vmem>>, vector<32x16xbf16>
    %cst_19 = arith.constant dense<0.000000e+00> : vector<512x16xf32>
    %31 = tpu.matmul %29, %30, %cst_19 {dimension_numbers = #tpu.dot_dimension_numbers<[1], [0], [0], [1], [0, 0, 1, 1], [], []>} : vector<512x32xbf16>, vector<32x16xbf16>, vector<512x16xf32> -> vector<512x16xf32>
    %c0_20 = arith.constant 0 : index
    %c0_21 = arith.constant 0 : index
    %32 = vector.load %arg7[%c0_20, %c0_21] : memref<1x16xf32, #tpu.memory_space<vmem>>, vector<1x16xf32>
    %33 = vector.broadcast %32 : vector<1x16xf32> to vector<512x16xf32>
    %34 = arith.addf %31, %33 : vector<512x16xf32>
    %cst_22 = arith.constant 0.000000e+00 : f32
    %35 = vector.broadcast %cst_22 : f32 to vector<512x16xf32>
    %36 = arith.maximumf %34, %35 : vector<512x16xf32>
    %37 = arith.truncf %36 : vector<512x16xf32> to vector<512x16xbf16>
    %c0_23 = arith.constant 0 : index
    %c0_24 = arith.constant 0 : index
    %38 = vector.load %arg8[%c0_23, %c0_24] : memref<16x6xbf16, #tpu.memory_space<vmem>>, vector<16x6xbf16>
    %cst_25 = arith.constant dense<0.000000e+00> : vector<512x6xf32>
    %39 = tpu.matmul %37, %38, %cst_25 {dimension_numbers = #tpu.dot_dimension_numbers<[1], [0], [0], [1], [0, 0, 1, 1], [], []>} : vector<512x16xbf16>, vector<16x6xbf16>, vector<512x6xf32> -> vector<512x6xf32>
    %c0_26 = arith.constant 0 : index
    %c0_27 = arith.constant 0 : index
    %40 = vector.load %arg9[%c0_26, %c0_27] : memref<1x6xf32, #tpu.memory_space<vmem>>, vector<1x6xf32>
    %41 = vector.broadcast %40 : vector<1x6xf32> to vector<512x6xf32>
    %42 = arith.addf %39, %41 : vector<512x6xf32>
    %c0_28 = arith.constant 0 : index
    %c0_29 = arith.constant 0 : index
    %43 = vector.load %arg10[%c0_28, %c0_29] : memref<512x6xf32, #tpu.memory_space<vmem>>, vector<512x6xf32>
    tpu.vector_store %arg10[%c0_28, %c0_29], %42 {strides = array<i32>} : memref<512x6xf32, #tpu.memory_space<vmem>>, vector<512x6xf32>,
    return
  }
  func.func @transform_0(%arg0: i32) -> (i32, i32) {
    %c0_i32 = arith.constant 0 : i32
    %c0_i32_0 = arith.constant 0 : i32
    return %arg0, %c0_i32 : i32, i32
  }
  func.func @transform_1(%arg0: i32) -> (i32, i32) {
    %c0_i32 = arith.constant 0 : i32
    %c0_i32_0 = arith.constant 0 : i32
    return %arg0, %c0_i32 : i32, i32
  }
  func.func @transform_2(%arg0: i32) -> (i32, i32) {
    %c0_i32 = arith.constant 0 : i32
    %c0_i32_0 = arith.constant 0 : i32
    %c0_i32_1 = arith.constant 0 : i32
    return %c0_i32, %c0_i32_0 : i32, i32
  }
  func.func @transform_3(%arg0: i32) -> (i32, i32) {
    %c0_i32 = arith.constant 0 : i32
    %c0_i32_0 = arith.constant 0 : i32
    %c0_i32_1 = arith.constant 0 : i32
    return %c0_i32, %c0_i32_0 : i32, i32
  }
  func.func @transform_4(%arg0: i32) -> (i32, i32) {
    %c0_i32 = arith.constant 0 : i32
    %c0_i32_0 = arith.constant 0 : i32
    %c0_i32_1 = arith.constant 0 : i32
    return %c0_i32, %c0_i32_0 : i32, i32
  }
  func.func @transform_5(%arg0: i32) -> (i32, i32) {
    %c0_i32 = arith.constant 0 : i32
    %c0_i32_0 = arith.constant 0 : i32
    %c0_i32_1 = arith.constant 0 : i32
    return %c0_i32, %c0_i32_0 : i32, i32
  }
  func.func @transform_6(%arg0: i32) -> (i32, i32) {
    %c0_i32 = arith.constant 0 : i32
    %c0_i32_0 = arith.constant 0 : i32
    %c0_i32_1 = arith.constant 0 : i32
    return %c0_i32, %c0_i32_0 : i32, i32
  }
  func.func @transform_7(%arg0: i32) -> (i32, i32) {
    %c0_i32 = arith.constant 0 : i32
    %c0_i32_0 = arith.constant 0 : i32
    %c0_i32_1 = arith.constant 0 : i32
    return %c0_i32, %c0_i32_0 : i32, i32
  }
  func.func @transform_8(%arg0: i32) -> (i32, i32) {
    %c0_i32 = arith.constant 0 : i32
    %c0_i32_0 = arith.constant 0 : i32
    %c0_i32_1 = arith.constant 0 : i32
    return %c0_i32, %c0_i32_0 : i32, i32
  }
  func.func @transform_9(%arg0: i32) -> (i32, i32) {
    %c0_i32 = arith.constant 0 : i32
    %c0_i32_0 = arith.constant 0 : i32
    return %arg0, %c0_i32 : i32, i32
  }
}

</mosaic_0001>

<llo_original>
// kernel: tpu_custom_call.1
$region0: #{tpu_custom_call.1}
  #allocation0 [shape = 'u32[]', space=smem, size = 0x4, offset = 0x4, fixed_abs, tag = 'smem constant byte address 0x4 - core index']
  #allocation1 [shape = 'u32[144,128]{1,0:T(1,128)}', space=vmem, size = 0x12000, scoped, tag = 'internal scratch']
  %s0 = inlined_call_operand.vmem [shape: s32[600,2], index: 0, kind: input, shape index: {}]
  %s1 = inlined_call_operand.vmem [shape: bf16[600,32], index: 1, kind: input, shape index: {}]
  %s2 = inlined_call_operand.vmem [shape: bf16[50,32], index: 2, kind: input, shape index: {}]
  %s3 = inlined_call_operand.vmem [shape: bf16[96,32], index: 3, kind: input, shape index: {}]
  %s4 = inlined_call_operand.vmem [shape: f32[1,32], index: 4, kind: input, shape index: {}]
  %s5 = inlined_call_operand.vmem [shape: bf16[32,16], index: 5, kind: input, shape index: {}]
  %s6 = inlined_call_operand.vmem [shape: f32[1,16], index: 6, kind: input, shape index: {}]
  %s7 = inlined_call_operand.vmem [shape: bf16[16,6], index: 7, kind: input, shape index: {}]
  %s8 = inlined_call_operand.vmem [shape: f32[1,6], index: 8, kind: input, shape index: {}]
  %s9 = inlined_call_operand.vmem [shape: f32[600,6], index: 9, kind: output, shape index: {}]
  %s10 = sld [smem:[#allocation0]]
  $region117: #{tpu_custom_call.1} parent=0
    _
  %s12 = ssub.s32 1, %s10
  %s13 = scalar_select 0, %s12, %s10
  $region1: #{tpu_custom_call.1} parent=0
    #allocation2 [shape = 'u8[524288]{0}', space=vmem, size = 0x80000, scoped, tag = 'output window, operand 0']
    loop: start=0, step=1, limit=4
    $region2: #{tpu_custom_call.1} parent=1 // loop_pre_header
      _
    $region3: #{tpu_custom_call.1} parent=1 // loop_header
      %s15 = sphi 0, %s19
      %p16 = scmp.ge.s32.totalorder %s15, 4
      %s25 = sphi 0, %s27
      %s28 = sphi 0, %s25
      %s29 = sphi 0, %s28
      %s45 = sphi 0, %s29
      %s51 = sphi 0, %s53
      %s54 = sphi 0, %s51
      %s55 = sphi 0, %s54
      %s71 = sphi 0, %s55
      %s75 = sphi 0, %s75
      %s77 = sphi 0, %s75
      %s78 = sphi 0, %s77
      %s92 = sphi 0, %s78
      %s96 = sphi 0, %s96
      %s98 = sphi 0, %s96
      %s99 = sphi 0, %s98
      %s113 = sphi 0, %s99
      %s117 = sphi 0, %s117
      %s119 = sphi 0, %s117
      %s120 = sphi 0, %s119
      %s134 = sphi 0, %s120
      %s138 = sphi 0, %s138
      %s140 = sphi 0, %s138
      %s141 = sphi 0, %s140
      %s155 = sphi 0, %s141
      %s159 = sphi 0, %s159
      %s161 = sphi 0, %s159
      %s162 = sphi 0, %s161
      %s176 = sphi 0, %s162
      %s180 = sphi 0, %s180
      %s182 = sphi 0, %s180
      %s183 = sphi 0, %s182
      %s197 = sphi 0, %s183
      %s201 = sphi 0, %s201
      %s203 = sphi 0, %s201
      %s204 = sphi 0, %s203
      %s218 = sphi 0, %s204
      %s224 = sphi 0, %s226
      %s227 = sphi 0, %s224
      %s228 = sphi 0, %s227
      %s244 = sphi 0, %s228
    $region4: #{tpu_custom_call.1} parent=1 // loop_header_branch
      %18 = sbr.rel (%p16) target = $region8
    $region5: #{tpu_custom_call.1} parent=1 // loop_body
      %s20 = ssub.s32 %s15, 1
      %s21 = ssub.s32 %s15, 2
      %s22 = sadd.s32 %s15, 1
      %s23 = ssub.s32 %s15, %s22
      %p24 = scmp.eq.s32.totalorder %s23, 0
      %s26 = sadd.s32 %s25, 1
      %s27 = scalar_select %p24, %s25, %s26
      %p30 = pneg %p24
      %p31 = scmp.eq.s32.totalorder %s15, 1
      %p32 = por %p30, %p31
      %p33 = scmp.ne.s32.totalorder %s25, %s28
      %p34 = scmp.eq.s32.totalorder %s15, 0
      %p35 = por %p33, %p34
      %p36 = scmp.ne.s32.totalorder %s25, %s28
      %p37 = scmp.eq.s32.totalorder %s20, 1
      %p38 = por %p36, %p37
      %p39 = scmp.ne.s32.totalorder %s28, %s29
      %p40 = scmp.eq.s32.totalorder %s20, 0
      %p41 = por %p39, %p40
      %p42 = scmp.ne.s32.totalorder %s28, %s29
      %p43 = scmp.eq.s32.totalorder %s21, 1
      %p44 = por %p42, %p43
      %p46 = scmp.ne.s32.totalorder %s29, %s45
      %p47 = scmp.eq.s32.totalorder %s21, 0
      %p48 = por %p46, %p47
      %s49 = ssub.s32 %s15, %s22
      %p50 = scmp.eq.s32.totalorder %s49, 0
      %s52 = sadd.s32 %s51, 1
      %s53 = scalar_select %p50, %s51, %s52
      %p56 = pneg %p50
      %p57 = scmp.eq.s32.totalorder %s15, 1
      %p58 = por %p56, %p57
      %p59 = scmp.ne.s32.totalorder %s51, %s54
      %p60 = scmp.eq.s32.totalorder %s15, 0
      %p61 = por %p59, %p60
      %p62 = scmp.ne.s32.totalorder %s51, %s54
      %p63 = scmp.eq.s32.totalorder %s20, 1
      %p64 = por %p62, %p63
      %p65 = scmp.ne.s32.totalorder %s54, %s55
      %p66 = scmp.eq.s32.totalorder %s20, 0
      %p67 = por %p65, %p66
      %p68 = scmp.ne.s32.totalorder %s54, %s55
      %p69 = scmp.eq.s32.totalorder %s21, 1
      %p70 = por %p68, %p69
      %p72 = scmp.ne.s32.totalorder %s55, %s71
      %p73 = scmp.eq.s32.totalorder %s21, 0
      %p74 = por %p72, %p73
      %s76 = sadd.s32 %s75, 1
      %p79 = scmp.eq.s32.totalorder %s15, 1
      %p80 = scmp.ne.s32.totalorder %s75, %s77
      %p81 = scmp.eq.s32.totalorder %s15, 0
      %p82 = por %p80, %p81
      %p83 = scmp.ne.s32.totalorder %s75, %s77
      %p84 = scmp.eq.s32.totalorder %s20, 1
      %p85 = por %p83, %p84
      %p86 = scmp.ne.s32.totalorder %s77, %s78
      %p87 = scmp.eq.s32.totalorder %s20, 0
      %p88 = por %p86, %p87
      %p89 = scmp.ne.s32.totalorder %s77, %s78
      %p90 = scmp.eq.s32.totalorder %s21, 1
      %p91 = por %p89, %p90
      %p93 = scmp.ne.s32.totalorder %s78, %s92
      %p94 = scmp.eq.s32.totalorder %s21, 0
      %p95 = por %p93, %p94
      %s97 = sadd.s32 %s96, 1
      %p100 = scmp.eq.s32.totalorder %s15, 1
      %p101 = scmp.ne.s32.totalorder %s96, %s98
      %p102 = scmp.eq.s32.totalorder %s15, 0
      %p103 = por %p101, %p102
      %p104 = scmp.ne.s32.totalorder %s96, %s98
      %p105 = scmp.eq.s32.totalorder %s20, 1
      %p106 = por %p104, %p105
      %p107 = scmp.ne.s32.totalorder %s98, %s99
      %p108 = scmp.eq.s32.totalorder %s20, 0
      %p109 = por %p107, %p108
      %p110 = scmp.ne.s32.totalorder %s98, %s99
      %p111 = scmp.eq.s32.totalorder %s21, 1
      %p112 = por %p110, %p111
      %p114 = scmp.ne.s32.totalorder %s99, %s113
      %p115 = scmp.eq.s32.totalorder %s21, 0
      %p116 = por %p114, %p115
      %s118 = sadd.s32 %s117, 1
      %p121 = scmp.eq.s32.totalorder %s15, 1
      %p122 = scmp.ne.s32.totalorder %s117, %s119
      %p123 = scmp.eq.s32.totalorder %s15, 0
      %p124 = por %p122, %p123
      %p125 = scmp.ne.s32.totalorder %s117, %s119
      %p126 = scmp.eq.s32.totalorder %s20, 1
      %p127 = por %p125, %p126
      %p128 = scmp.ne.s32.totalorder %s119, %s120
      %p129 = scmp.eq.s32.totalorder %s20, 0
      %p130 = por %p128, %p129
      %p131 = scmp.ne.s32.totalorder %s119, %s120
      %p132 = scmp.eq.s32.totalorder %s21, 1
      %p133 = por %p131, %p132
      %p135 = scmp.ne.s32.totalorder %s120, %s134
      %p136 = scmp.eq.s32.totalorder %s21, 0
      %p137 = por %p135, %p136
      %s139 = sadd.s32 %s138, 1
      %p142 = scmp.eq.s32.totalorder %s15, 1
      %p143 = scmp.ne.s32.totalorder %s138, %s140
      %p144 = scmp.eq.s32.totalorder %s15, 0
      %p145 = por %p143, %p144
      %p146 = scmp.ne.s32.totalorder %s138, %s140
      %p147 = scmp.eq.s32.totalorder %s20, 1
      %p148 = por %p146, %p147
      %p149 = scmp.ne.s32.totalorder %s140, %s141
      %p150 = scmp.eq.s32.totalorder %s20, 0
      %p151 = por %p149, %p150
      %p152 = scmp.ne.s32.totalorder %s140, %s141
      %p153 = scmp.eq.s32.totalorder %s21, 1
      %p154 = por %p152, %p153
      %p156 = scmp.ne.s32.totalorder %s141, %s155
      %p157 = scmp.eq.s32.totalorder %s21, 0
      %p158 = por %p156, %p157
      %s160 = sadd.s32 %s159, 1
      %p163 = scmp.eq.s32.totalorder %s15, 1
      %p164 = scmp.ne.s32.totalorder %s159, %s161
      %p165 = scmp.eq.s32.totalorder %s15, 0
      %p166 = por %p164, %p165
      %p167 = scmp.ne.s32.totalorder %s159, %s161
      %p168 = scmp.eq.s32.totalorder %s20, 1
      %p169 = por %p167, %p168
      %p170 = scmp.ne.s32.totalorder %s161, %s162
      %p171 = scmp.eq.s32.totalorder %s20, 0
      %p172 = por %p170, %p171
      %p173 = scmp.ne.s32.totalorder %s161, %s162
      %p174 = scmp.eq.s32.totalorder %s21, 1
      %p175 = por %p173, %p174
      %p177 = scmp.ne.s32.totalorder %s162, %s176
      %p178 = scmp.eq.s32.totalorder %s21, 0
      %p179 = por %p177, %p178
      %s181 = sadd.s32 %s180, 1
      %p184 = scmp.eq.s32.totalorder %s15, 1
      %p185 = scmp.ne.s32.totalorder %s180, %s182
      %p186 = scmp.eq.s32.totalorder %s15, 0
      %p187 = por %p185, %p186
      %p188 = scmp.ne.s32.totalorder %s180, %s182
      %p189 = scmp.eq.s32.totalorder %s20, 1
      %p190 = por %p188, %p189
      %p191 = scmp.ne.s32.totalorder %s182, %s183
      %p192 = scmp.eq.s32.totalorder %s20, 0
      %p193 = por %p191, %p192
      %p194 = scmp.ne.s32.totalorder %s182, %s183
      %p195 = scmp.eq.s32.totalorder %s21, 1
      %p196 = por %p194, %p195
      %p198 = scmp.ne.s32.totalorder %s183, %s197
      %p199 = scmp.eq.s32.totalorder %s21, 0
      %p200 = por %p198, %p199
      %s202 = sadd.s32 %s201, 1
      %p205 = scmp.eq.s32.totalorder %s15, 1
      %p206 = scmp.ne.s32.totalorder %s201, %s203
      %p207 = scmp.eq.s32.totalorder %s15, 0
      %p208 = por %p206, %p207
      %p209 = scmp.ne.s32.totalorder %s201, %s203
      %p210 = scmp.eq.s32.totalorder %s20, 1
      %p211 = por %p209, %p210
      %p212 = scmp.ne.s32.totalorder %s203, %s204
      %p213 = scmp.eq.s32.totalorder %s20, 0
      %p214 = por %p212, %p213
      %p215 = scmp.ne.s32.totalorder %s203, %s204
      %p216 = scmp.eq.s32.totalorder %s21, 1
      %p217 = por %p215, %p216
      %p219 = scmp.ne.s32.totalorder %s204, %s218
      %p220 = scmp.eq.s32.totalorder %s21, 0
      %p221 = por %p219, %p220
      %s222 = ssub.s32 %s15, %s22
      %p223 = scmp.eq.s32.totalorder %s222, 0
      %s225 = sadd.s32 %s224, 1
      %s226 = scalar_select %p223, %s224, %s225
      %p229 = pneg %p223
      %p230 = scmp.eq.s32.totalorder %s15, 1
      %p231 = por %p229, %p230
      %p232 = scmp.ne.s32.totalorder %s224, %s227
      %p233 = scmp.eq.s32.totalorder %s15, 0
      %p234 = por %p232, %p233
      %p235 = scmp.ne.s32.totalorder %s224, %s227
      %p236 = scmp.eq.s32.totalorder %s20, 1
      %p237 = por %p235, %p236
      %p238 = scmp.ne.s32.totalorder %s227, %s228
      %p239 = scmp.eq.s32.totalorder %s20, 0
      %p240 = por %p238, %p239
      %p241 = scmp.ne.s32.totalorder %s227, %s228
      %p242 = scmp.eq.s32.totalorder %s21, 1
      %p243 = por %p241, %p242
      %p245 = scmp.ne.s32.totalorder %s228, %s244
      %p246 = scmp.eq.s32.totalorder %s21, 0
      %p247 = por %p245, %p246
      %p248 = scmp.le.s32.totalorder 1, %s15
      %p249 = scmp.lt.s32.totalorder %s15, 3
      %p250 = pnand %p248, %p249
      %p251 = pneg %p250
      // Predicated region
      $region9: #{tpu_custom_call.1} parent=5 // pred_check
        _
      $region10: #{tpu_custom_call.1} parent=5 // pred_check_branch
        %253 = sbr.rel (%p250) target = $region12
      $region11: #{tpu_custom_call.1} parent=5 // pred_region
        %s254 = ssub.s32 %s15, 1
        // Predicated region
        $region13: #{tpu_custom_call.1} parent=11 // pred_check
          %p255 = pneg %p88
        $region14: #{tpu_custom_call.1} parent=11 // pred_check_branch
          %257 = sbr.rel (%p255) target = $region16
        $region15: #{tpu_custom_call.1} parent=11 // pred_region
          _
        $region16: #{tpu_custom_call.1} parent=11 // pred_fallthru
          _
        // Predicated region
        $region17: #{tpu_custom_call.1} parent=11 // pred_check
          %p258 = pneg %p109
        $region18: #{tpu_custom_call.1} parent=11 // pred_check_branch
          %260 = sbr.rel (%p258) target = $region20
        $region19: #{tpu_custom_call.1} parent=11 // pred_region
          _
        $region20: #{tpu_custom_call.1} parent=11 // pred_fallthru
          _
        // Predicated region
        $region21: #{tpu_custom_call.1} parent=11 // pred_check
          %p261 = pneg %p130
        $region22: #{tpu_custom_call.1} parent=11 // pred_check_branch
          %263 = sbr.rel (%p261) target = $region24
        $region23: #{tpu_custom_call.1} parent=11 // pred_region
          _
        $region24: #{tpu_custom_call.1} parent=11 // pred_fallthru
          _
        // Predicated region
        $region25: #{tpu_custom_call.1} parent=11 // pred_check
          %p264 = pneg %p151
        $region26: #{tpu_custom_call.1} parent=11 // pred_check_branch
          %266 = sbr.rel (%p264) target = $region28
        $region27: #{tpu_custom_call.1} parent=11 // pred_region
          _
        $region28: #{tpu_custom_call.1} parent=11 // pred_fallthru
          _
        // Predicated region
        $region29: #{tpu_custom_call.1} parent=11 // pred_check
          %p267 = pneg %p172
        $region30: #{tpu_custom_call.1} parent=11 // pred_check_branch
          %269 = sbr.rel (%p267) target = $region32
        $region31: #{tpu_custom_call.1} parent=11 // pred_region
          _
        $region32: #{tpu_custom_call.1} parent=11 // pred_fallthru
          _
        // Predicated region
        $region33: #{tpu_custom_call.1} parent=11 // pred_check
          %p270 = pneg %p193
        $region34: #{tpu_custom_call.1} parent=11 // pred_check_branch
          %272 = sbr.rel (%p270) target = $region36
        $region35: #{tpu_custom_call.1} parent=11 // pred_region
          _
        $region36: #{tpu_custom_call.1} parent=11 // pred_fallthru
          _
        // Predicated region
        $region37: #{tpu_custom_call.1} parent=11 // pred_check
          %p273 = pneg %p214
        $region38: #{tpu_custom_call.1} parent=11 // pred_check_branch
          %275 = sbr.rel (%p273) target = $region40
        $region39: #{tpu_custom_call.1} parent=11 // pred_region
          _
        $region40: #{tpu_custom_call.1} parent=11 // pred_fallthru
          _
      $region12: #{tpu_custom_call.1} parent=5 // pred_fallthru
        _
      %p276 = scmp.lt.s32.totalorder %s15, 2
      // Predicated region
      $region41: #{tpu_custom_call.1} parent=5 // pred_check
        %p277 = pneg %p276
      $region42: #{tpu_custom_call.1} parent=5 // pred_check_branch
        %279 = sbr.rel (%p277) target = $region44
      $region43: #{tpu_custom_call.1} parent=5 // pred_region
        // Predicated region
        $region45: #{tpu_custom_call.1} parent=43 // pred_check
          %p280 = pneg %p35
        $region46: #{tpu_custom_call.1} parent=43 // pred_check_branch
          %282 = sbr.rel (%p280) target = $region48
        $region47: #{tpu_custom_call.1} parent=43 // pred_region
          %s283 = smul.u32 64, %s15
          %s284 = ssub.s32 75, %s283
          %p285 = scmp.lt.s32.totalorder %s284, 64
          %s286 = scalar_select %p285, %s284, 64
          %s287 = smul.u32 128, %s286
          %p288 = scmp.lt.s32.totalorder %s283, 74
          %s289 = scalar_select %p288, %s283, 74
          %s290 = smul.addr %s289, 8
          %s291 = scalar_lea.vmem %s0, %s290
          %s292 = smul.u32 64, %s15
          %s293 = ssub.s32 75, %s292
          %p294 = scmp.lt.s32.totalorder %s293, 64
          %s295 = scalar_select %p294, %s293, 64
          %s296 = smul.u32 128, %s295
        $region48: #{tpu_custom_call.1} parent=43 // pred_fallthru
          _
        // Predicated region
        $region49: #{tpu_custom_call.1} parent=43 // pred_check
          %p297 = pneg %p61
        $region50: #{tpu_custom_call.1} parent=43 // pred_check_branch
          %299 = sbr.rel (%p297) target = $region52
        $region51: #{tpu_custom_call.1} parent=43 // pred_region
          %s300 = smul.u32 64, %s15
          %s301 = ssub.s32 75, %s300
          %p302 = scmp.lt.s32.totalorder %s301, 64
          %s303 = scalar_select %p302, %s301, 64
          %s304 = smul.u32 64, %s303
          %p305 = scmp.lt.s32.totalorder %s300, 74
          %s306 = scalar_select %p305, %s300, 74
          %s307 = smul.addr %s306, 4
          %s308 = scalar_lea.vmem %s1, %s307
          %s309 = smul.u32 64, %s15
          %s310 = ssub.s32 75, %s309
          %p311 = scmp.lt.s32.totalorder %s310, 64
          %s312 = scalar_select %p311, %s310, 64
          %s313 = smul.u32 64, %s312
        $region52: #{tpu_custom_call.1} parent=43 // pred_fallthru
          _
      $region44: #{tpu_custom_call.1} parent=5 // pred_fallthru
        _
      %p314 = scmp.le.s32.totalorder 1, %s15
      %p315 = scmp.lt.s32.totalorder %s15, 3
      %p316 = pnand %p314, %p315
      %p317 = pneg %p316
      // Predicated region
      $region53: #{tpu_custom_call.1} parent=5 // pred_check
        _
      $region54: #{tpu_custom_call.1} parent=5 // pred_check_branch
        %319 = sbr.rel (%p316) target = $region56
      $region55: #{tpu_custom_call.1} parent=5 // pred_region
        %s320 = ssub.s32 %s15, 1
        %s321 = smul.u32 64, %s20
        %s322 = ssub.s32 75, %s321
        %p323 = scmp.lt.s32.totalorder %s322, 64
        %s324 = scalar_select %p323, %s322, 64
        %s325 = smul.u32 128, %s324
        %p326 = scmp.lt.s32.totalorder %s321, 74
        %s327 = scalar_select %p326, %s321, 74
        %s328 = smul.addr %s327, 8
        %s329 = scalar_lea.vmem %s0, %s328
        %p330 = pneg %p41
        %p331 = pneg %p38
        %s332 = smul.u32 64, %s20
        %s333 = ssub.s32 75, %s332
        %p334 = scmp.lt.s32.totalorder %s333, 64
        %s335 = scalar_select %p334, %s333, 64
        %s336 = smul.u32 64, %s335
        %p337 = scmp.lt.s32.totalorder %s332, 74
        %s338 = scalar_select %p337, %s332, 74
        %s339 = smul.addr %s338, 4
        %s340 = scalar_lea.vmem %s1, %s339
        %p341 = pneg %p67
        %p342 = pneg %p64
        %p343 = pneg %p88
        %p344 = pneg %p85
        %p345 = pneg %p109
        %p346 = pneg %p106
        %p347 = pneg %p130
        %p348 = pneg %p127
        %p349 = pneg %p151
        %p350 = pneg %p148
        %p351 = pneg %p172
        %p352 = pneg %p169
        %p353 = pneg %p193
        %p354 = pneg %p190
        %p355 = pneg %p214
        %p356 = pneg %p211
        %p357 = pneg %p240
        %p358 = pneg %p237
        %s359 = sand.u32 %s227, 1
        %s360 = sand.u32 %s227, 1
        %s361 = smul.addr %s360, 512
        %s362 = scalar_lea.vmem [#allocation2], %s361
        %s363 = smul.u32 64, %s20
        %s364 = ssub.s32 75, %s363
        %p365 = scmp.lt.s32.totalorder %s364, 64
        %s366 = scalar_select %p365, %s364, 64
        %s367 = smul.u32 128, %s366
        %p368 = scmp.lt.s32.totalorder %s363, 74
        %s369 = scalar_select %p368, %s363, 74
        %s370 = smul.addr %s369, 8
        %s371 = scalar_lea.vmem %s0, %s370
        %s372 = smul.u32 64, %s20
        %s373 = ssub.s32 75, %s372
        %p374 = scmp.lt.s32.totalorder %s373, 64
        %s375 = scalar_select %p374, %s373, 64
        %s376 = smul.u32 128, %s375
        %s377 = smul.u32 64, %s20
        %s378 = ssub.s32 75, %s377
        %p379 = scmp.lt.s32.totalorder %s378, 64
        %s380 = scalar_select %p379, %s378, 64
        %s381 = smul.u32 64, %s380
        %p382 = scmp.lt.s32.totalorder %s377, 74
        %s383 = scalar_select %p382, %s377, 74
        %s384 = smul.addr %s383, 4
        %s385 = scalar_lea.vmem %s1, %s384
        %s386 = smul.u32 64, %s20
        %s387 = ssub.s32 75, %s386
        %p388 = scmp.lt.s32.totalorder %s387, 64
        %s389 = scalar_select %p388, %s387, 64
        %s390 = smul.u32 64, %s389
        %s391 = smul.u32 64, %s20
        %s392 = ssub.s32 75, %s391
        %p393 = scmp.lt.s32.totalorder %s392, 64
        %s394 = scalar_select %p393, %s392, 64
        %s395 = smul.u32 128, %s394
        %v397 = vld [vmem:[%s2] sm:$0xf]
        %v398 = vld [vmem:[%s2 + $0x4] sm:$0xf]
        %v399 = vld [vmem:[%s2 + $0x8] sm:$0xf]
        %v400 = vld [vmem:[%s2 + $0xc] sm:$0xf]
        %v401 = vld [vmem:[%s2 + $0x10] sm:$0xf]
        %v402 = vld [vmem:[%s2 + $0x14] sm:$0xf]
        %v403 = vld [vmem:[%s2 + $0x18] sm:$0x1]
        %v404 = vlaneseq
        %v405 = vand.u32 %v404, 127
        %v406 = vld [vmem:[%s371] sm:$0xff]
        %v407 = vld [vmem:[%s371 + $0x8] sm:$0xff]
        %v408 = vld [vmem:[%s371 + $0x10] sm:$0xff]
        %v409 = vld [vmem:[%s371 + $0x18] sm:$0xff]
        %v410 = vld [vmem:[%s371 + $0x20] sm:$0xff]
        %v411 = vld [vmem:[%s371 + $0x28] sm:$0xff]
        %v412 = vld [vmem:[%s371 + $0x30] sm:$0xff]
        %v413 = vld [vmem:[%s371 + $0x38] sm:$0xff]
        %v414 = vld [vmem:[%s371 + $0x40] sm:$0xff]
        %v415 = vld [vmem:[%s371 + $0x48] sm:$0xff]
        %v416 = vld [vmem:[%s371 + $0x50] sm:$0xff]
        %v417 = vld [vmem:[%s371 + $0x58] sm:$0xff]
        %v418 = vld [vmem:[%s371 + $0x60] sm:$0xff]
        %v419 = vld [vmem:[%s371 + $0x68] sm:$0xff]
        %v420 = vld [vmem:[%s371 + $0x70] sm:$0xff]
        %v421 = vld [vmem:[%s371 + $0x78] sm:$0xff]
        %v422 = vld [vmem:[%s371 + $0x80] sm:$0xff]
        %v423 = vld [vmem:[%s371 + $0x88] sm:$0xff]
        %v424 = vld [vmem:[%s371 + $0x90] sm:$0xff]
        %v425 = vld [vmem:[%s371 + $0x98] sm:$0xff]
        %v426 = vld [vmem:[%s371 + $0xa0] sm:$0xff]
        %v427 = vld [vmem:[%s371 + $0xa8] sm:$0xff]
        %v428 = vld [vmem:[%s371 + $0xb0] sm:$0xff]
        %v429 = vld [vmem:[%s371 + $0xb8] sm:$0xff]
        %v430 = vld [vmem:[%s371 + $0xc0] sm:$0xff]
        %v431 = vld [vmem:[%s371 + $0xc8] sm:$0xff]
        %v432 = vld [vmem:[%s371 + $0xd0] sm:$0xff]
        %v433 = vld [vmem:[%s371 + $0xd8] sm:$0xff]
        %v434 = vld [vmem:[%s371 + $0xe0] sm:$0xff]
        %v435 = vld [vmem:[%s371 + $0xe8] sm:$0xff]
        %v436 = vld [vmem:[%s371 + $0xf0] sm:$0xff]
        %v437 = vld [vmem:[%s371 + $0xf8] sm:$0xff]
        %v438 = vld [vmem:[%s371 + $0x100] sm:$0xff]
        %v439 = vld [vmem:[%s371 + $0x108] sm:$0xff]
        %v440 = vld [vmem:[%s371 + $0x110] sm:$0xff]
        %v441 = vld [vmem:[%s371 + $0x118] sm:$0xff]
        %v442 = vld [vmem:[%s371 + $0x120] sm:$0xff]
        %v443 = vld [vmem:[%s371 + $0x128] sm:$0xff]
        %v444 = vld [vmem:[%s371 + $0x130] sm:$0xff]
        %v445 = vld [vmem:[%s371 + $0x138] sm:$0xff]
        %v446 = vld [vmem:[%s371 + $0x140] sm:$0xff]
        %v447 = vld [vmem:[%s371 + $0x148] sm:$0xff]
        %v448 = vld [vmem:[%s371 + $0x150] sm:$0xff]
        %v449 = vld [vmem:[%s371 + $0x158] sm:$0xff]
        %v450 = vld [vmem:[%s371 + $0x160] sm:$0xff]
        %v451 = vld [vmem:[%s371 + $0x168] sm:$0xff]
        %v452 = vld [vmem:[%s371 + $0x170] sm:$0xff]
        %v453 = vld [vmem:[%s371 + $0x178] sm:$0xff]
        %v454 = vld [vmem:[%s371 + $0x180] sm:$0xff]
        %v455 = vld [vmem:[%s371 + $0x188] sm:$0xff]
        %v456 = vld [vmem:[%s371 + $0x190] sm:$0xff]
        %v457 = vld [vmem:[%s371 + $0x198] sm:$0xff]
        %v458 = vld [vmem:[%s371 + $0x1a0] sm:$0xff]
        %v459 = vld [vmem:[%s371 + $0x1a8] sm:$0xff]
        %v460 = vld [vmem:[%s371 + $0x1b0] sm:$0xff]
        %v461 = vld [vmem:[%s371 + $0x1b8] sm:$0xff]
        %v462 = vld [vmem:[%s371 + $0x1c0] sm:$0xff]
        %v463 = vld [vmem:[%s371 + $0x1c8] sm:$0xff]
        %v464 = vld [vmem:[%s371 + $0x1d0] sm:$0xff]
        %v465 = vld [vmem:[%s371 + $0x1d8] sm:$0xff]
        %v466 = vld [vmem:[%s371 + $0x1e0] sm:$0xff]
        %v467 = vld [vmem:[%s371 + $0x1e8] sm:$0xff]
        %v468 = vld [vmem:[%s371 + $0x1f0] sm:$0xff]
        %v469 = vld [vmem:[%s371 + $0x1f8] sm:$0xff]
        %470 = vset.pattern.permute.xlu0 0
        %471 = vperm.xlu0 %470, %v406
        %v472 = vpop.permute.xlu0 %471
        %473 = vset.pattern.permute.xlu0 0
        %474 = vperm.xlu0 %473, %v407
        %v475 = vpop.permute.xlu0 %474
        %476 = vset.pattern.permute.xlu0 0
        %477 = vperm.xlu0 %476, %v408
        %v478 = vpop.permute.xlu0 %477
        %479 = vset.pattern.permute.xlu0 0
        %480 = vperm.xlu0 %479, %v409
        %v481 = vpop.permute.xlu0 %480
        %482 = vset.pattern.permute.xlu0 0
        %483 = vperm.xlu0 %482, %v410
        %v484 = vpop.permute.xlu0 %483
        %485 = vset.pattern.permute.xlu0 0
        %486 = vperm.xlu0 %485, %v411
        %v487 = vpop.permute.xlu0 %486
        %488 = vset.pattern.permute.xlu0 0
        %489 = vperm.xlu0 %488, %v412
        %v490 = vpop.permute.xlu0 %489
        %491 = vset.pattern.permute.xlu0 0
        %492 = vperm.xlu0 %491, %v413
        %v493 = vpop.permute.xlu0 %492
        %494 = vset.pattern.permute.xlu0 0
        %495 = vperm.xlu0 %494, %v414
        %v496 = vpop.permute.xlu0 %495
        %497 = vset.pattern.permute.xlu0 0
        %498 = vperm.xlu0 %497, %v415
        %v499 = vpop.permute.xlu0 %498
        %500 = vset.pattern.permute.xlu0 0
        %501 = vperm.xlu0 %500, %v416
        %v502 = vpop.permute.xlu0 %501
        %503 = vset.pattern.permute.xlu0 0
        %504 = vperm.xlu0 %503, %v417
        %v505 = vpop.permute.xlu0 %504
        %506 = vset.pattern.permute.xlu0 0
        %507 = vperm.xlu0 %506, %v418
        %v508 = vpop.permute.xlu0 %507
        %509 = vset.pattern.permute.xlu0 0
        %510 = vperm.xlu0 %509, %v419
        %v511 = vpop.permute.xlu0 %510
        %512 = vset.pattern.permute.xlu0 0
        %513 = vperm.xlu0 %512, %v420
        %v514 = vpop.permute.xlu0 %513
        %515 = vset.pattern.permute.xlu0 0
        %516 = vperm.xlu0 %515, %v421
        %v517 = vpop.permute.xlu0 %516
        %518 = vset.pattern.permute.xlu0 0
        %519 = vperm.xlu0 %518, %v422
        %v520 = vpop.permute.xlu0 %519
        %521 = vset.pattern.permute.xlu0 0
        %522 = vperm.xlu0 %521, %v423
        %v523 = vpop.permute.xlu0 %522
        %524 = vset.pattern.permute.xlu0 0
        %525 = vperm.xlu0 %524, %v424
        %v526 = vpop.permute.xlu0 %525
        %527 = vset.pattern.permute.xlu0 0
        %528 = vperm.xlu0 %527, %v425
        %v529 = vpop.permute.xlu0 %528
        %530 = vset.pattern.permute.xlu0 0
        %531 = vperm.xlu0 %530, %v426
        %v532 = vpop.permute.xlu0 %531
        %533 = vset.pattern.permute.xlu0 0
        %534 = vperm.xlu0 %533, %v427
        %v535 = vpop.permute.xlu0 %534
        %536 = vset.pattern.permute.xlu0 0
        %537 = vperm.xlu0 %536, %v428
        %v538 = vpop.permute.xlu0 %537
        %539 = vset.pattern.permute.xlu0 0
        %540 = vperm.xlu0 %539, %v429
        %v541 = vpop.permute.xlu0 %540
        %542 = vset.pattern.permute.xlu0 0
        %543 = vperm.xlu0 %542, %v430
        %v544 = vpop.permute.xlu0 %543
        %545 = vset.pattern.permute.xlu0 0
        %546 = vperm.xlu0 %545, %v431
        %v547 = vpop.permute.xlu0 %546
        %548 = vset.pattern.permute.xlu0 0
        %549 = vperm.xlu0 %548, %v432
        %v550 = vpop.permute.xlu0 %549
        %551 = vset.pattern.permute.xlu0 0
        %552 = vperm.xlu0 %551, %v433
        %v553 = vpop.permute.xlu0 %552
        %554 = vset.pattern.permute.xlu0 0
        %555 = vperm.xlu0 %554, %v434
        %v556 = vpop.permute.xlu0 %555
        %557 = vset.pattern.permute.xlu0 0
        %558 = vperm.xlu0 %557, %v435
        %v559 = vpop.permute.xlu0 %558
        %560 = vset.pattern.permute.xlu0 0
        %561 = vperm.xlu0 %560, %v436
        %v562 = vpop.permute.xlu0 %561
        %563 = vset.pattern.permute.xlu0 0
        %564 = vperm.xlu0 %563, %v437
        %v565 = vpop.permute.xlu0 %564
        %566 = vset.pattern.permute.xlu0 0
        %567 = vperm.xlu0 %566, %v438
        %v568 = vpop.permute.xlu0 %567
        %569 = vset.pattern.permute.xlu0 0
        %570 = vperm.xlu0 %569, %v439
        %v571 = vpop.permute.xlu0 %570
        %572 = vset.pattern.permute.xlu0 0
        %573 = vperm.xlu0 %572, %v440
        %v574 = vpop.permute.xlu0 %573
        %575 = vset.pattern.permute.xlu0 0
        %576 = vperm.xlu0 %575, %v441
        %v577 = vpop.permute.xlu0 %576
        %578 = vset.pattern.permute.xlu0 0
        %579 = vperm.xlu0 %578, %v442
        %v580 = vpop.permute.xlu0 %579
        %581 = vset.pattern.permute.xlu0 0
        %582 = vperm.xlu0 %581, %v443
        %v583 = vpop.permute.xlu0 %582
        %584 = vset.pattern.permute.xlu0 0
        %585 = vperm.xlu0 %584, %v444
        %v586 = vpop.permute.xlu0 %585
        %587 = vset.pattern.permute.xlu0 0
        %588 = vperm.xlu0 %587, %v445
        %v589 = vpop.permute.xlu0 %588
        %590 = vset.pattern.permute.xlu0 0
        %591 = vperm.xlu0 %590, %v446
        %v592 = vpop.permute.xlu0 %591
        %593 = vset.pattern.permute.xlu0 0
        %594 = vperm.xlu0 %593, %v447
        %v595 = vpop.permute.xlu0 %594
        %596 = vset.pattern.permute.xlu0 0
        %597 = vperm.xlu0 %596, %v448
        %v598 = vpop.permute.xlu0 %597
        %599 = vset.pattern.permute.xlu0 0
        %600 = vperm.xlu0 %599, %v449
        %v601 = vpop.permute.xlu0 %600
        %602 = vset.pattern.permute.xlu0 0
        %603 = vperm.xlu0 %602, %v450
        %v604 = vpop.permute.xlu0 %603
        %605 = vset.pattern.permute.xlu0 0
        %606 = vperm.xlu0 %605, %v451
        %v607 = vpop.permute.xlu0 %606
        %608 = vset.pattern.permute.xlu0 0
        %609 = vperm.xlu0 %608, %v452
        %v610 = vpop.permute.xlu0 %609
        %611 = vset.pattern.permute.xlu0 0
        %612 = vperm.xlu0 %611, %v453
        %v613 = vpop.permute.xlu0 %612
        %614 = vset.pattern.permute.xlu0 0
        %615 = vperm.xlu0 %614, %v454
        %v616 = vpop.permute.xlu0 %615
        %617 = vset.pattern.permute.xlu0 0
        %618 = vperm.xlu0 %617, %v455
        %v619 = vpop.permute.xlu0 %618
        %620 = vset.pattern.permute.xlu0 0
        %621 = vperm.xlu0 %620, %v456
        %v622 = vpop.permute.xlu0 %621
        %623 = vset.pattern.permute.xlu0 0
        %624 = vperm.xlu0 %623, %v457
        %v625 = vpop.permute.xlu0 %624
        %626 = vset.pattern.permute.xlu0 0
        %627 = vperm.xlu0 %626, %v458
        %v628 = vpop.permute.xlu0 %627
        %629 = vset.pattern.permute.xlu0 0
        %630 = vperm.xlu0 %629, %v459
        %v631 = vpop.permute.xlu0 %630
        %632 = vset.pattern.permute.xlu0 0
        %633 = vperm.xlu0 %632, %v460
        %v634 = vpop.permute.xlu0 %633
        %635 = vset.pattern.permute.xlu0 0
        %636 = vperm.xlu0 %635, %v461
        %v637 = vpop.permute.xlu0 %636
        %638 = vset.pattern.permute.xlu0 0
        %639 = vperm.xlu0 %638, %v462
        %v640 = vpop.permute.xlu0 %639
        %641 = vset.pattern.permute.xlu0 0
        %642 = vperm.xlu0 %641, %v463
        %v643 = vpop.permute.xlu0 %642
        %644 = vset.pattern.permute.xlu0 0
        %645 = vperm.xlu0 %644, %v464
        %v646 = vpop.permute.xlu0 %645
        %647 = vset.pattern.permute.xlu0 0
        %648 = vperm.xlu0 %647, %v465
        %v649 = vpop.permute.xlu0 %648
        %650 = vset.pattern.permute.xlu0 0
        %651 = vperm.xlu0 %650, %v466
        %v652 = vpop.permute.xlu0 %651
        %653 = vset.pattern.permute.xlu0 0
        %654 = vperm.xlu0 %653, %v467
        %v655 = vpop.permute.xlu0 %654
        %656 = vset.pattern.permute.xlu0 0
        %657 = vperm.xlu0 %656, %v468
        %v658 = vpop.permute.xlu0 %657
        %659 = vset.pattern.permute.xlu0 0
        %660 = vperm.xlu0 %659, %v469
        %v661 = vpop.permute.xlu0 %660
        %vm662 = vcmp.eq.s32.totalorder %v472, %v405
        %vm663 = vcmp.eq.s32.totalorder %v475, %v405
        %vm664 = vcmp.eq.s32.totalorder %v478, %v405
        %vm665 = vcmp.eq.s32.totalorder %v481, %v405
        %vm666 = vcmp.eq.s32.totalorder %v484, %v405
        %vm667 = vcmp.eq.s32.totalorder %v487, %v405
        %vm668 = vcmp.eq.s32.totalorder %v490, %v405
        %vm669 = vcmp.eq.s32.totalorder %v493, %v405
        %vm670 = vcmp.eq.s32.totalorder %v496, %v405
        %vm671 = vcmp.eq.s32.totalorder %v499, %v405
        %vm672 = vcmp.eq.s32.totalorder %v502, %v405
        %vm673 = vcmp.eq.s32.totalorder %v505, %v405
        %vm674 = vcmp.eq.s32.totalorder %v508, %v405
        %vm675 = vcmp.eq.s32.totalorder %v511, %v405
        %vm676 = vcmp.eq.s32.totalorder %v514, %v405
        %vm677 = vcmp.eq.s32.totalorder %v517, %v405
        %vm678 = vcmp.eq.s32.totalorder %v520, %v405
        %vm679 = vcmp.eq.s32.totalorder %v523, %v405
        %vm680 = vcmp.eq.s32.totalorder %v526, %v405
        %vm681 = vcmp.eq.s32.totalorder %v529, %v405
        %vm682 = vcmp.eq.s32.totalorder %v532, %v405
        %vm683 = vcmp.eq.s32.totalorder %v535, %v405
        %vm684 = vcmp.eq.s32.totalorder %v538, %v405
        %vm685 = vcmp.eq.s32.totalorder %v541, %v405
        %vm686 = vcmp.eq.s32.totalorder %v544, %v405
        %vm687 = vcmp.eq.s32.totalorder %v547, %v405
        %vm688 = vcmp.eq.s32.totalorder %v550, %v405
        %vm689 = vcmp.eq.s32.totalorder %v553, %v405
        %vm690 = vcmp.eq.s32.totalorder %v556, %v405
        %vm691 = vcmp.eq.s32.totalorder %v559, %v405
        %vm692 = vcmp.eq.s32.totalorder %v562, %v405
        %vm693 = vcmp.eq.s32.totalorder %v565, %v405
        %vm694 = vcmp.eq.s32.totalorder %v568, %v405
        %vm695 = vcmp.eq.s32.totalorder %v571, %v405
        %vm696 = vcmp.eq.s32.totalorder %v574, %v405
        %vm697 = vcmp.eq.s32.totalorder %v577, %v405
        %vm698 = vcmp.eq.s32.totalorder %v580, %v405
        %vm699 = vcmp.eq.s32.totalorder %v583, %v405
        %vm700 = vcmp.eq.s32.totalorder %v586, %v405
        %vm701 = vcmp.eq.s32.totalorder %v589, %v405
        %vm702 = vcmp.eq.s32.totalorder %v592, %v405
        %vm703 = vcmp.eq.s32.totalorder %v595, %v405
        %vm704 = vcmp.eq.s32.totalorder %v598, %v405
        %vm705 = vcmp.eq.s32.totalorder %v601, %v405
        %vm706 = vcmp.eq.s32.totalorder %v604, %v405
        %vm707 = vcmp.eq.s32.totalorder %v607, %v405
        %vm708 = vcmp.eq.s32.totalorder %v610, %v405
        %vm709 = vcmp.eq.s32.totalorder %v613, %v405
        %vm710 = vcmp.eq.s32.totalorder %v616, %v405
        %vm711 = vcmp.eq.s32.totalorder %v619, %v405
        %vm712 = vcmp.eq.s32.totalorder %v622, %v405
        %vm713 = vcmp.eq.s32.totalorder %v625, %v405
        %vm714 = vcmp.eq.s32.totalorder %v628, %v405
        %vm715 = vcmp.eq.s32.totalorder %v631, %v405
        %vm716 = vcmp.eq.s32.totalorder %v634, %v405
        %vm717 = vcmp.eq.s32.totalorder %v637, %v405
        %vm718 = vcmp.eq.s32.totalorder %v640, %v405
        %vm719 = vcmp.eq.s32.totalorder %v643, %v405
        %vm720 = vcmp.eq.s32.totalorder %v646, %v405
        %vm721 = vcmp.eq.s32.totalorder %v649, %v405
        %vm722 = vcmp.eq.s32.totalorder %v652, %v405
        %vm723 = vcmp.eq.s32.totalorder %v655, %v405
        %vm724 = vcmp.eq.s32.totalorder %v658, %v405
        %vm725 = vcmp.eq.s32.totalorder %v661, %v405
        %v726 = vsel %vm662, 1.0, 0.0
        %v727 = vsel %vm663, 1.0, 0.0
        %v728 = vsel %vm664, 1.0, 0.0
        %v729 = vsel %vm665, 1.0, 0.0
        %v730 = vsel %vm666, 1.0, 0.0
        %v731 = vsel %vm667, 1.0, 0.0
        %v732 = vsel %vm668, 1.0, 0.0
        %v733 = vsel %vm669, 1.0, 0.0
        %v734 = vsel %vm670, 1.0, 0.0
        %v735 = vsel %vm671, 1.0, 0.0
        %v736 = vsel %vm672, 1.0, 0.0
        %v737 = vsel %vm673, 1.0, 0.0
        %v738 = vsel %vm674, 1.0, 0.0
        %v739 = vsel %vm675, 1.0, 0.0
        %v740 = vsel %vm676, 1.0, 0.0
        %v741 = vsel %vm677, 1.0, 0.0
        %v742 = vsel %vm678, 1.0, 0.0
        %v743 = vsel %vm679, 1.0, 0.0
        %v744 = vsel %vm680, 1.0, 0.0
        %v745 = vsel %vm681, 1.0, 0.0
        %v746 = vsel %vm682, 1.0, 0.0
        %v747 = vsel %vm683, 1.0, 0.0
        %v748 = vsel %vm684, 1.0, 0.0
        %v749 = vsel %vm685, 1.0, 0.0
        %v750 = vsel %vm686, 1.0, 0.0
        %v751 = vsel %vm687, 1.0, 0.0
        %v752 = vsel %vm688, 1.0, 0.0
        %v753 = vsel %vm689, 1.0, 0.0
        %v754 = vsel %vm690, 1.0, 0.0
        %v755 = vsel %vm691, 1.0, 0.0
        %v756 = vsel %vm692, 1.0, 0.0
        %v757 = vsel %vm693, 1.0, 0.0
        %v758 = vsel %vm694, 1.0, 0.0
        %v759 = vsel %vm695, 1.0, 0.0
        %v760 = vsel %vm696, 1.0, 0.0
        %v761 = vsel %vm697, 1.0, 0.0
        %v762 = vsel %vm698, 1.0, 0.0
        %v763 = vsel %vm699, 1.0, 0.0
        %v764 = vsel %vm700, 1.0, 0.0
        %v765 = vsel %vm701, 1.0, 0.0
        %v766 = vsel %vm702, 1.0, 0.0
        %v767 = vsel %vm703, 1.0, 0.0
        %v768 = vsel %vm704, 1.0, 0.0
        %v769 = vsel %vm705, 1.0, 0.0
        %v770 = vsel %vm706, 1.0, 0.0
        %v771 = vsel %vm707, 1.0, 0.0
        %v772 = vsel %vm708, 1.0, 0.0
        %v773 = vsel %vm709, 1.0, 0.0
        %v774 = vsel %vm710, 1.0, 0.0
        %v775 = vsel %vm711, 1.0, 0.0
        %v776 = vsel %vm712, 1.0, 0.0
        %v777 = vsel %vm713, 1.0, 0.0
        %v778 = vsel %vm714, 1.0, 0.0
        %v779 = vsel %vm715, 1.0, 0.0
        %v780 = vsel %vm716, 1.0, 0.0
        %v781 = vsel %vm717, 1.0, 0.0
        %v782 = vsel %vm718, 1.0, 0.0
        %v783 = vsel %vm719, 1.0, 0.0
        %v784 = vsel %vm720, 1.0, 0.0
        %v785 = vsel %vm721, 1.0, 0.0
        %v786 = vsel %vm722, 1.0, 0.0
        %v787 = vsel %vm723, 1.0, 0.0
        %v788 = vsel %vm724, 1.0, 0.0
        %v789 = vsel %vm725, 1.0, 0.0
        %v790 = vpack.c.bf16 %v727, %v726
        %v791 = vpack.c.bf16 %v729, %v728
        %v792 = vpack.c.bf16 %v731, %v730
        %v793 = vpack.c.bf16 %v733, %v732
        %v794 = vpack.c.bf16 %v735, %v734
        %v795 = vpack.c.bf16 %v737, %v736
        %v796 = vpack.c.bf16 %v739, %v738
        %v797 = vpack.c.bf16 %v741, %v740
        %v798 = vpack.c.bf16 %v743, %v742
        %v799 = vpack.c.bf16 %v745, %v744
        %v800 = vpack.c.bf16 %v747, %v746
        %v801 = vpack.c.bf16 %v749, %v748
        %v802 = vpack.c.bf16 %v751, %v750
        %v803 = vpack.c.bf16 %v753, %v752
        %v804 = vpack.c.bf16 %v755, %v754
        %v805 = vpack.c.bf16 %v757, %v756
        %v806 = vpack.c.bf16 %v759, %v758
        %v807 = vpack.c.bf16 %v761, %v760
        %v808 = vpack.c.bf16 %v763, %v762
        %v809 = vpack.c.bf16 %v765, %v764
        %v810 = vpack.c.bf16 %v767, %v766
        %v811 = vpack.c.bf16 %v769, %v768
        %v812 = vpack.c.bf16 %v771, %v770
        %v813 = vpack.c.bf16 %v773, %v772
        %v814 = vpack.c.bf16 %v775, %v774
        %v815 = vpack.c.bf16 %v777, %v776
        %v816 = vpack.c.bf16 %v779, %v778
        %v817 = vpack.c.bf16 %v781, %v780
        %v818 = vpack.c.bf16 %v783, %v782
        %v819 = vpack.c.bf16 %v785, %v784
        %v820 = vpack.c.bf16 %v787, %v786
        %v821 = vpack.c.bf16 %v789, %v788
        %822 = vset.pattern.permute.xlu0 1
        %823 = vperm.xlu0 %822, %v406
        %v824 = vpop.permute.xlu0 %823
        %825 = vset.pattern.permute.xlu0 1
        %826 = vperm.xlu0 %825, %v407
        %v827 = vpop.permute.xlu0 %826
        %828 = vset.pattern.permute.xlu0 1
        %829 = vperm.xlu0 %828, %v408
        %v830 = vpop.permute.xlu0 %829
        %831 = vset.pattern.permute.xlu0 1
        %832 = vperm.xlu0 %831, %v409
        %v833 = vpop.permute.xlu0 %832
        %834 = vset.pattern.permute.xlu0 1
        %835 = vperm.xlu0 %834, %v410
        %v836 = vpop.permute.xlu0 %835
        %837 = vset.pattern.permute.xlu0 1
        %838 = vperm.xlu0 %837, %v411
        %v839 = vpop.permute.xlu0 %838
        %840 = vset.pattern.permute.xlu0 1
        %841 = vperm.xlu0 %840, %v412
        %v842 = vpop.permute.xlu0 %841
        %843 = vset.pattern.permute.xlu0 1
        %844 = vperm.xlu0 %843, %v413
        %v845 = vpop.permute.xlu0 %844
        %846 = vset.pattern.permute.xlu0 1
        %847 = vperm.xlu0 %846, %v414
        %v848 = vpop.permute.xlu0 %847
        %849 = vset.pattern.permute.xlu0 1
        %850 = vperm.xlu0 %849, %v415
        %v851 = vpop.permute.xlu0 %850
        %852 = vset.pattern.permute.xlu0 1
        %853 = vperm.xlu0 %852, %v416
        %v854 = vpop.permute.xlu0 %853
        %855 = vset.pattern.permute.xlu0 1
        %856 = vperm.xlu0 %855, %v417
        %v857 = vpop.permute.xlu0 %856
        %858 = vset.pattern.permute.xlu0 1
        %859 = vperm.xlu0 %858, %v418
        %v860 = vpop.permute.xlu0 %859
        %861 = vset.pattern.permute.xlu0 1
        %862 = vperm.xlu0 %861, %v419
        %v863 = vpop.permute.xlu0 %862
        %864 = vset.pattern.permute.xlu0 1
        %865 = vperm.xlu0 %864, %v420
        %v866 = vpop.permute.xlu0 %865
        %867 = vset.pattern.permute.xlu0 1
        %868 = vperm.xlu0 %867, %v421
        %v869 = vpop.permute.xlu0 %868
        %870 = vset.pattern.permute.xlu0 1
        %871 = vperm.xlu0 %870, %v422
        %v872 = vpop.permute.xlu0 %871
        %873 = vset.pattern.permute.xlu0 1
        %874 = vperm.xlu0 %873, %v423
        %v875 = vpop.permute.xlu0 %874
        %876 = vset.pattern.permute.xlu0 1
        %877 = vperm.xlu0 %876, %v424
        %v878 = vpop.permute.xlu0 %877
        %879 = vset.pattern.permute.xlu0 1
        %880 = vperm.xlu0 %879, %v425
        %v881 = vpop.permute.xlu0 %880
        %882 = vset.pattern.permute.xlu0 1
        %883 = vperm.xlu0 %882, %v426
        %v884 = vpop.permute.xlu0 %883
        %885 = vset.pattern.permute.xlu0 1
        %886 = vperm.xlu0 %885, %v427
        %v887 = vpop.permute.xlu0 %886
        %888 = vset.pattern.permute.xlu0 1
        %889 = vperm.xlu0 %888, %v428
        %v890 = vpop.permute.xlu0 %889
        %891 = vset.pattern.permute.xlu0 1
        %892 = vperm.xlu0 %891, %v429
        %v893 = vpop.permute.xlu0 %892
        %894 = vset.pattern.permute.xlu0 1
        %895 = vperm.xlu0 %894, %v430
        %v896 = vpop.permute.xlu0 %895
        %897 = vset.pattern.permute.xlu0 1
        %898 = vperm.xlu0 %897, %v431
        %v899 = vpop.permute.xlu0 %898
        %900 = vset.pattern.permute.xlu0 1
        %901 = vperm.xlu0 %900, %v432
        %v902 = vpop.permute.xlu0 %901
        %903 = vset.pattern.permute.xlu0 1
        %904 = vperm.xlu0 %903, %v433
        %v905 = vpop.permute.xlu0 %904
        %906 = vset.pattern.permute.xlu0 1
        %907 = vperm.xlu0 %906, %v434
        %v908 = vpop.permute.xlu0 %907
        %909 = vset.pattern.permute.xlu0 1
        %910 = vperm.xlu0 %909, %v435
        %v911 = vpop.permute.xlu0 %910
        %912 = vset.pattern.permute.xlu0 1
        %913 = vperm.xlu0 %912, %v436
        %v914 = vpop.permute.xlu0 %913
        %915 = vset.pattern.permute.xlu0 1
        %916 = vperm.xlu0 %915, %v437
        %v917 = vpop.permute.xlu0 %916
        %918 = vset.pattern.permute.xlu0 1
        %919 = vperm.xlu0 %918, %v438
        %v920 = vpop.permute.xlu0 %919
        %921 = vset.pattern.permute.xlu0 1
        %922 = vperm.xlu0 %921, %v439
        %v923 = vpop.permute.xlu0 %922
        %924 = vset.pattern.permute.xlu0 1
        %925 = vperm.xlu0 %924, %v440
        %v926 = vpop.permute.xlu0 %925
        %927 = vset.pattern.permute.xlu0 1
        %928 = vperm.xlu0 %927, %v441
        %v929 = vpop.permute.xlu0 %928
        %930 = vset.pattern.permute.xlu0 1
        %931 = vperm.xlu0 %930, %v442
        %v932 = vpop.permute.xlu0 %931
        %933 = vset.pattern.permute.xlu0 1
        %934 = vperm.xlu0 %933, %v443
        %v935 = vpop.permute.xlu0 %934
        %936 = vset.pattern.permute.xlu0 1
        %937 = vperm.xlu0 %936, %v444
        %v938 = vpop.permute.xlu0 %937
        %939 = vset.pattern.permute.xlu0 1
        %940 = vperm.xlu0 %939, %v445
        %v941 = vpop.permute.xlu0 %940
        %942 = vset.pattern.permute.xlu0 1
        %943 = vperm.xlu0 %942, %v446
        %v944 = vpop.permute.xlu0 %943
        %945 = vset.pattern.permute.xlu0 1
        %946 = vperm.xlu0 %945, %v447
        %v947 = vpop.permute.xlu0 %946
        %948 = vset.pattern.permute.xlu0 1
        %949 = vperm.xlu0 %948, %v448
        %v950 = vpop.permute.xlu0 %949
        %951 = vset.pattern.permute.xlu0 1
        %952 = vperm.xlu0 %951, %v449
        %v953 = vpop.permute.xlu0 %952
        %954 = vset.pattern.permute.xlu0 1
        %955 = vperm.xlu0 %954, %v450
        %v956 = vpop.permute.xlu0 %955
        %957 = vset.pattern.permute.xlu0 1
        %958 = vperm.xlu0 %957, %v451
        %v959 = vpop.permute.xlu0 %958
        %960 = vset.pattern.permute.xlu0 1
        %961 = vperm.xlu0 %960, %v452
        %v962 = vpop.permute.xlu0 %961
        %963 = vset.pattern.permute.xlu0 1
        %964 = vperm.xlu0 %963, %v453
        %v965 = vpop.permute.xlu0 %964
        %966 = vset.pattern.permute.xlu0 1
        %967 = vperm.xlu0 %966, %v454
        %v968 = vpop.permute.xlu0 %967
        %969 = vset.pattern.permute.xlu0 1
        %970 = vperm.xlu0 %969, %v455
        %v971 = vpop.permute.xlu0 %970
        %972 = vset.pattern.permute.xlu0 1
        %973 = vperm.xlu0 %972, %v456
        %v974 = vpop.permute.xlu0 %973
        %975 = vset.pattern.permute.xlu0 1
        %976 = vperm.xlu0 %975, %v457
        %v977 = vpop.permute.xlu0 %976
        %978 = vset.pattern.permute.xlu0 1
        %979 = vperm.xlu0 %978, %v458
        %v980 = vpop.permute.xlu0 %979
        %981 = vset.pattern.permute.xlu0 1
        %982 = vperm.xlu0 %981, %v459
        %v983 = vpop.permute.xlu0 %982
        %984 = vset.pattern.permute.xlu0 1
        %985 = vperm.xlu0 %984, %v460
        %v986 = vpop.permute.xlu0 %985
        %987 = vset.pattern.permute.xlu0 1
        %988 = vperm.xlu0 %987, %v461
        %v989 = vpop.permute.xlu0 %988
        %990 = vset.pattern.permute.xlu0 1
        %991 = vperm.xlu0 %990, %v462
        %v992 = vpop.permute.xlu0 %991
        %993 = vset.pattern.permute.xlu0 1
        %994 = vperm.xlu0 %993, %v463
        %v995 = vpop.permute.xlu0 %994
        %996 = vset.pattern.permute.xlu0 1
        %997 = vperm.xlu0 %996, %v464
        %v998 = vpop.permute.xlu0 %997
        %999 = vset.pattern.permute.xlu0 1
        %1000 = vperm.xlu0 %999, %v465
        %v1001 = vpop.permute.xlu0 %1000
        %1002 = vset.pattern.permute.xlu0 1
        %1003 = vperm.xlu0 %1002, %v466
        %v1004 = vpop.permute.xlu0 %1003
        %1005 = vset.pattern.permute.xlu0 1
        %1006 = vperm.xlu0 %1005, %v467
        %v1007 = vpop.permute.xlu0 %1006
        %1008 = vset.pattern.permute.xlu0 1
        %1009 = vperm.xlu0 %1008, %v468
        %v1010 = vpop.permute.xlu0 %1009
        %1011 = vset.pattern.permute.xlu0 1
        %1012 = vperm.xlu0 %1011, %v469
        %v1013 = vpop.permute.xlu0 %1012
        %vm1014 = vcmp.eq.s32.totalorder %v824, %v405
        %vm1015 = vcmp.eq.s32.totalorder %v827, %v405
        %vm1016 = vcmp.eq.s32.totalorder %v830, %v405
        %vm1017 = vcmp.eq.s32.totalorder %v833, %v405
        %vm1018 = vcmp.eq.s32.totalorder %v836, %v405
        %vm1019 = vcmp.eq.s32.totalorder %v839, %v405
        %vm1020 = vcmp.eq.s32.totalorder %v842, %v405
        %vm1021 = vcmp.eq.s32.totalorder %v845, %v405
        %vm1022 = vcmp.eq.s32.totalorder %v848, %v405
        %vm1023 = vcmp.eq.s32.totalorder %v851, %v405
        %vm1024 = vcmp.eq.s32.totalorder %v854, %v405
        %vm1025 = vcmp.eq.s32.totalorder %v857, %v405
        %vm1026 = vcmp.eq.s32.totalorder %v860, %v405
        %vm1027 = vcmp.eq.s32.totalorder %v863, %v405
        %vm1028 = vcmp.eq.s32.totalorder %v866, %v405
        %vm1029 = vcmp.eq.s32.totalorder %v869, %v405
        %vm1030 = vcmp.eq.s32.totalorder %v872, %v405
        %vm1031 = vcmp.eq.s32.totalorder %v875, %v405
        %vm1032 = vcmp.eq.s32.totalorder %v878, %v405
        %vm1033 = vcmp.eq.s32.totalorder %v881, %v405
        %vm1034 = vcmp.eq.s32.totalorder %v884, %v405
        %vm1035 = vcmp.eq.s32.totalorder %v887, %v405
        %vm1036 = vcmp.eq.s32.totalorder %v890, %v405
        %vm1037 = vcmp.eq.s32.totalorder %v893, %v405
        %vm1038 = vcmp.eq.s32.totalorder %v896, %v405
        %vm1039 = vcmp.eq.s32.totalorder %v899, %v405
        %vm1040 = vcmp.eq.s32.totalorder %v902, %v405
        %vm1041 = vcmp.eq.s32.totalorder %v905, %v405
        %vm1042 = vcmp.eq.s32.totalorder %v908, %v405
        %vm1043 = vcmp.eq.s32.totalorder %v911, %v405
        %vm1044 = vcmp.eq.s32.totalorder %v914, %v405
        %vm1045 = vcmp.eq.s32.totalorder %v917, %v405
        %vm1046 = vcmp.eq.s32.totalorder %v920, %v405
        %vm1047 = vcmp.eq.s32.totalorder %v923, %v405
        %vm1048 = vcmp.eq.s32.totalorder %v926, %v405
        %vm1049 = vcmp.eq.s32.totalorder %v929, %v405
        %vm1050 = vcmp.eq.s32.totalorder %v932, %v405
        %vm1051 = vcmp.eq.s32.totalorder %v935, %v405
        %vm1052 = vcmp.eq.s32.totalorder %v938, %v405
        %vm1053 = vcmp.eq.s32.totalorder %v941, %v405
        %vm1054 = vcmp.eq.s32.totalorder %v944, %v405
        %vm1055 = vcmp.eq.s32.totalorder %v947, %v405
        %vm1056 = vcmp.eq.s32.totalorder %v950, %v405
        %vm1057 = vcmp.eq.s32.totalorder %v953, %v405
        %vm1058 = vcmp.eq.s32.totalorder %v956, %v405
        %vm1059 = vcmp.eq.s32.totalorder %v959, %v405
        %vm1060 = vcmp.eq.s32.totalorder %v962, %v405
        %vm1061 = vcmp.eq.s32.totalorder %v965, %v405
        %vm1062 = vcmp.eq.s32.totalorder %v968, %v405
        %vm1063 = vcmp.eq.s32.totalorder %v971, %v405
        %vm1064 = vcmp.eq.s32.totalorder %v974, %v405
        %vm1065 = vcmp.eq.s32.totalorder %v977, %v405
        %vm1066 = vcmp.eq.s32.totalorder %v980, %v405
        %vm1067 = vcmp.eq.s32.totalorder %v983, %v405
        %vm1068 = vcmp.eq.s32.totalorder %v986, %v405
        %vm1069 = vcmp.eq.s32.totalorder %v989, %v405
        %vm1070 = vcmp.eq.s32.totalorder %v992, %v405
        %vm1071 = vcmp.eq.s32.totalorder %v995, %v405
        %vm1072 = vcmp.eq.s32.totalorder %v998, %v405
        %vm1073 = vcmp.eq.s32.totalorder %v1001, %v405
        %vm1074 = vcmp.eq.s32.totalorder %v1004, %v405
        %vm1075 = vcmp.eq.s32.totalorder %v1007, %v405
        %vm1076 = vcmp.eq.s32.totalorder %v1010, %v405
        %vm1077 = vcmp.eq.s32.totalorder %v1013, %v405
        %v1078 = vsel %vm1014, 1.0, 0.0
        %v1079 = vsel %vm1015, 1.0, 0.0
        %v1080 = vsel %vm1016, 1.0, 0.0
        %v1081 = vsel %vm1017, 1.0, 0.0
        %v1082 = vsel %vm1018, 1.0, 0.0
        %v1083 = vsel %vm1019, 1.0, 0.0
        %v1084 = vsel %vm1020, 1.0, 0.0
        %v1085 = vsel %vm1021, 1.0, 0.0
        %v1086 = vsel %vm1022, 1.0, 0.0
        %v1087 = vsel %vm1023, 1.0, 0.0
        %v1088 = vsel %vm1024, 1.0, 0.0
        %v1089 = vsel %vm1025, 1.0, 0.0
        %v1090 = vsel %vm1026, 1.0, 0.0
        %v1091 = vsel %vm1027, 1.0, 0.0
        %v1092 = vsel %vm1028, 1.0, 0.0
        %v1093 = vsel %vm1029, 1.0, 0.0
        %v1094 = vsel %vm1030, 1.0, 0.0
        %v1095 = vsel %vm1031, 1.0, 0.0
        %v1096 = vsel %vm1032, 1.0, 0.0
        %v1097 = vsel %vm1033, 1.0, 0.0
        %v1098 = vsel %vm1034, 1.0, 0.0
        %v1099 = vsel %vm1035, 1.0, 0.0
        %v1100 = vsel %vm1036, 1.0, 0.0
        %v1101 = vsel %vm1037, 1.0, 0.0
        %v1102 = vsel %vm1038, 1.0, 0.0
        %v1103 = vsel %vm1039, 1.0, 0.0
        %v1104 = vsel %vm1040, 1.0, 0.0
        %v1105 = vsel %vm1041, 1.0, 0.0
        %v1106 = vsel %vm1042, 1.0, 0.0
        %v1107 = vsel %vm1043, 1.0, 0.0
        %v1108 = vsel %vm1044, 1.0, 0.0
        %v1109 = vsel %vm1045, 1.0, 0.0
        %v1110 = vsel %vm1046, 1.0, 0.0
        %v1111 = vsel %vm1047, 1.0, 0.0
        %v1112 = vsel %vm1048, 1.0, 0.0
        %v1113 = vsel %vm1049, 1.0, 0.0
        %v1114 = vsel %vm1050, 1.0, 0.0
        %v1115 = vsel %vm1051, 1.0, 0.0
        %v1116 = vsel %vm1052, 1.0, 0.0
        %v1117 = vsel %vm1053, 1.0, 0.0
        %v1118 = vsel %vm1054, 1.0, 0.0
        %v1119 = vsel %vm1055, 1.0, 0.0
        %v1120 = vsel %vm1056, 1.0, 0.0
        %v1121 = vsel %vm1057, 1.0, 0.0
        %v1122 = vsel %vm1058, 1.0, 0.0
        %v1123 = vsel %vm1059, 1.0, 0.0
        %v1124 = vsel %vm1060, 1.0, 0.0
        %v1125 = vsel %vm1061, 1.0, 0.0
        %v1126 = vsel %vm1062, 1.0, 0.0
        %v1127 = vsel %vm1063, 1.0, 0.0
        %v1128 = vsel %vm1064, 1.0, 0.0
        %v1129 = vsel %vm1065, 1.0, 0.0
        %v1130 = vsel %vm1066, 1.0, 0.0
        %v1131 = vsel %vm1067, 1.0, 0.0
        %v1132 = vsel %vm1068, 1.0, 0.0
        %v1133 = vsel %vm1069, 1.0, 0.0
        %v1134 = vsel %vm1070, 1.0, 0.0
        %v1135 = vsel %vm1071, 1.0, 0.0
        %v1136 = vsel %vm1072, 1.0, 0.0
        %v1137 = vsel %vm1073, 1.0, 0.0
        %v1138 = vsel %vm1074, 1.0, 0.0
        %v1139 = vsel %vm1075, 1.0, 0.0
        %v1140 = vsel %vm1076, 1.0, 0.0
        %v1141 = vsel %vm1077, 1.0, 0.0
        %v1142 = vpack.c.bf16 %v1079, %v1078
        %v1143 = vpack.c.bf16 %v1081, %v1080
        %v1144 = vpack.c.bf16 %v1083, %v1082
        %v1145 = vpack.c.bf16 %v1085, %v1084
        %v1146 = vpack.c.bf16 %v1087, %v1086
        %v1147 = vpack.c.bf16 %v1089, %v1088
        %v1148 = vpack.c.bf16 %v1091, %v1090
        %v1149 = vpack.c.bf16 %v1093, %v1092
        %v1150 = vpack.c.bf16 %v1095, %v1094
        %v1151 = vpack.c.bf16 %v1097, %v1096
        %v1152 = vpack.c.bf16 %v1099, %v1098
        %v1153 = vpack.c.bf16 %v1101, %v1100
        %v1154 = vpack.c.bf16 %v1103, %v1102
        %v1155 = vpack.c.bf16 %v1105, %v1104
        %v1156 = vpack.c.bf16 %v1107, %v1106
        %v1157 = vpack.c.bf16 %v1109, %v1108
        %v1158 = vpack.c.bf16 %v1111, %v1110
        %v1159 = vpack.c.bf16 %v1113, %v1112
        %v1160 = vpack.c.bf16 %v1115, %v1114
        %v1161 = vpack.c.bf16 %v1117, %v1116
        %v1162 = vpack.c.bf16 %v1119, %v1118
        %v1163 = vpack.c.bf16 %v1121, %v1120
        %v1164 = vpack.c.bf16 %v1123, %v1122
        %v1165 = vpack.c.bf16 %v1125, %v1124
        %v1166 = vpack.c.bf16 %v1127, %v1126
        %v1167 = vpack.c.bf16 %v1129, %v1128
        %v1168 = vpack.c.bf16 %v1131, %v1130
        %v1169 = vpack.c.bf16 %v1133, %v1132
        %v1170 = vpack.c.bf16 %v1135, %v1134
        %v1171 = vpack.c.bf16 %v1137, %v1136
        %v1172 = vpack.c.bf16 %v1139, %v1138
        %v1173 = vpack.c.bf16 %v1141, %v1140
        %v1181 = vunpack.c.l.b16 %v397
        %v1182 = vunpack.c.l.b16 %v398
        %v1183 = vunpack.c.l.b16 %v399
        %v1184 = vunpack.c.l.b16 %v400
        %v1185 = vunpack.c.l.b16 %v401
        %v1186 = vunpack.c.l.b16 %v402
        %v1187 = vunpack.c.l.b16 %v403
        %v1188 = vpack.c.b16 %v1182, %v1181
        %v1189 = vpack.c.b16 %v1184, %v1183
        %v1190 = vpack.c.b16 %v1186, %v1185
        %v1191 = vpack.c.b16 %v1187, %v1187
        %vm1195 = vcmask 408576
        %v1197 = vsel %vm1195, %v790, 0
        %v1200 = vsel %vm1195, %v791, 0
        %v1203 = vsel %vm1195, %v792, 0
        %v1206 = vsel %vm1195, %v793, 0
        %v1209 = vsel %vm1195, %v794, 0
        %v1212 = vsel %vm1195, %v795, 0
        %v1215 = vsel %vm1195, %v796, 0
        %v1218 = vsel %vm1195, %v797, 0
        %v1221 = vsel %vm1195, %v798, 0
        %v1224 = vsel %vm1195, %v799, 0
        %v1227 = vsel %vm1195, %v800, 0
        %v1230 = vsel %vm1195, %v801, 0
        %v1233 = vsel %vm1195, %v802, 0
        %v1236 = vsel %vm1195, %v803, 0
        %v1239 = vsel %vm1195, %v804, 0
        %v1242 = vsel %vm1195, %v805, 0
        %v1245 = vsel %vm1195, %v806, 0
        %v1248 = vsel %vm1195, %v807, 0
        %v1251 = vsel %vm1195, %v808, 0
        %v1254 = vsel %vm1195, %v809, 0
        %v1257 = vsel %vm1195, %v810, 0
        %v1260 = vsel %vm1195, %v811, 0
        %v1263 = vsel %vm1195, %v812, 0
        %v1266 = vsel %vm1195, %v813, 0
        %v1269 = vsel %vm1195, %v814, 0
        %v1272 = vsel %vm1195, %v815, 0
        %v1275 = vsel %vm1195, %v816, 0
        %v1278 = vsel %vm1195, %v817, 0
        %v1281 = vsel %vm1195, %v818, 0
        %v1284 = vsel %vm1195, %v819, 0
        %v1287 = vsel %vm1195, %v820, 0
        %v1290 = vsel %vm1195, %v821, 0
        %vm1292 = vcmask 1040384
        %v1294 = vsel %vm1292, %v1191, 0
        %1296 = vmatprep.subr.bf16.mxu0 0
        %1297 = vmatpush1.bf16.msra.mxu0 0
        %1298 = vmatprep.subr.bf16.mxu0 0
        %1299 = vmatpush1.bf16.msra.mxu0 0
        %1300 = vmatprep.subr.bf16.mxu0 0
        %1301 = vmatpush1.bf16.msra.mxu0 0
        %1302 = vmatprep.subr.bf16.mxu0 0
        %1303 = vmatpush1.bf16.msra.mxu0 0
        %1304 = vmatprep.subr.bf16.mxu0 0
        %1305 = vmatpush1.bf16.msra.mxu0 %v1294
        %1306 = vmatprep.subr.bf16.mxu0 0
        %1307 = vmatpush1.bf16.msra.mxu0 %v1190
        %1308 = vmatprep.subr.bf16.mxu0 0
        %1309 = vmatpush1.bf16.msra.mxu0 %v1189
        %1310 = vmatprep.subr.bf16.mxu0 0
        %1311 = vmatpush1.bf16.msra.mxu0 %v1188
        %1312 = vmatprep.subr.bf16.mxu0 0
        %1313 = vmatpush2.bf16.msra.mxu0 0
        %1314 = vmatprep.subr.bf16.mxu0 0
        %1315 = vmatpush2.bf16.msra.mxu0 0
        %1316 = vmatprep.subr.bf16.mxu0 0
        %1317 = vmatpush2.bf16.msra.mxu0 0
        %1318 = vmatprep.subr.bf16.mxu0 0
        %1319 = vmatpush2.bf16.msra.mxu0 0
        %1320 = vmatprep.subr.bf16.mxu0 0
        %1321 = vmatpush2.bf16.msra.mxu0 0
        %1322 = vmatprep.subr.bf16.mxu0 0
        %1323 = vmatpush2.bf16.msra.mxu0 0
        %1324 = vmatprep.subr.bf16.mxu0 0
        %1325 = vmatpush2.bf16.msra.mxu0 0
        %1326 = vmatprep.subr.bf16.mxu0 0
        %1327 = vmatpush2.bf16.msra.mxu0 0
        %1328 = vmatprep.mubr.bf16.mxu0 0
        %1329 = vmatmul.mubr.bf16.gmra.mxu0 %v1197
        %v1330 = vpop.f32.mrf.mxu0
        %v1331 = vadd.f32 0.0, %v1330
        %v1332 = vpop.f32.mrf.mxu0
        %v1333 = vpop.f32.mrf.mxu0
        %v1334 = vadd.f32 0.0, %v1333
        %v1335 = vpop.f32.mrf.mxu0
        %1336 = vmatprep.mubr.bf16.mxu0 0
        %1337 = vmatmul.mubr.bf16.gmra.mxu0 %v1200
        %v1338 = vpop.f32.mrf.mxu0
        %v1339 = vadd.f32 0.0, %v1338
        %v1340 = vpop.f32.mrf.mxu0
        %v1341 = vpop.f32.mrf.mxu0
        %v1342 = vadd.f32 0.0, %v1341
        %v1343 = vpop.f32.mrf.mxu0
        %1344 = vmatprep.mubr.bf16.mxu0 0
        %1345 = vmatmul.mubr.bf16.gmra.mxu0 %v1203
        %v1346 = vpop.f32.mrf.mxu0
        %v1347 = vadd.f32 0.0, %v1346
        %v1348 = vpop.f32.mrf.mxu0
        %v1349 = vpop.f32.mrf.mxu0
        %v1350 = vadd.f32 0.0, %v1349
        %v1351 = vpop.f32.mrf.mxu0
        %1352 = vmatprep.mubr.bf16.mxu0 0
        %1353 = vmatmul.mubr.bf16.gmra.mxu0 %v1206
        %v1354 = vpop.f32.mrf.mxu0
        %v1355 = vadd.f32 0.0, %v1354
        %v1356 = vpop.f32.mrf.mxu0
        %v1357 = vpop.f32.mrf.mxu0
        %v1358 = vadd.f32 0.0, %v1357
        %v1359 = vpop.f32.mrf.mxu0
        %1360 = vmatprep.mubr.bf16.mxu0 0
        %1361 = vmatmul.mubr.bf16.gmra.mxu0 %v1209
        %v1362 = vpop.f32.mrf.mxu0
        %v1363 = vadd.f32 0.0, %v1362
        %v1364 = vpop.f32.mrf.mxu0
        %v1365 = vpop.f32.mrf.mxu0
        %v1366 = vadd.f32 0.0, %v1365
        %v1367 = vpop.f32.mrf.mxu0
        %1368 = vmatprep.mubr.bf16.mxu0 0
        %1369 = vmatmul.mubr.bf16.gmra.mxu0 %v1212
        %v1370 = vpop.f32.mrf.mxu0
        %v1371 = vadd.f32 0.0, %v1370
        %v1372 = vpop.f32.mrf.mxu0
        %v1373 = vpop.f32.mrf.mxu0
        %v1374 = vadd.f32 0.0, %v1373
        %v1375 = vpop.f32.mrf.mxu0
        %1376 = vmatprep.mubr.bf16.mxu0 0
        %1377 = vmatmul.mubr.bf16.gmra.mxu0 %v1215
        %v1378 = vpop.f32.mrf.mxu0
        %v1379 = vadd.f32 0.0, %v1378
        %v1380 = vpop.f32.mrf.mxu0
        %v1381 = vpop.f32.mrf.mxu0
        %v1382 = vadd.f32 0.0, %v1381
        %v1383 = vpop.f32.mrf.mxu0
        %1384 = vmatprep.mubr.bf16.mxu0 0
        %1385 = vmatmul.mubr.bf16.gmra.mxu0 %v1218
        %v1386 = vpop.f32.mrf.mxu0
        %v1387 = vadd.f32 0.0, %v1386
        %v1388 = vpop.f32.mrf.mxu0
        %v1389 = vpop.f32.mrf.mxu0
        %v1390 = vadd.f32 0.0, %v1389
        %v1391 = vpop.f32.mrf.mxu0
        %1392 = vmatprep.mubr.bf16.mxu0 0
        %1393 = vmatmul.mubr.bf16.gmra.mxu0 %v1221
        %v1394 = vpop.f32.mrf.mxu0
        %v1395 = vadd.f32 0.0, %v1394
        %v1396 = vpop.f32.mrf.mxu0
        %v1397 = vpop.f32.mrf.mxu0
        %v1398 = vadd.f32 0.0, %v1397
        %v1399 = vpop.f32.mrf.mxu0
        %1400 = vmatprep.mubr.bf16.mxu0 0
        %1401 = vmatmul.mubr.bf16.gmra.mxu0 %v1224
        %v1402 = vpop.f32.mrf.mxu0
        %v1403 = vadd.f32 0.0, %v1402
        %v1404 = vpop.f32.mrf.mxu0
        %v1405 = vpop.f32.mrf.mxu0
        %v1406 = vadd.f32 0.0, %v1405
        %v1407 = vpop.f32.mrf.mxu0
        %1408 = vmatprep.mubr.bf16.mxu0 0
        %1409 = vmatmul.mubr.bf16.gmra.mxu0 %v1227
        %v1410 = vpop.f32.mrf.mxu0
        %v1411 = vadd.f32 0.0, %v1410
        %v1412 = vpop.f32.mrf.mxu0
        %v1413 = vpop.f32.mrf.mxu0
        %v1414 = vadd.f32 0.0, %v1413
        %v1415 = vpop.f32.mrf.mxu0
        %1416 = vmatprep.mubr.bf16.mxu0 0
        %1417 = vmatmul.mubr.bf16.gmra.mxu0 %v1230
        %v1418 = vpop.f32.mrf.mxu0
        %v1419 = vadd.f32 0.0, %v1418
        %v1420 = vpop.f32.mrf.mxu0
        %v1421 = vpop.f32.mrf.mxu0
        %v1422 = vadd.f32 0.0, %v1421
        %v1423 = vpop.f32.mrf.mxu0
        %1424 = vmatprep.mubr.bf16.mxu0 0
        %1425 = vmatmul.mubr.bf16.gmra.mxu0 %v1233
        %v1426 = vpop.f32.mrf.mxu0
        %v1427 = vadd.f32 0.0, %v1426
        %v1428 = vpop.f32.mrf.mxu0
        %v1429 = vpop.f32.mrf.mxu0
        %v1430 = vadd.f32 0.0, %v1429
        %v1431 = vpop.f32.mrf.mxu0
        %1432 = vmatprep.mubr.bf16.mxu0 0
        %1433 = vmatmul.mubr.bf16.gmra.mxu0 %v1236
        %v1434 = vpop.f32.mrf.mxu0
        %v1435 = vadd.f32 0.0, %v1434
        %v1436 = vpop.f32.mrf.mxu0
        %v1437 = vpop.f32.mrf.mxu0
        %v1438 = vadd.f32 0.0, %v1437
        %v1439 = vpop.f32.mrf.mxu0
        %1440 = vmatprep.mubr.bf16.mxu0 0
        %1441 = vmatmul.mubr.bf16.gmra.mxu0 %v1239
        %v1442 = vpop.f32.mrf.mxu0
        %v1443 = vadd.f32 0.0, %v1442
        %v1444 = vpop.f32.mrf.mxu0
        %v1445 = vpop.f32.mrf.mxu0
        %v1446 = vadd.f32 0.0, %v1445
        %v1447 = vpop.f32.mrf.mxu0
        %1448 = vmatprep.mubr.bf16.mxu0 0
        %1449 = vmatmul.mubr.bf16.gmra.mxu0 %v1242
        %v1450 = vpop.f32.mrf.mxu0
        %v1451 = vadd.f32 0.0, %v1450
        %v1452 = vpop.f32.mrf.mxu0
        %v1453 = vpop.f32.mrf.mxu0
        %v1454 = vadd.f32 0.0, %v1453
        %v1455 = vpop.f32.mrf.mxu0
        %1456 = vmatprep.mubr.bf16.mxu0 0
        %1457 = vmatmul.mubr.bf16.gmra.mxu0 %v1245
        %v1458 = vpop.f32.mrf.mxu0
        %v1459 = vadd.f32 0.0, %v1458
        %v1460 = vpop.f32.mrf.mxu0
        %v1461 = vpop.f32.mrf.mxu0
        %v1462 = vadd.f32 0.0, %v1461
        %v1463 = vpop.f32.mrf.mxu0
        %1464 = vmatprep.mubr.bf16.mxu0 0
        %1465 = vmatmul.mubr.bf16.gmra.mxu0 %v1248
        %v1466 = vpop.f32.mrf.mxu0
        %v1467 = vadd.f32 0.0, %v1466
        %v1468 = vpop.f32.mrf.mxu0
        %v1469 = vpop.f32.mrf.mxu0
        %v1470 = vadd.f32 0.0, %v1469
        %v1471 = vpop.f32.mrf.mxu0
        %1472 = vmatprep.mubr.bf16.mxu0 0
        %1473 = vmatmul.mubr.bf16.gmra.mxu0 %v1251
        %v1474 = vpop.f32.mrf.mxu0
        %v1475 = vadd.f32 0.0, %v1474
        %v1476 = vpop.f32.mrf.mxu0
        %v1477 = vpop.f32.mrf.mxu0
        %v1478 = vadd.f32 0.0, %v1477
        %v1479 = vpop.f32.mrf.mxu0
        %1480 = vmatprep.mubr.bf16.mxu0 0
        %1481 = vmatmul.mubr.bf16.gmra.mxu0 %v1254
        %v1482 = vpop.f32.mrf.mxu0
        %v1483 = vadd.f32 0.0, %v1482
        %v1484 = vpop.f32.mrf.mxu0
        %v1485 = vpop.f32.mrf.mxu0
        %v1486 = vadd.f32 0.0, %v1485
        %v1487 = vpop.f32.mrf.mxu0
        %1488 = vmatprep.mubr.bf16.mxu0 0
        %1489 = vmatmul.mubr.bf16.gmra.mxu0 %v1257
        %v1490 = vpop.f32.mrf.mxu0
        %v1491 = vadd.f32 0.0, %v1490
        %v1492 = vpop.f32.mrf.mxu0
        %v1493 = vpop.f32.mrf.mxu0
        %v1494 = vadd.f32 0.0, %v1493
        %v1495 = vpop.f32.mrf.mxu0
        %1496 = vmatprep.mubr.bf16.mxu0 0
        %1497 = vmatmul.mubr.bf16.gmra.mxu0 %v1260
        %v1498 = vpop.f32.mrf.mxu0
        %v1499 = vadd.f32 0.0, %v1498
        %v1500 = vpop.f32.mrf.mxu0
        %v1501 = vpop.f32.mrf.mxu0
        %v1502 = vadd.f32 0.0, %v1501
        %v1503 = vpop.f32.mrf.mxu0
        %1504 = vmatprep.mubr.bf16.mxu0 0
        %1505 = vmatmul.mubr.bf16.gmra.mxu0 %v1263
        %v1506 = vpop.f32.mrf.mxu0
        %v1507 = vadd.f32 0.0, %v1506
        %v1508 = vpop.f32.mrf.mxu0
        %v1509 = vpop.f32.mrf.mxu0
        %v1510 = vadd.f32 0.0, %v1509
        %v1511 = vpop.f32.mrf.mxu0
        %1512 = vmatprep.mubr.bf16.mxu0 0
        %1513 = vmatmul.mubr.bf16.gmra.mxu0 %v1266
        %v1514 = vpop.f32.mrf.mxu0
        %v1515 = vadd.f32 0.0, %v1514
        %v1516 = vpop.f32.mrf.mxu0
        %v1517 = vpop.f32.mrf.mxu0
        %v1518 = vadd.f32 0.0, %v1517
        %v1519 = vpop.f32.mrf.mxu0
        %1520 = vmatprep.mubr.bf16.mxu0 0
        %1521 = vmatmul.mubr.bf16.gmra.mxu0 %v1269
        %v1522 = vpop.f32.mrf.mxu0
        %v1523 = vadd.f32 0.0, %v1522
        %v1524 = vpop.f32.mrf.mxu0
        %v1525 = vpop.f32.mrf.mxu0
        %v1526 = vadd.f32 0.0, %v1525
        %v1527 = vpop.f32.mrf.mxu0
        %1528 = vmatprep.mubr.bf16.mxu0 0
        %1529 = vmatmul.mubr.bf16.gmra.mxu0 %v1272
        %v1530 = vpop.f32.mrf.mxu0
        %v1531 = vadd.f32 0.0, %v1530
        %v1532 = vpop.f32.mrf.mxu0
        %v1533 = vpop.f32.mrf.mxu0
        %v1534 = vadd.f32 0.0, %v1533
        %v1535 = vpop.f32.mrf.mxu0
        %1536 = vmatprep.mubr.bf16.mxu0 0
        %1537 = vmatmul.mubr.bf16.gmra.mxu0 %v1275
        %v1538 = vpop.f32.mrf.mxu0
        %v1539 = vadd.f32 0.0, %v1538
        %v1540 = vpop.f32.mrf.mxu0
        %v1541 = vpop.f32.mrf.mxu0
        %v1542 = vadd.f32 0.0, %v1541
        %v1543 = vpop.f32.mrf.mxu0
        %1544 = vmatprep.mubr.bf16.mxu0 0
        %1545 = vmatmul.mubr.bf16.gmra.mxu0 %v1278
        %v1546 = vpop.f32.mrf.mxu0
        %v1547 = vadd.f32 0.0, %v1546
        %v1548 = vpop.f32.mrf.mxu0
        %v1549 = vpop.f32.mrf.mxu0
        %v1550 = vadd.f32 0.0, %v1549
        %v1551 = vpop.f32.mrf.mxu0
        %1552 = vmatprep.mubr.bf16.mxu0 0
        %1553 = vmatmul.mubr.bf16.gmra.mxu0 %v1281
        %v1554 = vpop.f32.mrf.mxu0
        %v1555 = vadd.f32 0.0, %v1554
        %v1556 = vpop.f32.mrf.mxu0
        %v1557 = vpop.f32.mrf.mxu0
        %v1558 = vadd.f32 0.0, %v1557
        %v1559 = vpop.f32.mrf.mxu0
        %1560 = vmatprep.mubr.bf16.mxu0 0
        %1561 = vmatmul.mubr.bf16.gmra.mxu0 %v1284
        %v1562 = vpop.f32.mrf.mxu0
        %v1563 = vadd.f32 0.0, %v1562
        %v1564 = vpop.f32.mrf.mxu0
        %v1565 = vpop.f32.mrf.mxu0
        %v1566 = vadd.f32 0.0, %v1565
        %v1567 = vpop.f32.mrf.mxu0
        %1568 = vmatprep.mubr.bf16.mxu0 0
        %1569 = vmatmul.mubr.bf16.gmra.mxu0 %v1287
        %v1570 = vpop.f32.mrf.mxu0
        %v1571 = vadd.f32 0.0, %v1570
        %v1572 = vpop.f32.mrf.mxu0
        %v1573 = vpop.f32.mrf.mxu0
        %v1574 = vadd.f32 0.0, %v1573
        %v1575 = vpop.f32.mrf.mxu0
        %1576 = vmatprep.mubr.bf16.mxu0 0
        %1577 = vmatmul.mubr.bf16.gmra.mxu0 %v1290
        %v1578 = vpop.f32.mrf.mxu0
        %v1579 = vadd.f32 0.0, %v1578
        %v1580 = vpop.f32.mrf.mxu0
        %v1581 = vpop.f32.mrf.mxu0
        %v1582 = vadd.f32 0.0, %v1581
        %v1583 = vpop.f32.mrf.mxu0
        %1584 = vdwg.mxu0
        %v1585 = vpack.c.bf16 %v1334, %v1331
        %v1586 = vpack.c.bf16 %v1342, %v1339
        %v1587 = vpack.c.bf16 %v1350, %v1347
        %v1588 = vpack.c.bf16 %v1358, %v1355
        %v1589 = vpack.c.bf16 %v1366, %v1363
        %v1590 = vpack.c.bf16 %v1374, %v1371
        %v1591 = vpack.c.bf16 %v1382, %v1379
        %v1592 = vpack.c.bf16 %v1390, %v1387
        %v1593 = vpack.c.bf16 %v1398, %v1395
        %v1594 = vpack.c.bf16 %v1406, %v1403
        %v1595 = vpack.c.bf16 %v1414, %v1411
        %v1596 = vpack.c.bf16 %v1422, %v1419
        %v1597 = vpack.c.bf16 %v1430, %v1427
        %v1598 = vpack.c.bf16 %v1438, %v1435
        %v1599 = vpack.c.bf16 %v1446, %v1443
        %v1600 = vpack.c.bf16 %v1454, %v1451
        %v1601 = vpack.c.bf16 %v1462, %v1459
        %v1602 = vpack.c.bf16 %v1470, %v1467
        %v1603 = vpack.c.bf16 %v1478, %v1475
        %v1604 = vpack.c.bf16 %v1486, %v1483
        %v1605 = vpack.c.bf16 %v1494, %v1491
        %v1606 = vpack.c.bf16 %v1502, %v1499
        %v1607 = vpack.c.bf16 %v1510, %v1507
        %v1608 = vpack.c.bf16 %v1518, %v1515
        %v1609 = vpack.c.bf16 %v1526, %v1523
        %v1610 = vpack.c.bf16 %v1534, %v1531
        %v1611 = vpack.c.bf16 %v1542, %v1539
        %v1612 = vpack.c.bf16 %v1550, %v1547
        %v1613 = vpack.c.bf16 %v1558, %v1555
        %v1614 = vpack.c.bf16 %v1566, %v1563
        %v1615 = vpack.c.bf16 %v1574, %v1571
        %v1616 = vpack.c.bf16 %v1582, %v1579
        %v1618 = vsel %vm1195, %v1142, 0
        %v1621 = vsel %vm1195, %v1143, 0
        %v1624 = vsel %vm1195, %v1144, 0
        %v1627 = vsel %vm1195, %v1145, 0
        %v1630 = vsel %vm1195, %v1146, 0
        %v1633 = vsel %vm1195, %v1147, 0
        %v1636 = vsel %vm1195, %v1148, 0
        %v1639 = vsel %vm1195, %v1149, 0
        %v1642 = vsel %vm1195, %v1150, 0
        %v1645 = vsel %vm1195, %v1151, 0
        %v1648 = vsel %vm1195, %v1152, 0
        %v1651 = vsel %vm1195, %v1153, 0
        %v1654 = vsel %vm1195, %v1154, 0
        %v1657 = vsel %vm1195, %v1155, 0
        %v1660 = vsel %vm1195, %v1156, 0
        %v1663 = vsel %vm1195, %v1157, 0
        %v1666 = vsel %vm1195, %v1158, 0
        %v1669 = vsel %vm1195, %v1159, 0
        %v1672 = vsel %vm1195, %v1160, 0
        %v1675 = vsel %vm1195, %v1161, 0
        %v1678 = vsel %vm1195, %v1162, 0
        %v1681 = vsel %vm1195, %v1163, 0
        %v1684 = vsel %vm1195, %v1164, 0
        %v1687 = vsel %vm1195, %v1165, 0
        %v1690 = vsel %vm1195, %v1166, 0
        %v1693 = vsel %vm1195, %v1167, 0
        %v1696 = vsel %vm1195, %v1168, 0
        %v1699 = vsel %vm1195, %v1169, 0
        %v1702 = vsel %vm1195, %v1170, 0
        %v1705 = vsel %vm1195, %v1171, 0
        %v1708 = vsel %vm1195, %v1172, 0
        %v1711 = vsel %vm1195, %v1173, 0
        %1713 = vmatprep.subr.bf16.mxu0 0
        %1714 = vmatpush1.bf16.msra.mxu0 0
        %1715 = vmatprep.subr.bf16.mxu0 0
        %1716 = vmatpush1.bf16.msra.mxu0 0
        %1717 = vmatprep.subr.bf16.mxu0 0
        %1718 = vmatpush1.bf16.msra.mxu0 0
        %1719 = vmatprep.subr.bf16.mxu0 0
        %1720 = vmatpush1.bf16.msra.mxu0 0
        %1721 = vmatprep.subr.bf16.mxu0 0
        %1722 = vmatpush1.bf16.msra.mxu0 %v1294
        %1723 = vmatprep.subr.bf16.mxu0 0
        %1724 = vmatpush1.bf16.msra.mxu0 %v1190
        %1725 = vmatprep.subr.bf16.mxu0 0
        %1726 = vmatpush1.bf16.msra.mxu0 %v1189
        %1727 = vmatprep.subr.bf16.mxu0 0
        %1728 = vmatpush1.bf16.msra.mxu0 %v1188
        %1729 = vmatprep.subr.bf16.mxu0 0
        %1730 = vmatpush2.bf16.msra.mxu0 0
        %1731 = vmatprep.subr.bf16.mxu0 0
        %1732 = vmatpush2.bf16.msra.mxu0 0
        %1733 = vmatprep.subr.bf16.mxu0 0
        %1734 = vmatpush2.bf16.msra.mxu0 0
        %1735 = vmatprep.subr.bf16.mxu0 0
        %1736 = vmatpush2.bf16.msra.mxu0 0
        %1737 = vmatprep.subr.bf16.mxu0 0
        %1738 = vmatpush2.bf16.msra.mxu0 0
        %1739 = vmatprep.subr.bf16.mxu0 0
        %1740 = vmatpush2.bf16.msra.mxu0 0
        %1741 = vmatprep.subr.bf16.mxu0 0
        %1742 = vmatpush2.bf16.msra.mxu0 0
        %1743 = vmatprep.subr.bf16.mxu0 0
        %1744 = vmatpush2.bf16.msra.mxu0 0
        %1745 = vmatprep.mubr.bf16.mxu0 0
        %1746 = vmatmul.mubr.bf16.gmra.mxu0 %v1618
        %v1747 = vpop.f32.mrf.mxu0
        %v1748 = vadd.f32 0.0, %v1747
        %v1749 = vpop.f32.mrf.mxu0
        %v1750 = vpop.f32.mrf.mxu0
        %v1751 = vadd.f32 0.0, %v1750
        %v1752 = vpop.f32.mrf.mxu0
        %1753 = vmatprep.mubr.bf16.mxu0 0
        %1754 = vmatmul.mubr.bf16.gmra.mxu0 %v1621
        %v1755 = vpop.f32.mrf.mxu0
        %v1756 = vadd.f32 0.0, %v1755
        %v1757 = vpop.f32.mrf.mxu0
        %v1758 = vpop.f32.mrf.mxu0
        %v1759 = vadd.f32 0.0, %v1758
        %v1760 = vpop.f32.mrf.mxu0
        %1761 = vmatprep.mubr.bf16.mxu0 0
        %1762 = vmatmul.mubr.bf16.gmra.mxu0 %v1624
        %v1763 = vpop.f32.mrf.mxu0
        %v1764 = vadd.f32 0.0, %v1763
        %v1765 = vpop.f32.mrf.mxu0
        %v1766 = vpop.f32.mrf.mxu0
        %v1767 = vadd.f32 0.0, %v1766
        %v1768 = vpop.f32.mrf.mxu0
        %1769 = vmatprep.mubr.bf16.mxu0 0
        %1770 = vmatmul.mubr.bf16.gmra.mxu0 %v1627
        %v1771 = vpop.f32.mrf.mxu0
        %v1772 = vadd.f32 0.0, %v1771
        %v1773 = vpop.f32.mrf.mxu0
        %v1774 = vpop.f32.mrf.mxu0
        %v1775 = vadd.f32 0.0, %v1774
        %v1776 = vpop.f32.mrf.mxu0
        %1777 = vmatprep.mubr.bf16.mxu0 0
        %1778 = vmatmul.mubr.bf16.gmra.mxu0 %v1630
        %v1779 = vpop.f32.mrf.mxu0
        %v1780 = vadd.f32 0.0, %v1779
        %v1781 = vpop.f32.mrf.mxu0
        %v1782 = vpop.f32.mrf.mxu0
        %v1783 = vadd.f32 0.0, %v1782
        %v1784 = vpop.f32.mrf.mxu0
        %1785 = vmatprep.mubr.bf16.mxu0 0
        %1786 = vmatmul.mubr.bf16.gmra.mxu0 %v1633
        %v1787 = vpop.f32.mrf.mxu0
        %v1788 = vadd.f32 0.0, %v1787
        %v1789 = vpop.f32.mrf.mxu0
        %v1790 = vpop.f32.mrf.mxu0
        %v1791 = vadd.f32 0.0, %v1790
        %v1792 = vpop.f32.mrf.mxu0
        %1793 = vmatprep.mubr.bf16.mxu0 0
        %1794 = vmatmul.mubr.bf16.gmra.mxu0 %v1636
        %v1795 = vpop.f32.mrf.mxu0
        %v1796 = vadd.f32 0.0, %v1795
        %v1797 = vpop.f32.mrf.mxu0
        %v1798 = vpop.f32.mrf.mxu0
        %v1799 = vadd.f32 0.0, %v1798
        %v1800 = vpop.f32.mrf.mxu0
        %1801 = vmatprep.mubr.bf16.mxu0 0
        %1802 = vmatmul.mubr.bf16.gmra.mxu0 %v1639
        %v1803 = vpop.f32.mrf.mxu0
        %v1804 = vadd.f32 0.0, %v1803
        %v1805 = vpop.f32.mrf.mxu0
        %v1806 = vpop.f32.mrf.mxu0
        %v1807 = vadd.f32 0.0, %v1806
        %v1808 = vpop.f32.mrf.mxu0
        %1809 = vmatprep.mubr.bf16.mxu0 0
        %1810 = vmatmul.mubr.bf16.gmra.mxu0 %v1642
        %v1811 = vpop.f32.mrf.mxu0
        %v1812 = vadd.f32 0.0, %v1811
        %v1813 = vpop.f32.mrf.mxu0
        %v1814 = vpop.f32.mrf.mxu0
        %v1815 = vadd.f32 0.0, %v1814
        %v1816 = vpop.f32.mrf.mxu0
        %1817 = vmatprep.mubr.bf16.mxu0 0
        %1818 = vmatmul.mubr.bf16.gmra.mxu0 %v1645
        %v1819 = vpop.f32.mrf.mxu0
        %v1820 = vadd.f32 0.0, %v1819
        %v1821 = vpop.f32.mrf.mxu0
        %v1822 = vpop.f32.mrf.mxu0
        %v1823 = vadd.f32 0.0, %v1822
        %v1824 = vpop.f32.mrf.mxu0
        %1825 = vmatprep.mubr.bf16.mxu0 0
        %1826 = vmatmul.mubr.bf16.gmra.mxu0 %v1648
        %v1827 = vpop.f32.mrf.mxu0
        %v1828 = vadd.f32 0.0, %v1827
        %v1829 = vpop.f32.mrf.mxu0
        %v1830 = vpop.f32.mrf.mxu0
        %v1831 = vadd.f32 0.0, %v1830
        %v1832 = vpop.f32.mrf.mxu0
        %1833 = vmatprep.mubr.bf16.mxu0 0
        %1834 = vmatmul.mubr.bf16.gmra.mxu0 %v1651
        %v1835 = vpop.f32.mrf.mxu0
        %v1836 = vadd.f32 0.0, %v1835
        %v1837 = vpop.f32.mrf.mxu0
        %v1838 = vpop.f32.mrf.mxu0
        %v1839 = vadd.f32 0.0, %v1838
        %v1840 = vpop.f32.mrf.mxu0
        %1841 = vmatprep.mubr.bf16.mxu0 0
        %1842 = vmatmul.mubr.bf16.gmra.mxu0 %v1654
        %v1843 = vpop.f32.mrf.mxu0
        %v1844 = vadd.f32 0.0, %v1843
        %v1845 = vpop.f32.mrf.mxu0
        %v1846 = vpop.f32.mrf.mxu0
        %v1847 = vadd.f32 0.0, %v1846
        %v1848 = vpop.f32.mrf.mxu0
        %1849 = vmatprep.mubr.bf16.mxu0 0
        %1850 = vmatmul.mubr.bf16.gmra.mxu0 %v1657
        %v1851 = vpop.f32.mrf.mxu0
        %v1852 = vadd.f32 0.0, %v1851
        %v1853 = vpop.f32.mrf.mxu0
        %v1854 = vpop.f32.mrf.mxu0
        %v1855 = vadd.f32 0.0, %v1854
        %v1856 = vpop.f32.mrf.mxu0
        %1857 = vmatprep.mubr.bf16.mxu0 0
        %1858 = vmatmul.mubr.bf16.gmra.mxu0 %v1660
        %v1859 = vpop.f32.mrf.mxu0
        %v1860 = vadd.f32 0.0, %v1859
        %v1861 = vpop.f32.mrf.mxu0
        %v1862 = vpop.f32.mrf.mxu0
        %v1863 = vadd.f32 0.0, %v1862
        %v1864 = vpop.f32.mrf.mxu0
        %1865 = vmatprep.mubr.bf16.mxu0 0
        %1866 = vmatmul.mubr.bf16.gmra.mxu0 %v1663
        %v1867 = vpop.f32.mrf.mxu0
        %v1868 = vadd.f32 0.0, %v1867
        %v1869 = vpop.f32.mrf.mxu0
        %v1870 = vpop.f32.mrf.mxu0
        %v1871 = vadd.f32 0.0, %v1870
        %v1872 = vpop.f32.mrf.mxu0
        %1873 = vmatprep.mubr.bf16.mxu0 0
        %1874 = vmatmul.mubr.bf16.gmra.mxu0 %v1666
        %v1875 = vpop.f32.mrf.mxu0
        %v1876 = vadd.f32 0.0, %v1875
        %v1877 = vpop.f32.mrf.mxu0
        %v1878 = vpop.f32.mrf.mxu0
        %v1879 = vadd.f32 0.0, %v1878
        %v1880 = vpop.f32.mrf.mxu0
        %1881 = vmatprep.mubr.bf16.mxu0 0
        %1882 = vmatmul.mubr.bf16.gmra.mxu0 %v1669
        %v1883 = vpop.f32.mrf.mxu0
        %v1884 = vadd.f32 0.0, %v1883
        %v1885 = vpop.f32.mrf.mxu0
        %v1886 = vpop.f32.mrf.mxu0
        %v1887 = vadd.f32 0.0, %v1886
        %v1888 = vpop.f32.mrf.mxu0
        %1889 = vmatprep.mubr.bf16.mxu0 0
        %1890 = vmatmul.mubr.bf16.gmra.mxu0 %v1672
        %v1891 = vpop.f32.mrf.mxu0
        %v1892 = vadd.f32 0.0, %v1891
        %v1893 = vpop.f32.mrf.mxu0
        %v1894 = vpop.f32.mrf.mxu0
        %v1895 = vadd.f32 0.0, %v1894
        %v1896 = vpop.f32.mrf.mxu0
        %1897 = vmatprep.mubr.bf16.mxu0 0
        %1898 = vmatmul.mubr.bf16.gmra.mxu0 %v1675
        %v1899 = vpop.f32.mrf.mxu0
        %v1900 = vadd.f32 0.0, %v1899
        %v1901 = vpop.f32.mrf.mxu0
        %v1902 = vpop.f32.mrf.mxu0
        %v1903 = vadd.f32 0.0, %v1902
        %v1904 = vpop.f32.mrf.mxu0
        %1905 = vmatprep.mubr.bf16.mxu0 0
        %1906 = vmatmul.mubr.bf16.gmra.mxu0 %v1678
        %v1907 = vpop.f32.mrf.mxu0
        %v1908 = vadd.f32 0.0, %v1907
        %v1909 = vpop.f32.mrf.mxu0
        %v1910 = vpop.f32.mrf.mxu0
        %v1911 = vadd.f32 0.0, %v1910
        %v1912 = vpop.f32.mrf.mxu0
        %1913 = vmatprep.mubr.bf16.mxu0 0
        %1914 = vmatmul.mubr.bf16.gmra.mxu0 %v1681
        %v1915 = vpop.f32.mrf.mxu0
        %v1916 = vadd.f32 0.0, %v1915
        %v1917 = vpop.f32.mrf.mxu0
        %v1918 = vpop.f32.mrf.mxu0
        %v1919 = vadd.f32 0.0, %v1918
        %v1920 = vpop.f32.mrf.mxu0
        %1921 = vmatprep.mubr.bf16.mxu0 0
        %1922 = vmatmul.mubr.bf16.gmra.mxu0 %v1684
        %v1923 = vpop.f32.mrf.mxu0
        %v1924 = vadd.f32 0.0, %v1923
        %v1925 = vpop.f32.mrf.mxu0
        %v1926 = vpop.f32.mrf.mxu0
        %v1927 = vadd.f32 0.0, %v1926
        %v1928 = vpop.f32.mrf.mxu0
        %1929 = vmatprep.mubr.bf16.mxu0 0
        %1930 = vmatmul.mubr.bf16.gmra.mxu0 %v1687
        %v1931 = vpop.f32.mrf.mxu0
        %v1932 = vadd.f32 0.0, %v1931
        %v1933 = vpop.f32.mrf.mxu0
        %v1934 = vpop.f32.mrf.mxu0
        %v1935 = vadd.f32 0.0, %v1934
        %v1936 = vpop.f32.mrf.mxu0
        %1937 = vmatprep.mubr.bf16.mxu0 0
        %1938 = vmatmul.mubr.bf16.gmra.mxu0 %v1690
        %v1939 = vpop.f32.mrf.mxu0
        %v1940 = vadd.f32 0.0, %v1939
        %v1941 = vpop.f32.mrf.mxu0
        %v1942 = vpop.f32.mrf.mxu0
        %v1943 = vadd.f32 0.0, %v1942
        %v1944 = vpop.f32.mrf.mxu0
        %1945 = vmatprep.mubr.bf16.mxu0 0
        %1946 = vmatmul.mubr.bf16.gmra.mxu0 %v1693
        %v1947 = vpop.f32.mrf.mxu0
        %v1948 = vadd.f32 0.0, %v1947
        %v1949 = vpop.f32.mrf.mxu0
        %v1950 = vpop.f32.mrf.mxu0
        %v1951 = vadd.f32 0.0, %v1950
        %v1952 = vpop.f32.mrf.mxu0
        %1953 = vmatprep.mubr.bf16.mxu0 0
        %1954 = vmatmul.mubr.bf16.gmra.mxu0 %v1696
        %v1955 = vpop.f32.mrf.mxu0
        %v1956 = vadd.f32 0.0, %v1955
        %v1957 = vpop.f32.mrf.mxu0
        %v1958 = vpop.f32.mrf.mxu0
        %v1959 = vadd.f32 0.0, %v1958
        %v1960 = vpop.f32.mrf.mxu0
        %1961 = vmatprep.mubr.bf16.mxu0 0
        %1962 = vmatmul.mubr.bf16.gmra.mxu0 %v1699
        %v1963 = vpop.f32.mrf.mxu0
        %v1964 = vadd.f32 0.0, %v1963
        %v1965 = vpop.f32.mrf.mxu0
        %v1966 = vpop.f32.mrf.mxu0
        %v1967 = vadd.f32 0.0, %v1966
        %v1968 = vpop.f32.mrf.mxu0
        %1969 = vmatprep.mubr.bf16.mxu0 0
        %1970 = vmatmul.mubr.bf16.gmra.mxu0 %v1702
        %v1971 = vpop.f32.mrf.mxu0
        %v1972 = vadd.f32 0.0, %v1971
        %v1973 = vpop.f32.mrf.mxu0
        %v1974 = vpop.f32.mrf.mxu0
        %v1975 = vadd.f32 0.0, %v1974
        %v1976 = vpop.f32.mrf.mxu0
        %1977 = vmatprep.mubr.bf16.mxu0 0
        %1978 = vmatmul.mubr.bf16.gmra.mxu0 %v1705
        %v1979 = vpop.f32.mrf.mxu0
        %v1980 = vadd.f32 0.0, %v1979
        %v1981 = vpop.f32.mrf.mxu0
        %v1982 = vpop.f32.mrf.mxu0
        %v1983 = vadd.f32 0.0, %v1982
        %v1984 = vpop.f32.mrf.mxu0
        %1985 = vmatprep.mubr.bf16.mxu0 0
        %1986 = vmatmul.mubr.bf16.gmra.mxu0 %v1708
        %v1987 = vpop.f32.mrf.mxu0
        %v1988 = vadd.f32 0.0, %v1987
        %v1989 = vpop.f32.mrf.mxu0
        %v1990 = vpop.f32.mrf.mxu0
        %v1991 = vadd.f32 0.0, %v1990
        %v1992 = vpop.f32.mrf.mxu0
        %1993 = vmatprep.mubr.bf16.mxu0 0
        %1994 = vmatmul.mubr.bf16.gmra.mxu0 %v1711
        %v1995 = vpop.f32.mrf.mxu0
        %v1996 = vadd.f32 0.0, %v1995
        %v1997 = vpop.f32.mrf.mxu0
        %v1998 = vpop.f32.mrf.mxu0
        %v1999 = vadd.f32 0.0, %v1998
        %v2000 = vpop.f32.mrf.mxu0
        %2001 = vdwg.mxu0
        %v2002 = vpack.c.bf16 %v1751, %v1748
        %v2003 = vpack.c.bf16 %v1759, %v1756
        %v2004 = vpack.c.bf16 %v1767, %v1764
        %v2005 = vpack.c.bf16 %v1775, %v1772
        %v2006 = vpack.c.bf16 %v1783, %v1780
        %v2007 = vpack.c.bf16 %v1791, %v1788
        %v2008 = vpack.c.bf16 %v1799, %v1796
        %v2009 = vpack.c.bf16 %v1807, %v1804
        %v2010 = vpack.c.bf16 %v1815, %v1812
        %v2011 = vpack.c.bf16 %v1823, %v1820
        %v2012 = vpack.c.bf16 %v1831, %v1828
        %v2013 = vpack.c.bf16 %v1839, %v1836
        %v2014 = vpack.c.bf16 %v1847, %v1844
        %v2015 = vpack.c.bf16 %v1855, %v1852
        %v2016 = vpack.c.bf16 %v1863, %v1860
        %v2017 = vpack.c.bf16 %v1871, %v1868
        %v2018 = vpack.c.bf16 %v1879, %v1876
        %v2019 = vpack.c.bf16 %v1887, %v1884
        %v2020 = vpack.c.bf16 %v1895, %v1892
        %v2021 = vpack.c.bf16 %v1903, %v1900
        %v2022 = vpack.c.bf16 %v1911, %v1908
        %v2023 = vpack.c.bf16 %v1919, %v1916
        %v2024 = vpack.c.bf16 %v1927, %v1924
        %v2025 = vpack.c.bf16 %v1935, %v1932
        %v2026 = vpack.c.bf16 %v1943, %v1940
        %v2027 = vpack.c.bf16 %v1951, %v1948
        %v2028 = vpack.c.bf16 %v1959, %v1956
        %v2029 = vpack.c.bf16 %v1967, %v1964
        %v2030 = vpack.c.bf16 %v1975, %v1972
        %v2031 = vpack.c.bf16 %v1983, %v1980
        %v2032 = vpack.c.bf16 %v1991, %v1988
        %v2033 = vpack.c.bf16 %v1999, %v1996
        %v2034 = vld [vmem:[%s385] sm:$0xf]
        %v2035 = vld [vmem:[%s385 + $0x4] sm:$0xf]
        %v2036 = vld [vmem:[%s385 + $0x8] sm:$0xf]
        %v2037 = vld [vmem:[%s385 + $0xc] sm:$0xf]
        %v2038 = vld [vmem:[%s385 + $0x10] sm:$0xf]
        %v2039 = vld [vmem:[%s385 + $0x14] sm:$0xf]
        %v2040 = vld [vmem:[%s385 + $0x18] sm:$0xf]
        %v2041 = vld [vmem:[%s385 + $0x1c] sm:$0xf]
        %v2042 = vld [vmem:[%s385 + $0x20] sm:$0xf]
        %v2043 = vld [vmem:[%s385 + $0x24] sm:$0xf]
        %v2044 = vld [vmem:[%s385 + $0x28] sm:$0xf]
        %v2045 = vld [vmem:[%s385 + $0x2c] sm:$0xf]
        %v2046 = vld [vmem:[%s385 + $0x30] sm:$0xf]
        %v2047 = vld [vmem:[%s385 + $0x34] sm:$0xf]
        %v2048 = vld [vmem:[%s385 + $0x38] sm:$0xf]
        %v2049 = vld [vmem:[%s385 + $0x3c] sm:$0xf]
        %v2050 = vld [vmem:[%s385 + $0x40] sm:$0xf]
        %v2051 = vld [vmem:[%s385 + $0x44] sm:$0xf]
        %v2052 = vld [vmem:[%s385 + $0x48] sm:$0xf]
        %v2053 = vld [vmem:[%s385 + $0x4c] sm:$0xf]
        %v2054 = vld [vmem:[%s385 + $0x50] sm:$0xf]
        %v2055 = vld [vmem:[%s385 + $0x54] sm:$0xf]
        %v2056 = vld [vmem:[%s385 + $0x58] sm:$0xf]
        %v2057 = vld [vmem:[%s385 + $0x5c] sm:$0xf]
        %v2058 = vld [vmem:[%s385 + $0x60] sm:$0xf]
        %v2059 = vld [vmem:[%s385 + $0x64] sm:$0xf]
        %v2060 = vld [vmem:[%s385 + $0x68] sm:$0xf]
        %v2061 = vld [vmem:[%s385 + $0x6c] sm:$0xf]
        %v2062 = vld [vmem:[%s385 + $0x70] sm:$0xf]
        %v2063 = vld [vmem:[%s385 + $0x74] sm:$0xf]
        %v2064 = vld [vmem:[%s385 + $0x78] sm:$0xf]
        %v2065 = vld [vmem:[%s385 + $0x7c] sm:$0xf]
        %v2066 = vld [vmem:[%s385 + $0x80] sm:$0xf]
        %v2067 = vld [vmem:[%s385 + $0x84] sm:$0xf]
        %v2068 = vld [vmem:[%s385 + $0x88] sm:$0xf]
        %v2069 = vld [vmem:[%s385 + $0x8c] sm:$0xf]
        %v2070 = vld [vmem:[%s385 + $0x90] sm:$0xf]
        %v2071 = vld [vmem:[%s385 + $0x94] sm:$0xf]
        %v2072 = vld [vmem:[%s385 + $0x98] sm:$0xf]
        %v2073 = vld [vmem:[%s385 + $0x9c] sm:$0xf]
        %v2074 = vld [vmem:[%s385 + $0xa0] sm:$0xf]
        %v2075 = vld [vmem:[%s385 + $0xa4] sm:$0xf]
        %v2076 = vld [vmem:[%s385 + $0xa8] sm:$0xf]
        %v2077 = vld [vmem:[%s385 + $0xac] sm:$0xf]
        %v2078 = vld [vmem:[%s385 + $0xb0] sm:$0xf]
        %v2079 = vld [vmem:[%s385 + $0xb4] sm:$0xf]
        %v2080 = vld [vmem:[%s385 + $0xb8] sm:$0xf]
        %v2081 = vld [vmem:[%s385 + $0xbc] sm:$0xf]
        %v2082 = vld [vmem:[%s385 + $0xc0] sm:$0xf]
        %v2083 = vld [vmem:[%s385 + $0xc4] sm:$0xf]
        %v2084 = vld [vmem:[%s385 + $0xc8] sm:$0xf]
        %v2085 = vld [vmem:[%s385 + $0xcc] sm:$0xf]
        %v2086 = vld [vmem:[%s385 + $0xd0] sm:$0xf]
        %v2087 = vld [vmem:[%s385 + $0xd4] sm:$0xf]
        %v2088 = vld [vmem:[%s385 + $0xd8] sm:$0xf]
        %v2089 = vld [vmem:[%s385 + $0xdc] sm:$0xf]
        %v2090 = vld [vmem:[%s385 + $0xe0] sm:$0xf]
        %v2091 = vld [vmem:[%s385 + $0xe4] sm:$0xf]
        %v2092 = vld [vmem:[%s385 + $0xe8] sm:$0xf]
        %v2093 = vld [vmem:[%s385 + $0xec] sm:$0xf]
        %v2094 = vld [vmem:[%s385 + $0xf0] sm:$0xf]
        %v2095 = vld [vmem:[%s385 + $0xf4] sm:$0xf]
        %v2096 = vld [vmem:[%s385 + $0xf8] sm:$0xf]
        %v2097 = vld [vmem:[%s385 + $0xfc] sm:$0xf]
        %2130 = vrot.lane.b32.xlu0 %v2002, 32
        %v2131 = vpop.permute.xlu0 %2130
        %2132 = vrot.lane.b32.xlu0 %v2003, 32
        %v2133 = vpop.permute.xlu0 %2132
        %2134 = vrot.lane.b32.xlu0 %v2004, 32
        %v2135 = vpop.permute.xlu0 %2134
        %2136 = vrot.lane.b32.xlu0 %v2005, 32
        %v2137 = vpop.permute.xlu0 %2136
        %2138 = vrot.lane.b32.xlu0 %v2006, 32
        %v2139 = vpop.permute.xlu0 %2138
        %2140 = vrot.lane.b32.xlu0 %v2007, 32
        %v2141 = vpop.permute.xlu0 %2140
        %2142 = vrot.lane.b32.xlu0 %v2008, 32
        %v2143 = vpop.permute.xlu0 %2142
        %2144 = vrot.lane.b32.xlu0 %v2009, 32
        %v2145 = vpop.permute.xlu0 %2144
        %2146 = vrot.lane.b32.xlu0 %v2010, 32
        %v2147 = vpop.permute.xlu0 %2146
        %2148 = vrot.lane.b32.xlu0 %v2011, 32
        %v2149 = vpop.permute.xlu0 %2148
        %2150 = vrot.lane.b32.xlu0 %v2012, 32
        %v2151 = vpop.permute.xlu0 %2150
        %2152 = vrot.lane.b32.xlu0 %v2013, 32
        %v2153 = vpop.permute.xlu0 %2152
        %2154 = vrot.lane.b32.xlu0 %v2014, 32
        %v2155 = vpop.permute.xlu0 %2154
        %2156 = vrot.lane.b32.xlu0 %v2015, 32
        %v2157 = vpop.permute.xlu0 %2156
        %2158 = vrot.lane.b32.xlu0 %v2016, 32
        %v2159 = vpop.permute.xlu0 %2158
        %2160 = vrot.lane.b32.xlu0 %v2017, 32
        %v2161 = vpop.permute.xlu0 %2160
        %2162 = vrot.lane.b32.xlu0 %v2018, 32
        %v2163 = vpop.permute.xlu0 %2162
        %2164 = vrot.lane.b32.xlu0 %v2019, 32
        %v2165 = vpop.permute.xlu0 %2164
        %2166 = vrot.lane.b32.xlu0 %v2020, 32
        %v2167 = vpop.permute.xlu0 %2166
        %2168 = vrot.lane.b32.xlu0 %v2021, 32
        %v2169 = vpop.permute.xlu0 %2168
        %2170 = vrot.lane.b32.xlu0 %v2022, 32
        %v2171 = vpop.permute.xlu0 %2170
        %2172 = vrot.lane.b32.xlu0 %v2023, 32
        %v2173 = vpop.permute.xlu0 %2172
        %2174 = vrot.lane.b32.xlu0 %v2024, 32
        %v2175 = vpop.permute.xlu0 %2174
        %2176 = vrot.lane.b32.xlu0 %v2025, 32
        %v2177 = vpop.permute.xlu0 %2176
        %2178 = vrot.lane.b32.xlu0 %v2026, 32
        %v2179 = vpop.permute.xlu0 %2178
        %2180 = vrot.lane.b32.xlu0 %v2027, 32
        %v2181 = vpop.permute.xlu0 %2180
        %2182 = vrot.lane.b32.xlu0 %v2028, 32
        %v2183 = vpop.permute.xlu0 %2182
        %2184 = vrot.lane.b32.xlu0 %v2029, 32
        %v2185 = vpop.permute.xlu0 %2184
        %2186 = vrot.lane.b32.xlu0 %v2030, 32
        %v2187 = vpop.permute.xlu0 %2186
        %2188 = vrot.lane.b32.xlu0 %v2031, 32
        %v2189 = vpop.permute.xlu0 %2188
        %2190 = vrot.lane.b32.xlu0 %v2032, 32
        %v2191 = vpop.permute.xlu0 %2190
        %2192 = vrot.lane.b32.xlu0 %v2033, 32
        %v2193 = vpop.permute.xlu0 %2192
        %v2258 = vunpack.c.l.b16 %v2034
        %v2259 = vunpack.c.l.b16 %v2035
        %v2260 = vunpack.c.l.b16 %v2036
        %v2261 = vunpack.c.l.b16 %v2037
        %v2262 = vunpack.c.l.b16 %v2038
        %v2263 = vunpack.c.l.b16 %v2039
        %v2264 = vunpack.c.l.b16 %v2040
        %v2265 = vunpack.c.l.b16 %v2041
        %v2266 = vunpack.c.l.b16 %v2042
        %v2267 = vunpack.c.l.b16 %v2043
        %v2268 = vunpack.c.l.b16 %v2044
        %v2269 = vunpack.c.l.b16 %v2045
        %v2270 = vunpack.c.l.b16 %v2046
        %v2271 = vunpack.c.l.b16 %v2047
        %v2272 = vunpack.c.l.b16 %v2048
        %v2273 = vunpack.c.l.b16 %v2049
        %v2274 = vunpack.c.l.b16 %v2050
        %v2275 = vunpack.c.l.b16 %v2051
        %v2276 = vunpack.c.l.b16 %v2052
        %v2277 = vunpack.c.l.b16 %v2053
        %v2278 = vunpack.c.l.b16 %v2054
        %v2279 = vunpack.c.l.b16 %v2055
        %v2280 = vunpack.c.l.b16 %v2056
        %v2281 = vunpack.c.l.b16 %v2057
        %v2282 = vunpack.c.l.b16 %v2058
        %v2283 = vunpack.c.l.b16 %v2059
        %v2284 = vunpack.c.l.b16 %v2060
        %v2285 = vunpack.c.l.b16 %v2061
        %v2286 = vunpack.c.l.b16 %v2062
        %v2287 = vunpack.c.l.b16 %v2063
        %v2288 = vunpack.c.l.b16 %v2064
        %v2289 = vunpack.c.l.b16 %v2065
        %v2290 = vunpack.c.l.b16 %v2066
        %v2291 = vunpack.c.l.b16 %v2067
        %v2292 = vunpack.c.l.b16 %v2068
        %v2293 = vunpack.c.l.b16 %v2069
        %v2294 = vunpack.c.l.b16 %v2070
        %v2295 = vunpack.c.l.b16 %v2071
        %v2296 = vunpack.c.l.b16 %v2072
        %v2297 = vunpack.c.l.b16 %v2073
        %v2298 = vunpack.c.l.b16 %v2074
        %v2299 = vunpack.c.l.b16 %v2075
        %v2300 = vunpack.c.l.b16 %v2076
        %v2301 = vunpack.c.l.b16 %v2077
        %v2302 = vunpack.c.l.b16 %v2078
        %v2303 = vunpack.c.l.b16 %v2079
        %v2304 = vunpack.c.l.b16 %v2080
        %v2305 = vunpack.c.l.b16 %v2081
        %v2306 = vunpack.c.l.b16 %v2082
        %v2307 = vunpack.c.l.b16 %v2083
        %v2308 = vunpack.c.l.b16 %v2084
        %v2309 = vunpack.c.l.b16 %v2085
        %v2310 = vunpack.c.l.b16 %v2086
        %v2311 = vunpack.c.l.b16 %v2087
        %v2312 = vunpack.c.l.b16 %v2088
        %v2313 = vunpack.c.l.b16 %v2089
        %v2314 = vunpack.c.l.b16 %v2090
        %v2315 = vunpack.c.l.b16 %v2091
        %v2316 = vunpack.c.l.b16 %v2092
        %v2317 = vunpack.c.l.b16 %v2093
        %v2318 = vunpack.c.l.b16 %v2094
        %v2319 = vunpack.c.l.b16 %v2095
        %v2320 = vunpack.c.l.b16 %v2096
        %v2321 = vunpack.c.l.b16 %v2097
        %v2322 = vpack.c.b16 %v2259, %v2258
        %v2323 = vpack.c.b16 %v2261, %v2260
        %v2324 = vpack.c.b16 %v2263, %v2262
        %v2325 = vpack.c.b16 %v2265, %v2264
        %v2326 = vpack.c.b16 %v2267, %v2266
        %v2327 = vpack.c.b16 %v2269, %v2268
        %v2328 = vpack.c.b16 %v2271, %v2270
        %v2329 = vpack.c.b16 %v2273, %v2272
        %v2330 = vpack.c.b16 %v2275, %v2274
        %v2331 = vpack.c.b16 %v2277, %v2276
        %v2332 = vpack.c.b16 %v2279, %v2278
        %v2333 = vpack.c.b16 %v2281, %v2280
        %v2334 = vpack.c.b16 %v2283, %v2282
        %v2335 = vpack.c.b16 %v2285, %v2284
        %v2336 = vpack.c.b16 %v2287, %v2286
        %v2337 = vpack.c.b16 %v2289, %v2288
        %v2338 = vpack.c.b16 %v2291, %v2290
        %v2339 = vpack.c.b16 %v2293, %v2292
        %v2340 = vpack.c.b16 %v2295, %v2294
        %v2341 = vpack.c.b16 %v2297, %v2296
        %v2342 = vpack.c.b16 %v2299, %v2298
        %v2343 = vpack.c.b16 %v2301, %v2300
        %v2344 = vpack.c.b16 %v2303, %v2302
        %v2345 = vpack.c.b16 %v2305, %v2304
        %v2346 = vpack.c.b16 %v2307, %v2306
        %v2347 = vpack.c.b16 %v2309, %v2308
        %v2348 = vpack.c.b16 %v2311, %v2310
        %v2349 = vpack.c.b16 %v2313, %v2312
        %v2350 = vpack.c.b16 %v2315, %v2314
        %v2351 = vpack.c.b16 %v2317, %v2316
        %v2352 = vpack.c.b16 %v2319, %v2318
        %v2353 = vpack.c.b16 %v2321, %v2320
        %2354 = vrot.lane.b32.xlu0 %v2322, 64
        %v2355 = vpop.permute.xlu0 %2354
        %2356 = vrot.lane.b32.xlu0 %v2323, 64
        %v2357 = vpop.permute.xlu0 %2356
        %2358 = vrot.lane.b32.xlu0 %v2324, 64
        %v2359 = vpop.permute.xlu0 %2358
        %2360 = vrot.lane.b32.xlu0 %v2325, 64
        %v2361 = vpop.permute.xlu0 %2360
        %2362 = vrot.lane.b32.xlu0 %v2326, 64
        %v2363 = vpop.permute.xlu0 %2362
        %2364 = vrot.lane.b32.xlu0 %v2327, 64
        %v2365 = vpop.permute.xlu0 %2364
        %2366 = vrot.lane.b32.xlu0 %v2328, 64
        %v2367 = vpop.permute.xlu0 %2366
        %2368 = vrot.lane.b32.xlu0 %v2329, 64
        %v2369 = vpop.permute.xlu0 %2368
        %2370 = vrot.lane.b32.xlu0 %v2330, 64
        %v2371 = vpop.permute.xlu0 %2370
        %2372 = vrot.lane.b32.xlu0 %v2331, 64
        %v2373 = vpop.permute.xlu0 %2372
        %2374 = vrot.lane.b32.xlu0 %v2332, 64
        %v2375 = vpop.permute.xlu0 %2374
        %2376 = vrot.lane.b32.xlu0 %v2333, 64
        %v2377 = vpop.permute.xlu0 %2376
        %2378 = vrot.lane.b32.xlu0 %v2334, 64
        %v2379 = vpop.permute.xlu0 %2378
        %2380 = vrot.lane.b32.xlu0 %v2335, 64
        %v2381 = vpop.permute.xlu0 %2380
        %2382 = vrot.lane.b32.xlu0 %v2336, 64
        %v2383 = vpop.permute.xlu0 %2382
        %2384 = vrot.lane.b32.xlu0 %v2337, 64
        %v2385 = vpop.permute.xlu0 %2384
        %2386 = vrot.lane.b32.xlu0 %v2338, 64
        %v2387 = vpop.permute.xlu0 %2386
        %2388 = vrot.lane.b32.xlu0 %v2339, 64
        %v2389 = vpop.permute.xlu0 %2388
        %2390 = vrot.lane.b32.xlu0 %v2340, 64
        %v2391 = vpop.permute.xlu0 %2390
        %2392 = vrot.lane.b32.xlu0 %v2341, 64
        %v2393 = vpop.permute.xlu0 %2392
        %2394 = vrot.lane.b32.xlu0 %v2342, 64
        %v2395 = vpop.permute.xlu0 %2394
        %2396 = vrot.lane.b32.xlu0 %v2343, 64
        %v2397 = vpop.permute.xlu0 %2396
        %2398 = vrot.lane.b32.xlu0 %v2344, 64
        %v2399 = vpop.permute.xlu0 %2398
        %2400 = vrot.lane.b32.xlu0 %v2345, 64
        %v2401 = vpop.permute.xlu0 %2400
        %2402 = vrot.lane.b32.xlu0 %v2346, 64
        %v2403 = vpop.permute.xlu0 %2402
        %2404 = vrot.lane.b32.xlu0 %v2347, 64
        %v2405 = vpop.permute.xlu0 %2404
        %2406 = vrot.lane.b32.xlu0 %v2348, 64
        %v2407 = vpop.permute.xlu0 %2406
        %2408 = vrot.lane.b32.xlu0 %v2349, 64
        %v2409 = vpop.permute.xlu0 %2408
        %2410 = vrot.lane.b32.xlu0 %v2350, 64
        %v2411 = vpop.permute.xlu0 %2410
        %2412 = vrot.lane.b32.xlu0 %v2351, 64
        %v2413 = vpop.permute.xlu0 %2412
        %2414 = vrot.lane.b32.xlu0 %v2352, 64
        %v2415 = vpop.permute.xlu0 %2414
        %2416 = vrot.lane.b32.xlu0 %v2353, 64
        %v2417 = vpop.permute.xlu0 %2416
        %vm2418 = vcmask 261120
        %v2421 = vsel %vm2418, %v1585, %v2131
        %v2424 = vsel %vm2418, %v1586, %v2133
        %v2427 = vsel %vm2418, %v1587, %v2135
        %v2430 = vsel %vm2418, %v1588, %v2137
        %v2433 = vsel %vm2418, %v1589, %v2139
        %v2436 = vsel %vm2418, %v1590, %v2141
        %v2439 = vsel %vm2418, %v1591, %v2143
        %v2442 = vsel %vm2418, %v1592, %v2145
        %v2445 = vsel %vm2418, %v1593, %v2147
        %v2448 = vsel %vm2418, %v1594, %v2149
        %v2451 = vsel %vm2418, %v1595, %v2151
        %v2454 = vsel %vm2418, %v1596, %v2153
        %v2457 = vsel %vm2418, %v1597, %v2155
        %v2460 = vsel %vm2418, %v1598, %v2157
        %v2463 = vsel %vm2418, %v1599, %v2159
        %v2466 = vsel %vm2418, %v1600, %v2161
        %v2469 = vsel %vm2418, %v1601, %v2163
        %v2472 = vsel %vm2418, %v1602, %v2165
        %v2475 = vsel %vm2418, %v1603, %v2167
        %v2478 = vsel %vm2418, %v1604, %v2169
        %v2481 = vsel %vm2418, %v1605, %v2171
        %v2484 = vsel %vm2418, %v1606, %v2173
        %v2487 = vsel %vm2418, %v1607, %v2175
        %v2490 = vsel %vm2418, %v1608, %v2177
        %v2493 = vsel %vm2418, %v1609, %v2179
        %v2496 = vsel %vm2418, %v1610, %v2181
        %v2499 = vsel %vm2418, %v1611, %v2183
        %v2502 = vsel %vm2418, %v1612, %v2185
        %v2505 = vsel %vm2418, %v1613, %v2187
        %v2508 = vsel %vm2418, %v1614, %v2189
        %v2511 = vsel %vm2418, %v1615, %v2191
        %v2514 = vsel %vm2418, %v1616, %v2193
        %vm2515 = vcmask 523264
        %v2517 = vsel %vm2515, %v2421, %v2355
        %v2519 = vsel %vm2515, %v2424, %v2357
        %v2521 = vsel %vm2515, %v2427, %v2359
        %v2523 = vsel %vm2515, %v2430, %v2361
        %v2525 = vsel %vm2515, %v2433, %v2363
        %v2527 = vsel %vm2515, %v2436, %v2365
        %v2529 = vsel %vm2515, %v2439, %v2367
        %v2531 = vsel %vm2515, %v2442, %v2369
        %v2533 = vsel %vm2515, %v2445, %v2371
        %v2535 = vsel %vm2515, %v2448, %v2373
        %v2537 = vsel %vm2515, %v2451, %v2375
        %v2539 = vsel %vm2515, %v2454, %v2377
        %v2541 = vsel %vm2515, %v2457, %v2379
        %v2543 = vsel %vm2515, %v2460, %v2381
        %v2545 = vsel %vm2515, %v2463, %v2383
        %v2547 = vsel %vm2515, %v2466, %v2385
        %v2549 = vsel %vm2515, %v2469, %v2387
        %v2551 = vsel %vm2515, %v2472, %v2389
        %v2553 = vsel %vm2515, %v2475, %v2391
        %v2555 = vsel %vm2515, %v2478, %v2393
        %v2557 = vsel %vm2515, %v2481, %v2395
        %v2559 = vsel %vm2515, %v2484, %v2397
        %v2561 = vsel %vm2515, %v2487, %v2399
        %v2563 = vsel %vm2515, %v2490, %v2401
        %v2565 = vsel %vm2515, %v2493, %v2403
        %v2567 = vsel %vm2515, %v2496, %v2405
        %v2569 = vsel %vm2515, %v2499, %v2407
        %v2571 = vsel %vm2515, %v2502, %v2409
        %v2573 = vsel %vm2515, %v2505, %v2411
        %v2575 = vsel %vm2515, %v2508, %v2413
        %v2577 = vsel %vm2515, %v2511, %v2415
        %v2579 = vsel %vm2515, %v2514, %v2417
        %v2580 = vld [vmem:[%s3] sm:$0xf]
        %v2581 = vld [vmem:[%s3 + $0x4] sm:$0xf]
        %v2582 = vld [vmem:[%s3 + $0x8] sm:$0xf]
        %v2583 = vld [vmem:[%s3 + $0xc] sm:$0xf]
        %v2584 = vld [vmem:[%s3 + $0x10] sm:$0xf]
        %v2585 = vld [vmem:[%s3 + $0x14] sm:$0xf]
        %v2586 = vld [vmem:[%s3 + $0x18] sm:$0xf]
        %v2587 = vld [vmem:[%s3 + $0x1c] sm:$0xf]
        %v2588 = vld [vmem:[%s3 + $0x20] sm:$0xf]
        %v2589 = vld [vmem:[%s3 + $0x24] sm:$0xf]
        %v2590 = vld [vmem:[%s3 + $0x28] sm:$0xf]
        %v2591 = vld [vmem:[%s3 + $0x2c] sm:$0xf]
        %v2592 = vld [vmem:[%s4] sm:$0x1]
        %v2594 = vlaneseq
        %v2595 = vshrl.u32 %v2594, 7
        %v2596 = vsub.s32 0, %v2595
        %v2597 = vrot.slane %v2592, %v2596
        %v2611 = vunpack.c.l.b16 %v2580
        %v2612 = vunpack.c.l.b16 %v2581
        %v2613 = vunpack.c.l.b16 %v2582
        %v2614 = vunpack.c.l.b16 %v2583
        %v2615 = vunpack.c.l.b16 %v2584
        %v2616 = vunpack.c.l.b16 %v2585
        %v2617 = vunpack.c.l.b16 %v2586
        %v2618 = vunpack.c.l.b16 %v2587
        %v2619 = vunpack.c.l.b16 %v2588
        %v2620 = vunpack.c.l.b16 %v2589
        %v2621 = vunpack.c.l.b16 %v2590
        %v2622 = vunpack.c.l.b16 %v2591
        %v2623 = vpack.c.b16 %v2612, %v2611
        %v2624 = vpack.c.b16 %v2614, %v2613
        %v2625 = vpack.c.b16 %v2616, %v2615
        %v2626 = vpack.c.b16 %v2618, %v2617
        %v2627 = vpack.c.b16 %v2620, %v2619
        %v2628 = vpack.c.b16 %v2622, %v2621
        %vm2635 = vcmask 785408
        %v2636 = vsel %vm2635, %v2517, 0
        %v2638 = vsel %vm2635, %v2519, 0
        %v2640 = vsel %vm2635, %v2521, 0
        %v2642 = vsel %vm2635, %v2523, 0
        %v2644 = vsel %vm2635, %v2525, 0
        %v2646 = vsel %vm2635, %v2527, 0
        %v2648 = vsel %vm2635, %v2529, 0
        %v2650 = vsel %vm2635, %v2531, 0
        %v2652 = vsel %vm2635, %v2533, 0
        %v2654 = vsel %vm2635, %v2535, 0
        %v2656 = vsel %vm2635, %v2537, 0
        %v2658 = vsel %vm2635, %v2539, 0
        %v2660 = vsel %vm2635, %v2541, 0
        %v2662 = vsel %vm2635, %v2543, 0
        %v2664 = vsel %vm2635, %v2545, 0
        %v2666 = vsel %vm2635, %v2547, 0
        %v2668 = vsel %vm2635, %v2549, 0
        %v2670 = vsel %vm2635, %v2551, 0
        %v2672 = vsel %vm2635, %v2553, 0
        %v2674 = vsel %vm2635, %v2555, 0
        %v2676 = vsel %vm2635, %v2557, 0
        %v2678 = vsel %vm2635, %v2559, 0
        %v2680 = vsel %vm2635, %v2561, 0
        %v2682 = vsel %vm2635, %v2563, 0
        %v2684 = vsel %vm2635, %v2565, 0
        %v2686 = vsel %vm2635, %v2567, 0
        %v2688 = vsel %vm2635, %v2569, 0
        %v2690 = vsel %vm2635, %v2571, 0
        %v2692 = vsel %vm2635, %v2573, 0
        %v2694 = vsel %vm2635, %v2575, 0
        %v2696 = vsel %vm2635, %v2577, 0
        %v2698 = vsel %vm2635, %v2579, 0
        %2700 = vmatprep.subr.bf16.mxu0 0
        %2701 = vmatpush1.bf16.msra.mxu0 0
        %2702 = vmatprep.subr.bf16.mxu0 0
        %2703 = vmatpush1.bf16.msra.mxu0 0
        %2704 = vmatprep.subr.bf16.mxu0 0
        %2705 = vmatpush1.bf16.msra.mxu0 %v2628
        %2706 = vmatprep.subr.bf16.mxu0 0
        %2707 = vmatpush1.bf16.msra.mxu0 %v2627
        %2708 = vmatprep.subr.bf16.mxu0 0
        %2709 = vmatpush1.bf16.msra.mxu0 %v2626
        %2710 = vmatprep.subr.bf16.mxu0 0
        %2711 = vmatpush1.bf16.msra.mxu0 %v2625
        %2712 = vmatprep.subr.bf16.mxu0 0
        %2713 = vmatpush1.bf16.msra.mxu0 %v2624
        %2714 = vmatprep.subr.bf16.mxu0 0
        %2715 = vmatpush1.bf16.msra.mxu0 %v2623
        %2716 = vmatprep.subr.bf16.mxu0 0
        %2717 = vmatpush2.bf16.msra.mxu0 0
        %2718 = vmatprep.subr.bf16.mxu0 0
        %2719 = vmatpush2.bf16.msra.mxu0 0
        %2720 = vmatprep.subr.bf16.mxu0 0
        %2721 = vmatpush2.bf16.msra.mxu0 0
        %2722 = vmatprep.subr.bf16.mxu0 0
        %2723 = vmatpush2.bf16.msra.mxu0 0
        %2724 = vmatprep.subr.bf16.mxu0 0
        %2725 = vmatpush2.bf16.msra.mxu0 0
        %2726 = vmatprep.subr.bf16.mxu0 0
        %2727 = vmatpush2.bf16.msra.mxu0 0
        %2728 = vmatprep.subr.bf16.mxu0 0
        %2729 = vmatpush2.bf16.msra.mxu0 0
        %2730 = vmatprep.subr.bf16.mxu0 0
        %2731 = vmatpush2.bf16.msra.mxu0 0
        %2732 = vmatprep.mubr.bf16.mxu0 0
        %2733 = vmatmul.mubr.bf16.gmra.mxu0 %v2636
        %v2734 = vpop.f32.mrf.mxu0
        %v2735 = vadd.f32 %v2597, %v2734
        %v2736 = vpop.f32.mrf.mxu0
        %v2737 = vpop.f32.mrf.mxu0
        %v2738 = vadd.f32 %v2597, %v2737
        %v2739 = vpop.f32.mrf.mxu0
        %2740 = vmatprep.mubr.bf16.mxu0 0
        %2741 = vmatmul.mubr.bf16.gmra.mxu0 %v2638
        %v2742 = vpop.f32.mrf.mxu0
        %v2743 = vadd.f32 %v2597, %v2742
        %v2744 = vpop.f32.mrf.mxu0
        %v2745 = vpop.f32.mrf.mxu0
        %v2746 = vadd.f32 %v2597, %v2745
        %v2747 = vpop.f32.mrf.mxu0
        %2748 = vmatprep.mubr.bf16.mxu0 0
        %2749 = vmatmul.mubr.bf16.gmra.mxu0 %v2640
        %v2750 = vpop.f32.mrf.mxu0
        %v2751 = vadd.f32 %v2597, %v2750
        %v2752 = vpop.f32.mrf.mxu0
        %v2753 = vpop.f32.mrf.mxu0
        %v2754 = vadd.f32 %v2597, %v2753
        %v2755 = vpop.f32.mrf.mxu0
        %2756 = vmatprep.mubr.bf16.mxu0 0
        %2757 = vmatmul.mubr.bf16.gmra.mxu0 %v2642
        %v2758 = vpop.f32.mrf.mxu0
        %v2759 = vadd.f32 %v2597, %v2758
        %v2760 = vpop.f32.mrf.mxu0
        %v2761 = vpop.f32.mrf.mxu0
        %v2762 = vadd.f32 %v2597, %v2761
        %v2763 = vpop.f32.mrf.mxu0
        %2764 = vmatprep.mubr.bf16.mxu0 0
        %2765 = vmatmul.mubr.bf16.gmra.mxu0 %v2644
        %v2766 = vpop.f32.mrf.mxu0
        %v2767 = vadd.f32 %v2597, %v2766
        %v2768 = vpop.f32.mrf.mxu0
        %v2769 = vpop.f32.mrf.mxu0
        %v2770 = vadd.f32 %v2597, %v2769
        %v2771 = vpop.f32.mrf.mxu0
        %2772 = vmatprep.mubr.bf16.mxu0 0
        %2773 = vmatmul.mubr.bf16.gmra.mxu0 %v2646
        %v2774 = vpop.f32.mrf.mxu0
        %v2775 = vadd.f32 %v2597, %v2774
        %v2776 = vpop.f32.mrf.mxu0
        %v2777 = vpop.f32.mrf.mxu0
        %v2778 = vadd.f32 %v2597, %v2777
        %v2779 = vpop.f32.mrf.mxu0
        %2780 = vmatprep.mubr.bf16.mxu0 0
        %2781 = vmatmul.mubr.bf16.gmra.mxu0 %v2648
        %v2782 = vpop.f32.mrf.mxu0
        %v2783 = vadd.f32 %v2597, %v2782
        %v2784 = vpop.f32.mrf.mxu0
        %v2785 = vpop.f32.mrf.mxu0
        %v2786 = vadd.f32 %v2597, %v2785
        %v2787 = vpop.f32.mrf.mxu0
        %2788 = vmatprep.mubr.bf16.mxu0 0
        %2789 = vmatmul.mubr.bf16.gmra.mxu0 %v2650
        %v2790 = vpop.f32.mrf.mxu0
        %v2791 = vadd.f32 %v2597, %v2790
        %v2792 = vpop.f32.mrf.mxu0
        %v2793 = vpop.f32.mrf.mxu0
        %v2794 = vadd.f32 %v2597, %v2793
        %v2795 = vpop.f32.mrf.mxu0
        %2796 = vmatprep.mubr.bf16.mxu0 0
        %2797 = vmatmul.mubr.bf16.gmra.mxu0 %v2652
        %v2798 = vpop.f32.mrf.mxu0
        %v2799 = vadd.f32 %v2597, %v2798
        %v2800 = vpop.f32.mrf.mxu0
        %v2801 = vpop.f32.mrf.mxu0
        %v2802 = vadd.f32 %v2597, %v2801
        %v2803 = vpop.f32.mrf.mxu0
        %2804 = vmatprep.mubr.bf16.mxu0 0
        %2805 = vmatmul.mubr.bf16.gmra.mxu0 %v2654
        %v2806 = vpop.f32.mrf.mxu0
        %v2807 = vadd.f32 %v2597, %v2806
        %v2808 = vpop.f32.mrf.mxu0
        %v2809 = vpop.f32.mrf.mxu0
        %v2810 = vadd.f32 %v2597, %v2809
        %v2811 = vpop.f32.mrf.mxu0
        %2812 = vmatprep.mubr.bf16.mxu0 0
        %2813 = vmatmul.mubr.bf16.gmra.mxu0 %v2656
        %v2814 = vpop.f32.mrf.mxu0
        %v2815 = vadd.f32 %v2597, %v2814
        %v2816 = vpop.f32.mrf.mxu0
        %v2817 = vpop.f32.mrf.mxu0
        %v2818 = vadd.f32 %v2597, %v2817
        %v2819 = vpop.f32.mrf.mxu0
        %2820 = vmatprep.mubr.bf16.mxu0 0
        %2821 = vmatmul.mubr.bf16.gmra.mxu0 %v2658
        %v2822 = vpop.f32.mrf.mxu0
        %v2823 = vadd.f32 %v2597, %v2822
        %v2824 = vpop.f32.mrf.mxu0
        %v2825 = vpop.f32.mrf.mxu0
        %v2826 = vadd.f32 %v2597, %v2825
        %v2827 = vpop.f32.mrf.mxu0
        %2828 = vmatprep.mubr.bf16.mxu0 0
        %2829 = vmatmul.mubr.bf16.gmra.mxu0 %v2660
        %v2830 = vpop.f32.mrf.mxu0
        %v2831 = vadd.f32 %v2597, %v2830
        %v2832 = vpop.f32.mrf.mxu0
        %v2833 = vpop.f32.mrf.mxu0
        %v2834 = vadd.f32 %v2597, %v2833
        %v2835 = vpop.f32.mrf.mxu0
        %2836 = vmatprep.mubr.bf16.mxu0 0
        %2837 = vmatmul.mubr.bf16.gmra.mxu0 %v2662
        %v2838 = vpop.f32.mrf.mxu0
        %v2839 = vadd.f32 %v2597, %v2838
        %v2840 = vpop.f32.mrf.mxu0
        %v2841 = vpop.f32.mrf.mxu0
        %v2842 = vadd.f32 %v2597, %v2841
        %v2843 = vpop.f32.mrf.mxu0
        %2844 = vmatprep.mubr.bf16.mxu0 0
        %2845 = vmatmul.mubr.bf16.gmra.mxu0 %v2664
        %v2846 = vpop.f32.mrf.mxu0
        %v2847 = vadd.f32 %v2597, %v2846
        %v2848 = vpop.f32.mrf.mxu0
        %v2849 = vpop.f32.mrf.mxu0
        %v2850 = vadd.f32 %v2597, %v2849
        %v2851 = vpop.f32.mrf.mxu0
        %2852 = vmatprep.mubr.bf16.mxu0 0
        %2853 = vmatmul.mubr.bf16.gmra.mxu0 %v2666
        %v2854 = vpop.f32.mrf.mxu0
        %v2855 = vadd.f32 %v2597, %v2854
        %v2856 = vpop.f32.mrf.mxu0
        %v2857 = vpop.f32.mrf.mxu0
        %v2858 = vadd.f32 %v2597, %v2857
        %v2859 = vpop.f32.mrf.mxu0
        %2860 = vmatprep.mubr.bf16.mxu0 0
        %2861 = vmatmul.mubr.bf16.gmra.mxu0 %v2668
        %v2862 = vpop.f32.mrf.mxu0
        %v2863 = vadd.f32 %v2597, %v2862
        %v2864 = vpop.f32.mrf.mxu0
        %v2865 = vpop.f32.mrf.mxu0
        %v2866 = vadd.f32 %v2597, %v2865
        %v2867 = vpop.f32.mrf.mxu0
        %2868 = vmatprep.mubr.bf16.mxu0 0
        %2869 = vmatmul.mubr.bf16.gmra.mxu0 %v2670
        %v2870 = vpop.f32.mrf.mxu0
        %v2871 = vadd.f32 %v2597, %v2870
        %v2872 = vpop.f32.mrf.mxu0
        %v2873 = vpop.f32.mrf.mxu0
        %v2874 = vadd.f32 %v2597, %v2873
        %v2875 = vpop.f32.mrf.mxu0
        %2876 = vmatprep.mubr.bf16.mxu0 0
        %2877 = vmatmul.mubr.bf16.gmra.mxu0 %v2672
        %v2878 = vpop.f32.mrf.mxu0
        %v2879 = vadd.f32 %v2597, %v2878
        %v2880 = vpop.f32.mrf.mxu0
        %v2881 = vpop.f32.mrf.mxu0
        %v2882 = vadd.f32 %v2597, %v2881
        %v2883 = vpop.f32.mrf.mxu0
        %2884 = vmatprep.mubr.bf16.mxu0 0
        %2885 = vmatmul.mubr.bf16.gmra.mxu0 %v2674
        %v2886 = vpop.f32.mrf.mxu0
        %v2887 = vadd.f32 %v2597, %v2886
        %v2888 = vpop.f32.mrf.mxu0
        %v2889 = vpop.f32.mrf.mxu0
        %v2890 = vadd.f32 %v2597, %v2889
        %v2891 = vpop.f32.mrf.mxu0
        %2892 = vmatprep.mubr.bf16.mxu0 0
        %2893 = vmatmul.mubr.bf16.gmra.mxu0 %v2676
        %v2894 = vpop.f32.mrf.mxu0
        %v2895 = vadd.f32 %v2597, %v2894
        %v2896 = vpop.f32.mrf.mxu0
        %v2897 = vpop.f32.mrf.mxu0
        %v2898 = vadd.f32 %v2597, %v2897
        %v2899 = vpop.f32.mrf.mxu0
        %2900 = vmatprep.mubr.bf16.mxu0 0
        %2901 = vmatmul.mubr.bf16.gmra.mxu0 %v2678
        %v2902 = vpop.f32.mrf.mxu0
        %v2903 = vadd.f32 %v2597, %v2902
        %v2904 = vpop.f32.mrf.mxu0
        %v2905 = vpop.f32.mrf.mxu0
        %v2906 = vadd.f32 %v2597, %v2905
        %v2907 = vpop.f32.mrf.mxu0
        %2908 = vmatprep.mubr.bf16.mxu0 0
        %2909 = vmatmul.mubr.bf16.gmra.mxu0 %v2680
        %v2910 = vpop.f32.mrf.mxu0
        %v2911 = vadd.f32 %v2597, %v2910
        %v2912 = vpop.f32.mrf.mxu0
        %v2913 = vpop.f32.mrf.mxu0
        %v2914 = vadd.f32 %v2597, %v2913
        %v2915 = vpop.f32.mrf.mxu0
        %2916 = vmatprep.mubr.bf16.mxu0 0
        %2917 = vmatmul.mubr.bf16.gmra.mxu0 %v2682
        %v2918 = vpop.f32.mrf.mxu0
        %v2919 = vadd.f32 %v2597, %v2918
        %v2920 = vpop.f32.mrf.mxu0
        %v2921 = vpop.f32.mrf.mxu0
        %v2922 = vadd.f32 %v2597, %v2921
        %v2923 = vpop.f32.mrf.mxu0
        %2924 = vmatprep.mubr.bf16.mxu0 0
        %2925 = vmatmul.mubr.bf16.gmra.mxu0 %v2684
        %v2926 = vpop.f32.mrf.mxu0
        %v2927 = vadd.f32 %v2597, %v2926
        %v2928 = vpop.f32.mrf.mxu0
        %v2929 = vpop.f32.mrf.mxu0
        %v2930 = vadd.f32 %v2597, %v2929
        %v2931 = vpop.f32.mrf.mxu0
        %2932 = vmatprep.mubr.bf16.mxu0 0
        %2933 = vmatmul.mubr.bf16.gmra.mxu0 %v2686
        %v2934 = vpop.f32.mrf.mxu0
        %v2935 = vadd.f32 %v2597, %v2934
        %v2936 = vpop.f32.mrf.mxu0
        %v2937 = vpop.f32.mrf.mxu0
        %v2938 = vadd.f32 %v2597, %v2937
        %v2939 = vpop.f32.mrf.mxu0
        %2940 = vmatprep.mubr.bf16.mxu0 0
        %2941 = vmatmul.mubr.bf16.gmra.mxu0 %v2688
        %v2942 = vpop.f32.mrf.mxu0
        %v2943 = vadd.f32 %v2597, %v2942
        %v2944 = vpop.f32.mrf.mxu0
        %v2945 = vpop.f32.mrf.mxu0
        %v2946 = vadd.f32 %v2597, %v2945
        %v2947 = vpop.f32.mrf.mxu0
        %2948 = vmatprep.mubr.bf16.mxu0 0
        %2949 = vmatmul.mubr.bf16.gmra.mxu0 %v2690
        %v2950 = vpop.f32.mrf.mxu0
        %v2951 = vadd.f32 %v2597, %v2950
        %v2952 = vpop.f32.mrf.mxu0
        %v2953 = vpop.f32.mrf.mxu0
        %v2954 = vadd.f32 %v2597, %v2953
        %v2955 = vpop.f32.mrf.mxu0
        %2956 = vmatprep.mubr.bf16.mxu0 0
        %2957 = vmatmul.mubr.bf16.gmra.mxu0 %v2692
        %v2958 = vpop.f32.mrf.mxu0
        %v2959 = vadd.f32 %v2597, %v2958
        %v2960 = vpop.f32.mrf.mxu0
        %v2961 = vpop.f32.mrf.mxu0
        %v2962 = vadd.f32 %v2597, %v2961
        %v2963 = vpop.f32.mrf.mxu0
        %2964 = vmatprep.mubr.bf16.mxu0 0
        %2965 = vmatmul.mubr.bf16.gmra.mxu0 %v2694
        %v2966 = vpop.f32.mrf.mxu0
        %v2967 = vadd.f32 %v2597, %v2966
        %v2968 = vpop.f32.mrf.mxu0
        %v2969 = vpop.f32.mrf.mxu0
        %v2970 = vadd.f32 %v2597, %v2969
        %v2971 = vpop.f32.mrf.mxu0
        %2972 = vmatprep.mubr.bf16.mxu0 0
        %2973 = vmatmul.mubr.bf16.gmra.mxu0 %v2696
        %v2974 = vpop.f32.mrf.mxu0
        %v2975 = vadd.f32 %v2597, %v2974
        %v2976 = vpop.f32.mrf.mxu0
        %v2977 = vpop.f32.mrf.mxu0
        %v2978 = vadd.f32 %v2597, %v2977
        %v2979 = vpop.f32.mrf.mxu0
        %2980 = vmatprep.mubr.bf16.mxu0 0
        %2981 = vmatmul.mubr.bf16.gmra.mxu0 %v2698
        %v2982 = vpop.f32.mrf.mxu0
        %v2983 = vadd.f32 %v2597, %v2982
        %v2984 = vpop.f32.mrf.mxu0
        %v2985 = vpop.f32.mrf.mxu0
        %v2986 = vadd.f32 %v2597, %v2985
        %v2987 = vpop.f32.mrf.mxu0
        %2988 = vdwg.mxu0
        %v2989 = vmax.f32 %v2735, 0.0
        %v2990 = vmax.f32 %v2738, 0.0
        %v2991 = vmax.f32 %v2743, 0.0
        %v2992 = vmax.f32 %v2746, 0.0
        %v2993 = vmax.f32 %v2751, 0.0
        %v2994 = vmax.f32 %v2754, 0.0
        %v2995 = vmax.f32 %v2759, 0.0
        %v2996 = vmax.f32 %v2762, 0.0
        %v2997 = vmax.f32 %v2767, 0.0
        %v2998 = vmax.f32 %v2770, 0.0
        %v2999 = vmax.f32 %v2775, 0.0
        %v3000 = vmax.f32 %v2778, 0.0
        %v3001 = vmax.f32 %v2783, 0.0
        %v3002 = vmax.f32 %v2786, 0.0
        %v3003 = vmax.f32 %v2791, 0.0
        %v3004 = vmax.f32 %v2794, 0.0
        %v3005 = vmax.f32 %v2799, 0.0
        %v3006 = vmax.f32 %v2802, 0.0
        %v3007 = vmax.f32 %v2807, 0.0
        %v3008 = vmax.f32 %v2810, 0.0
        %v3009 = vmax.f32 %v2815, 0.0
        %v3010 = vmax.f32 %v2818, 0.0
        %v3011 = vmax.f32 %v2823, 0.0
        %v3012 = vmax.f32 %v2826, 0.0
        %v3013 = vmax.f32 %v2831, 0.0
        %v3014 = vmax.f32 %v2834, 0.0
        %v3015 = vmax.f32 %v2839, 0.0
        %v3016 = vmax.f32 %v2842, 0.0
        %v3017 = vmax.f32 %v2847, 0.0
        %v3018 = vmax.f32 %v2850, 0.0
        %v3019 = vmax.f32 %v2855, 0.0
        %v3020 = vmax.f32 %v2858, 0.0
        %v3021 = vmax.f32 %v2863, 0.0
        %v3022 = vmax.f32 %v2866, 0.0
        %v3023 = vmax.f32 %v2871, 0.0
        %v3024 = vmax.f32 %v2874, 0.0
        %v3025 = vmax.f32 %v2879, 0.0
        %v3026 = vmax.f32 %v2882, 0.0
        %v3027 = vmax.f32 %v2887, 0.0
        %v3028 = vmax.f32 %v2890, 0.0
        %v3029 = vmax.f32 %v2895, 0.0
        %v3030 = vmax.f32 %v2898, 0.0
        %v3031 = vmax.f32 %v2903, 0.0
        %v3032 = vmax.f32 %v2906, 0.0
        %v3033 = vmax.f32 %v2911, 0.0
        %v3034 = vmax.f32 %v2914, 0.0
        %v3035 = vmax.f32 %v2919, 0.0
        %v3036 = vmax.f32 %v2922, 0.0
        %v3037 = vmax.f32 %v2927, 0.0
        %v3038 = vmax.f32 %v2930, 0.0
        %v3039 = vmax.f32 %v2935, 0.0
        %v3040 = vmax.f32 %v2938, 0.0
        %v3041 = vmax.f32 %v2943, 0.0
        %v3042 = vmax.f32 %v2946, 0.0
        %v3043 = vmax.f32 %v2951, 0.0
        %v3044 = vmax.f32 %v2954, 0.0
        %v3045 = vmax.f32 %v2959, 0.0
        %v3046 = vmax.f32 %v2962, 0.0
        %v3047 = vmax.f32 %v2967, 0.0
        %v3048 = vmax.f32 %v2970, 0.0
        %v3049 = vmax.f32 %v2975, 0.0
        %v3050 = vmax.f32 %v2978, 0.0
        %v3051 = vmax.f32 %v2983, 0.0
        %v3052 = vmax.f32 %v2986, 0.0
        %v3053 = vpack.c.bf16 %v2990, %v2989
        %v3054 = vpack.c.bf16 %v2992, %v2991
        %v3055 = vpack.c.bf16 %v2994, %v2993
        %v3056 = vpack.c.bf16 %v2996, %v2995
        %v3057 = vpack.c.bf16 %v2998, %v2997
        %v3058 = vpack.c.bf16 %v3000, %v2999
        %v3059 = vpack.c.bf16 %v3002, %v3001
        %v3060 = vpack.c.bf16 %v3004, %v3003
        %v3061 = vpack.c.bf16 %v3006, %v3005
        %v3062 = vpack.c.bf16 %v3008, %v3007
        %v3063 = vpack.c.bf16 %v3010, %v3009
        %v3064 = vpack.c.bf16 %v3012, %v3011
        %v3065 = vpack.c.bf16 %v3014, %v3013
        %v3066 = vpack.c.bf16 %v3016, %v3015
        %v3067 = vpack.c.bf16 %v3018, %v3017
        %v3068 = vpack.c.bf16 %v3020, %v3019
        %v3069 = vpack.c.bf16 %v3022, %v3021
        %v3070 = vpack.c.bf16 %v3024, %v3023
        %v3071 = vpack.c.bf16 %v3026, %v3025
        %v3072 = vpack.c.bf16 %v3028, %v3027
        %v3073 = vpack.c.bf16 %v3030, %v3029
        %v3074 = vpack.c.bf16 %v3032, %v3031
        %v3075 = vpack.c.bf16 %v3034, %v3033
        %v3076 = vpack.c.bf16 %v3036, %v3035
        %v3077 = vpack.c.bf16 %v3038, %v3037
        %v3078 = vpack.c.bf16 %v3040, %v3039
        %v3079 = vpack.c.bf16 %v3042, %v3041
        %v3080 = vpack.c.bf16 %v3044, %v3043
        %v3081 = vpack.c.bf16 %v3046, %v3045
        %v3082 = vpack.c.bf16 %v3048, %v3047
        %v3083 = vpack.c.bf16 %v3050, %v3049
        %v3084 = vpack.c.bf16 %v3052, %v3051
        %v3085 = vld [vmem:[%s5] sm:$0xf]
        %v3086 = vld [vmem:[%s5 + $0x4] sm:$0xf]
        %v3087 = vld [vmem:[%s5 + $0x8] sm:$0xf]
        %v3088 = vld [vmem:[%s5 + $0xc] sm:$0xf]
        %v3089 = vld [vmem:[%s6] sm:$0x1]
        %v3091 = vlaneseq
        %v3092 = vshrl.u32 %v3091, 7
        %v3093 = vsub.s32 0, %v3092
        %v3094 = vrot.slane %v3089, %v3093
        %v3100 = vunpack.c.l.b16 %v3085
        %v3101 = vunpack.c.l.b16 %v3086
        %v3102 = vunpack.c.l.b16 %v3087
        %v3103 = vunpack.c.l.b16 %v3088
        %v3104 = vpack.c.b16 %v3101, %v3100
        %v3105 = vpack.c.b16 %v3103, %v3102
        %v3109 = vsel %vm2418, %v3053, 0
        %v3112 = vsel %vm2418, %v3054, 0
        %v3115 = vsel %vm2418, %v3055, 0
        %v3118 = vsel %vm2418, %v3056, 0
        %v3121 = vsel %vm2418, %v3057, 0
        %v3124 = vsel %vm2418, %v3058, 0
        %v3127 = vsel %vm2418, %v3059, 0
        %v3130 = vsel %vm2418, %v3060, 0
        %v3133 = vsel %vm2418, %v3061, 0
        %v3136 = vsel %vm2418, %v3062, 0
        %v3139 = vsel %vm2418, %v3063, 0
        %v3142 = vsel %vm2418, %v3064, 0
        %v3145 = vsel %vm2418, %v3065, 0
        %v3148 = vsel %vm2418, %v3066, 0
        %v3151 = vsel %vm2418, %v3067, 0
        %v3154 = vsel %vm2418, %v3068, 0
        %v3157 = vsel %vm2418, %v3069, 0
        %v3160 = vsel %vm2418, %v3070, 0
        %v3163 = vsel %vm2418, %v3071, 0
        %v3166 = vsel %vm2418, %v3072, 0
        %v3169 = vsel %vm2418, %v3073, 0
        %v3172 = vsel %vm2418, %v3074, 0
        %v3175 = vsel %vm2418, %v3075, 0
        %v3178 = vsel %vm2418, %v3076, 0
        %v3181 = vsel %vm2418, %v3077, 0
        %v3184 = vsel %vm2418, %v3078, 0
        %v3187 = vsel %vm2418, %v3079, 0
        %v3190 = vsel %vm2418, %v3080, 0
        %v3193 = vsel %vm2418, %v3081, 0
        %v3196 = vsel %vm2418, %v3082, 0
        %v3199 = vsel %vm2418, %v3083, 0
        %v3202 = vsel %vm2418, %v3084, 0
        %3204 = vmatprep.subr.bf16.mxu0 0
        %3205 = vmatpush1.bf16.msra.mxu0 0
        %3206 = vmatprep.subr.bf16.mxu0 0
        %3207 = vmatpush1.bf16.msra.mxu0 0
        %3208 = vmatprep.subr.bf16.mxu0 0
        %3209 = vmatpush1.bf16.msra.mxu0 0
        %3210 = vmatprep.subr.bf16.mxu0 0
        %3211 = vmatpush1.bf16.msra.mxu0 0
        %3212 = vmatprep.subr.bf16.mxu0 0
        %3213 = vmatpush1.bf16.msra.mxu0 0
        %3214 = vmatprep.subr.bf16.mxu0 0
        %3215 = vmatpush1.bf16.msra.mxu0 0
        %3216 = vmatprep.subr.bf16.mxu0 0
        %3217 = vmatpush1.bf16.msra.mxu0 %v3105
        %3218 = vmatprep.subr.bf16.mxu0 0
        %3219 = vmatpush1.bf16.msra.mxu0 %v3104
        %3220 = vmatprep.subr.bf16.mxu0 0
        %3221 = vmatpush2.bf16.msra.mxu0 0
        %3222 = vmatprep.subr.bf16.mxu0 0
        %3223 = vmatpush2.bf16.msra.mxu0 0
        %3224 = vmatprep.subr.bf16.mxu0 0
        %3225 = vmatpush2.bf16.msra.mxu0 0
        %3226 = vmatprep.subr.bf16.mxu0 0
        %3227 = vmatpush2.bf16.msra.mxu0 0
        %3228 = vmatprep.subr.bf16.mxu0 0
        %3229 = vmatpush2.bf16.msra.mxu0 0
        %3230 = vmatprep.subr.bf16.mxu0 0
        %3231 = vmatpush2.bf16.msra.mxu0 0
        %3232 = vmatprep.subr.bf16.mxu0 0
        %3233 = vmatpush2.bf16.msra.mxu0 0
        %3234 = vmatprep.subr.bf16.mxu0 0
        %3235 = vmatpush2.bf16.msra.mxu0 0
        %3236 = vmatprep.mubr.bf16.mxu0 0
        %3237 = vmatmul.mubr.bf16.gmra.mxu0 %v3109
        %v3238 = vpop.f32.mrf.mxu0
        %v3239 = vadd.f32 %v3094, %v3238
        %v3240 = vpop.f32.mrf.mxu0
        %v3241 = vpop.f32.mrf.mxu0
        %v3242 = vadd.f32 %v3094, %v3241
        %v3243 = vpop.f32.mrf.mxu0
        %3244 = vmatprep.mubr.bf16.mxu0 0
        %3245 = vmatmul.mubr.bf16.gmra.mxu0 %v3112
        %v3246 = vpop.f32.mrf.mxu0
        %v3247 = vadd.f32 %v3094, %v3246
        %v3248 = vpop.f32.mrf.mxu0
        %v3249 = vpop.f32.mrf.mxu0
        %v3250 = vadd.f32 %v3094, %v3249
        %v3251 = vpop.f32.mrf.mxu0
        %3252 = vmatprep.mubr.bf16.mxu0 0
        %3253 = vmatmul.mubr.bf16.gmra.mxu0 %v3115
        %v3254 = vpop.f32.mrf.mxu0
        %v3255 = vadd.f32 %v3094, %v3254
        %v3256 = vpop.f32.mrf.mxu0
        %v3257 = vpop.f32.mrf.mxu0
        %v3258 = vadd.f32 %v3094, %v3257
        %v3259 = vpop.f32.mrf.mxu0
        %3260 = vmatprep.mubr.bf16.mxu0 0
        %3261 = vmatmul.mubr.bf16.gmra.mxu0 %v3118
        %v3262 = vpop.f32.mrf.mxu0
        %v3263 = vadd.f32 %v3094, %v3262
        %v3264 = vpop.f32.mrf.mxu0
        %v3265 = vpop.f32.mrf.mxu0
        %v3266 = vadd.f32 %v3094, %v3265
        %v3267 = vpop.f32.mrf.mxu0
        %3268 = vmatprep.mubr.bf16.mxu0 0
        %3269 = vmatmul.mubr.bf16.gmra.mxu0 %v3121
        %v3270 = vpop.f32.mrf.mxu0
        %v3271 = vadd.f32 %v3094, %v3270
        %v3272 = vpop.f32.mrf.mxu0
        %v3273 = vpop.f32.mrf.mxu0
        %v3274 = vadd.f32 %v3094, %v3273
        %v3275 = vpop.f32.mrf.mxu0
        %3276 = vmatprep.mubr.bf16.mxu0 0
        %3277 = vmatmul.mubr.bf16.gmra.mxu0 %v3124
        %v3278 = vpop.f32.mrf.mxu0
        %v3279 = vadd.f32 %v3094, %v3278
        %v3280 = vpop.f32.mrf.mxu0
        %v3281 = vpop.f32.mrf.mxu0
        %v3282 = vadd.f32 %v3094, %v3281
        %v3283 = vpop.f32.mrf.mxu0
        %3284 = vmatprep.mubr.bf16.mxu0 0
        %3285 = vmatmul.mubr.bf16.gmra.mxu0 %v3127
        %v3286 = vpop.f32.mrf.mxu0
        %v3287 = vadd.f32 %v3094, %v3286
        %v3288 = vpop.f32.mrf.mxu0
        %v3289 = vpop.f32.mrf.mxu0
        %v3290 = vadd.f32 %v3094, %v3289
        %v3291 = vpop.f32.mrf.mxu0
        %3292 = vmatprep.mubr.bf16.mxu0 0
        %3293 = vmatmul.mubr.bf16.gmra.mxu0 %v3130
        %v3294 = vpop.f32.mrf.mxu0
        %v3295 = vadd.f32 %v3094, %v3294
        %v3296 = vpop.f32.mrf.mxu0
        %v3297 = vpop.f32.mrf.mxu0
        %v3298 = vadd.f32 %v3094, %v3297
        %v3299 = vpop.f32.mrf.mxu0
        %3300 = vmatprep.mubr.bf16.mxu0 0
        %3301 = vmatmul.mubr.bf16.gmra.mxu0 %v3133
        %v3302 = vpop.f32.mrf.mxu0
        %v3303 = vadd.f32 %v3094, %v3302
        %v3304 = vpop.f32.mrf.mxu0
        %v3305 = vpop.f32.mrf.mxu0
        %v3306 = vadd.f32 %v3094, %v3305
        %v3307 = vpop.f32.mrf.mxu0
        %3308 = vmatprep.mubr.bf16.mxu0 0
        %3309 = vmatmul.mubr.bf16.gmra.mxu0 %v3136
        %v3310 = vpop.f32.mrf.mxu0
        %v3311 = vadd.f32 %v3094, %v3310
        %v3312 = vpop.f32.mrf.mxu0
        %v3313 = vpop.f32.mrf.mxu0
        %v3314 = vadd.f32 %v3094, %v3313
        %v3315 = vpop.f32.mrf.mxu0
        %3316 = vmatprep.mubr.bf16.mxu0 0
        %3317 = vmatmul.mubr.bf16.gmra.mxu0 %v3139
        %v3318 = vpop.f32.mrf.mxu0
        %v3319 = vadd.f32 %v3094, %v3318
        %v3320 = vpop.f32.mrf.mxu0
        %v3321 = vpop.f32.mrf.mxu0
        %v3322 = vadd.f32 %v3094, %v3321
        %v3323 = vpop.f32.mrf.mxu0
        %3324 = vmatprep.mubr.bf16.mxu0 0
        %3325 = vmatmul.mubr.bf16.gmra.mxu0 %v3142
        %v3326 = vpop.f32.mrf.mxu0
        %v3327 = vadd.f32 %v3094, %v3326
        %v3328 = vpop.f32.mrf.mxu0
        %v3329 = vpop.f32.mrf.mxu0
        %v3330 = vadd.f32 %v3094, %v3329
        %v3331 = vpop.f32.mrf.mxu0
        %3332 = vmatprep.mubr.bf16.mxu0 0
        %3333 = vmatmul.mubr.bf16.gmra.mxu0 %v3145
        %v3334 = vpop.f32.mrf.mxu0
        %v3335 = vadd.f32 %v3094, %v3334
        %v3336 = vpop.f32.mrf.mxu0
        %v3337 = vpop.f32.mrf.mxu0
        %v3338 = vadd.f32 %v3094, %v3337
        %v3339 = vpop.f32.mrf.mxu0
        %3340 = vmatprep.mubr.bf16.mxu0 0
        %3341 = vmatmul.mubr.bf16.gmra.mxu0 %v3148
        %v3342 = vpop.f32.mrf.mxu0
        %v3343 = vadd.f32 %v3094, %v3342
        %v3344 = vpop.f32.mrf.mxu0
        %v3345 = vpop.f32.mrf.mxu0
        %v3346 = vadd.f32 %v3094, %v3345
        %v3347 = vpop.f32.mrf.mxu0
        %3348 = vmatprep.mubr.bf16.mxu0 0
        %3349 = vmatmul.mubr.bf16.gmra.mxu0 %v3151
        %v3350 = vpop.f32.mrf.mxu0
        %v3351 = vadd.f32 %v3094, %v3350
        %v3352 = vpop.f32.mrf.mxu0
        %v3353 = vpop.f32.mrf.mxu0
        %v3354 = vadd.f32 %v3094, %v3353
        %v3355 = vpop.f32.mrf.mxu0
        %3356 = vmatprep.mubr.bf16.mxu0 0
        %3357 = vmatmul.mubr.bf16.gmra.mxu0 %v3154
        %v3358 = vpop.f32.mrf.mxu0
        %v3359 = vadd.f32 %v3094, %v3358
        %v3360 = vpop.f32.mrf.mxu0
        %v3361 = vpop.f32.mrf.mxu0
        %v3362 = vadd.f32 %v3094, %v3361
        %v3363 = vpop.f32.mrf.mxu0
        %3364 = vmatprep.mubr.bf16.mxu0 0
        %3365 = vmatmul.mubr.bf16.gmra.mxu0 %v3157
        %v3366 = vpop.f32.mrf.mxu0
        %v3367 = vadd.f32 %v3094, %v3366
        %v3368 = vpop.f32.mrf.mxu0
        %v3369 = vpop.f32.mrf.mxu0
        %v3370 = vadd.f32 %v3094, %v3369
        %v3371 = vpop.f32.mrf.mxu0
        %3372 = vmatprep.mubr.bf16.mxu0 0
        %3373 = vmatmul.mubr.bf16.gmra.mxu0 %v3160
        %v3374 = vpop.f32.mrf.mxu0
        %v3375 = vadd.f32 %v3094, %v3374
        %v3376 = vpop.f32.mrf.mxu0
        %v3377 = vpop.f32.mrf.mxu0
        %v3378 = vadd.f32 %v3094, %v3377
        %v3379 = vpop.f32.mrf.mxu0
        %3380 = vmatprep.mubr.bf16.mxu0 0
        %3381 = vmatmul.mubr.bf16.gmra.mxu0 %v3163
        %v3382 = vpop.f32.mrf.mxu0
        %v3383 = vadd.f32 %v3094, %v3382
        %v3384 = vpop.f32.mrf.mxu0
        %v3385 = vpop.f32.mrf.mxu0
        %v3386 = vadd.f32 %v3094, %v3385
        %v3387 = vpop.f32.mrf.mxu0
        %3388 = vmatprep.mubr.bf16.mxu0 0
        %3389 = vmatmul.mubr.bf16.gmra.mxu0 %v3166
        %v3390 = vpop.f32.mrf.mxu0
        %v3391 = vadd.f32 %v3094, %v3390
        %v3392 = vpop.f32.mrf.mxu0
        %v3393 = vpop.f32.mrf.mxu0
        %v3394 = vadd.f32 %v3094, %v3393
        %v3395 = vpop.f32.mrf.mxu0
        %3396 = vmatprep.mubr.bf16.mxu0 0
        %3397 = vmatmul.mubr.bf16.gmra.mxu0 %v3169
        %v3398 = vpop.f32.mrf.mxu0
        %v3399 = vadd.f32 %v3094, %v3398
        %v3400 = vpop.f32.mrf.mxu0
        %v3401 = vpop.f32.mrf.mxu0
        %v3402 = vadd.f32 %v3094, %v3401
        %v3403 = vpop.f32.mrf.mxu0
        %3404 = vmatprep.mubr.bf16.mxu0 0
        %3405 = vmatmul.mubr.bf16.gmra.mxu0 %v3172
        %v3406 = vpop.f32.mrf.mxu0
        %v3407 = vadd.f32 %v3094, %v3406
        %v3408 = vpop.f32.mrf.mxu0
        %v3409 = vpop.f32.mrf.mxu0
        %v3410 = vadd.f32 %v3094, %v3409
        %v3411 = vpop.f32.mrf.mxu0
        %3412 = vmatprep.mubr.bf16.mxu0 0
        %3413 = vmatmul.mubr.bf16.gmra.mxu0 %v3175
        %v3414 = vpop.f32.mrf.mxu0
        %v3415 = vadd.f32 %v3094, %v3414
        %v3416 = vpop.f32.mrf.mxu0
        %v3417 = vpop.f32.mrf.mxu0
        %v3418 = vadd.f32 %v3094, %v3417
        %v3419 = vpop.f32.mrf.mxu0
        %3420 = vmatprep.mubr.bf16.mxu0 0
        %3421 = vmatmul.mubr.bf16.gmra.mxu0 %v3178
        %v3422 = vpop.f32.mrf.mxu0
        %v3423 = vadd.f32 %v3094, %v3422
        %v3424 = vpop.f32.mrf.mxu0
        %v3425 = vpop.f32.mrf.mxu0
        %v3426 = vadd.f32 %v3094, %v3425
        %v3427 = vpop.f32.mrf.mxu0
        %3428 = vmatprep.mubr.bf16.mxu0 0
        %3429 = vmatmul.mubr.bf16.gmra.mxu0 %v3181
        %v3430 = vpop.f32.mrf.mxu0
        %v3431 = vadd.f32 %v3094, %v3430
        %v3432 = vpop.f32.mrf.mxu0
        %v3433 = vpop.f32.mrf.mxu0
        %v3434 = vadd.f32 %v3094, %v3433
        %v3435 = vpop.f32.mrf.mxu0
        %3436 = vmatprep.mubr.bf16.mxu0 0
        %3437 = vmatmul.mubr.bf16.gmra.mxu0 %v3184
        %v3438 = vpop.f32.mrf.mxu0
        %v3439 = vadd.f32 %v3094, %v3438
        %v3440 = vpop.f32.mrf.mxu0
        %v3441 = vpop.f32.mrf.mxu0
        %v3442 = vadd.f32 %v3094, %v3441
        %v3443 = vpop.f32.mrf.mxu0
        %3444 = vmatprep.mubr.bf16.mxu0 0
        %3445 = vmatmul.mubr.bf16.gmra.mxu0 %v3187
        %v3446 = vpop.f32.mrf.mxu0
        %v3447 = vadd.f32 %v3094, %v3446
        %v3448 = vpop.f32.mrf.mxu0
        %v3449 = vpop.f32.mrf.mxu0
        %v3450 = vadd.f32 %v3094, %v3449
        %v3451 = vpop.f32.mrf.mxu0
        %3452 = vmatprep.mubr.bf16.mxu0 0
        %3453 = vmatmul.mubr.bf16.gmra.mxu0 %v3190
        %v3454 = vpop.f32.mrf.mxu0
        %v3455 = vadd.f32 %v3094, %v3454
        %v3456 = vpop.f32.mrf.mxu0
        %v3457 = vpop.f32.mrf.mxu0
        %v3458 = vadd.f32 %v3094, %v3457
        %v3459 = vpop.f32.mrf.mxu0
        %3460 = vmatprep.mubr.bf16.mxu0 0
        %3461 = vmatmul.mubr.bf16.gmra.mxu0 %v3193
        %v3462 = vpop.f32.mrf.mxu0
        %v3463 = vadd.f32 %v3094, %v3462
        %v3464 = vpop.f32.mrf.mxu0
        %v3465 = vpop.f32.mrf.mxu0
        %v3466 = vadd.f32 %v3094, %v3465
        %v3467 = vpop.f32.mrf.mxu0
        %3468 = vmatprep.mubr.bf16.mxu0 0
        %3469 = vmatmul.mubr.bf16.gmra.mxu0 %v3196
        %v3470 = vpop.f32.mrf.mxu0
        %v3471 = vadd.f32 %v3094, %v3470
        %v3472 = vpop.f32.mrf.mxu0
        %v3473 = vpop.f32.mrf.mxu0
        %v3474 = vadd.f32 %v3094, %v3473
        %v3475 = vpop.f32.mrf.mxu0
        %3476 = vmatprep.mubr.bf16.mxu0 0
        %3477 = vmatmul.mubr.bf16.gmra.mxu0 %v3199
        %v3478 = vpop.f32.mrf.mxu0
        %v3479 = vadd.f32 %v3094, %v3478
        %v3480 = vpop.f32.mrf.mxu0
        %v3481 = vpop.f32.mrf.mxu0
        %v3482 = vadd.f32 %v3094, %v3481
        %v3483 = vpop.f32.mrf.mxu0
        %3484 = vmatprep.mubr.bf16.mxu0 0
        %3485 = vmatmul.mubr.bf16.gmra.mxu0 %v3202
        %v3486 = vpop.f32.mrf.mxu0
        %v3487 = vadd.f32 %v3094, %v3486
        %v3488 = vpop.f32.mrf.mxu0
        %v3489 = vpop.f32.mrf.mxu0
        %v3490 = vadd.f32 %v3094, %v3489
        %v3491 = vpop.f32.mrf.mxu0
        %3492 = vdwg.mxu0
        %v3493 = vmax.f32 %v3239, 0.0
        %v3494 = vmax.f32 %v3242, 0.0
        %v3495 = vmax.f32 %v3247, 0.0
        %v3496 = vmax.f32 %v3250, 0.0
        %v3497 = vmax.f32 %v3255, 0.0
        %v3498 = vmax.f32 %v3258, 0.0
        %v3499 = vmax.f32 %v3263, 0.0
        %v3500 = vmax.f32 %v3266, 0.0
        %v3501 = vmax.f32 %v3271, 0.0
        %v3502 = vmax.f32 %v3274, 0.0
        %v3503 = vmax.f32 %v3279, 0.0
        %v3504 = vmax.f32 %v3282, 0.0
        %v3505 = vmax.f32 %v3287, 0.0
        %v3506 = vmax.f32 %v3290, 0.0
        %v3507 = vmax.f32 %v3295, 0.0
        %v3508 = vmax.f32 %v3298, 0.0
        %v3509 = vmax.f32 %v3303, 0.0
        %v3510 = vmax.f32 %v3306, 0.0
        %v3511 = vmax.f32 %v3311, 0.0
        %v3512 = vmax.f32 %v3314, 0.0
        %v3513 = vmax.f32 %v3319, 0.0
        %v3514 = vmax.f32 %v3322, 0.0
        %v3515 = vmax.f32 %v3327, 0.0
        %v3516 = vmax.f32 %v3330, 0.0
        %v3517 = vmax.f32 %v3335, 0.0
        %v3518 = vmax.f32 %v3338, 0.0
        %v3519 = vmax.f32 %v3343, 0.0
        %v3520 = vmax.f32 %v3346, 0.0
        %v3521 = vmax.f32 %v3351, 0.0
        %v3522 = vmax.f32 %v3354, 0.0
        %v3523 = vmax.f32 %v3359, 0.0
        %v3524 = vmax.f32 %v3362, 0.0
        %v3525 = vmax.f32 %v3367, 0.0
        %v3526 = vmax.f32 %v3370, 0.0
        %v3527 = vmax.f32 %v3375, 0.0
        %v3528 = vmax.f32 %v3378, 0.0
        %v3529 = vmax.f32 %v3383, 0.0
        %v3530 = vmax.f32 %v3386, 0.0
        %v3531 = vmax.f32 %v3391, 0.0
        %v3532 = vmax.f32 %v3394, 0.0
        %v3533 = vmax.f32 %v3399, 0.0
        %v3534 = vmax.f32 %v3402, 0.0
        %v3535 = vmax.f32 %v3407, 0.0
        %v3536 = vmax.f32 %v3410, 0.0
        %v3537 = vmax.f32 %v3415, 0.0
        %v3538 = vmax.f32 %v3418, 0.0
        %v3539 = vmax.f32 %v3423, 0.0
        %v3540 = vmax.f32 %v3426, 0.0
        %v3541 = vmax.f32 %v3431, 0.0
        %v3542 = vmax.f32 %v3434, 0.0
        %v3543 = vmax.f32 %v3439, 0.0
        %v3544 = vmax.f32 %v3442, 0.0
        %v3545 = vmax.f32 %v3447, 0.0
        %v3546 = vmax.f32 %v3450, 0.0
        %v3547 = vmax.f32 %v3455, 0.0
        %v3548 = vmax.f32 %v3458, 0.0
        %v3549 = vmax.f32 %v3463, 0.0
        %v3550 = vmax.f32 %v3466, 0.0
        %v3551 = vmax.f32 %v3471, 0.0
        %v3552 = vmax.f32 %v3474, 0.0
        %v3553 = vmax.f32 %v3479, 0.0
        %v3554 = vmax.f32 %v3482, 0.0
        %v3555 = vmax.f32 %v3487, 0.0
        %v3556 = vmax.f32 %v3490, 0.0
        %v3557 = vpack.c.bf16 %v3494, %v3493
        %v3558 = vpack.c.bf16 %v3496, %v3495
        %v3559 = vpack.c.bf16 %v3498, %v3497
        %v3560 = vpack.c.bf16 %v3500, %v3499
        %v3561 = vpack.c.bf16 %v3502, %v3501
        %v3562 = vpack.c.bf16 %v3504, %v3503
        %v3563 = vpack.c.bf16 %v3506, %v3505
        %v3564 = vpack.c.bf16 %v3508, %v3507
        %v3565 = vpack.c.bf16 %v3510, %v3509
        %v3566 = vpack.c.bf16 %v3512, %v3511
        %v3567 = vpack.c.bf16 %v3514, %v3513
        %v3568 = vpack.c.bf16 %v3516, %v3515
        %v3569 = vpack.c.bf16 %v3518, %v3517
        %v3570 = vpack.c.bf16 %v3520, %v3519
        %v3571 = vpack.c.bf16 %v3522, %v3521
        %v3572 = vpack.c.bf16 %v3524, %v3523
        %v3573 = vpack.c.bf16 %v3526, %v3525
        %v3574 = vpack.c.bf16 %v3528, %v3527
        %v3575 = vpack.c.bf16 %v3530, %v3529
        %v3576 = vpack.c.bf16 %v3532, %v3531
        %v3577 = vpack.c.bf16 %v3534, %v3533
        %v3578 = vpack.c.bf16 %v3536, %v3535
        %v3579 = vpack.c.bf16 %v3538, %v3537
        %v3580 = vpack.c.bf16 %v3540, %v3539
        %v3581 = vpack.c.bf16 %v3542, %v3541
        %v3582 = vpack.c.bf16 %v3544, %v3543
        %v3583 = vpack.c.bf16 %v3546, %v3545
        %v3584 = vpack.c.bf16 %v3548, %v3547
        %v3585 = vpack.c.bf16 %v3550, %v3549
        %v3586 = vpack.c.bf16 %v3552, %v3551
        %v3587 = vpack.c.bf16 %v3554, %v3553
        %v3588 = vpack.c.bf16 %v3556, %v3555
        %v3589 = vld [vmem:[%s7] sm:$0xf]
        %v3590 = vld [vmem:[%s7 + $0x4] sm:$0xf]
        %v3591 = vld [vmem:[%s8] sm:$0x1]
        %v3593 = vlaneseq
        %v3594 = vshrl.u32 %v3593, 7
        %v3595 = vsub.s32 0, %v3594
        %v3596 = vrot.slane %v3591, %v3595
        %v3600 = vunpack.c.l.b16 %v3589
        %v3601 = vunpack.c.l.b16 %v3590
        %v3602 = vpack.c.b16 %v3601, %v3600
        %vm3604 = vcmask 130048
        %v3606 = vsel %vm3604, %v3557, 0
        %v3609 = vsel %vm3604, %v3558, 0
        %v3612 = vsel %vm3604, %v3559, 0
        %v3615 = vsel %vm3604, %v3560, 0
        %v3618 = vsel %vm3604, %v3561, 0
        %v3621 = vsel %vm3604, %v3562, 0
        %v3624 = vsel %vm3604, %v3563, 0
        %v3627 = vsel %vm3604, %v3564, 0
        %v3630 = vsel %vm3604, %v3565, 0
        %v3633 = vsel %vm3604, %v3566, 0
        %v3636 = vsel %vm3604, %v3567, 0
        %v3639 = vsel %vm3604, %v3568, 0
        %v3642 = vsel %vm3604, %v3569, 0
        %v3645 = vsel %vm3604, %v3570, 0
        %v3648 = vsel %vm3604, %v3571, 0
        %v3651 = vsel %vm3604, %v3572, 0
        %v3654 = vsel %vm3604, %v3573, 0
        %v3657 = vsel %vm3604, %v3574, 0
        %v3660 = vsel %vm3604, %v3575, 0
        %v3663 = vsel %vm3604, %v3576, 0
        %v3666 = vsel %vm3604, %v3577, 0
        %v3669 = vsel %vm3604, %v3578, 0
        %v3672 = vsel %vm3604, %v3579, 0
        %v3675 = vsel %vm3604, %v3580, 0
        %v3678 = vsel %vm3604, %v3581, 0
        %v3681 = vsel %vm3604, %v3582, 0
        %v3684 = vsel %vm3604, %v3583, 0
        %v3687 = vsel %vm3604, %v3584, 0
        %v3690 = vsel %vm3604, %v3585, 0
        %v3693 = vsel %vm3604, %v3586, 0
        %v3696 = vsel %vm3604, %v3587, 0
        %v3699 = vsel %vm3604, %v3588, 0
        %3701 = vmatprep.subr.bf16.mxu0 0
        %3702 = vmatpush1.bf16.msra.mxu0 0
        %3703 = vmatprep.subr.bf16.mxu0 0
        %3704 = vmatpush1.bf16.msra.mxu0 0
        %3705 = vmatprep.subr.bf16.mxu0 0
        %3706 = vmatpush1.bf16.msra.mxu0 0
        %3707 = vmatprep.subr.bf16.mxu0 0
        %3708 = vmatpush1.bf16.msra.mxu0 0
        %3709 = vmatprep.subr.bf16.mxu0 0
        %3710 = vmatpush1.bf16.msra.mxu0 0
        %3711 = vmatprep.subr.bf16.mxu0 0
        %3712 = vmatpush1.bf16.msra.mxu0 0
        %3713 = vmatprep.subr.bf16.mxu0 0
        %3714 = vmatpush1.bf16.msra.mxu0 0
        %3715 = vmatprep.subr.bf16.mxu0 0
        %3716 = vmatpush1.bf16.msra.mxu0 %v3602
        %3717 = vmatprep.subr.bf16.mxu0 0
        %3718 = vmatpush2.bf16.msra.mxu0 0
        %3719 = vmatprep.subr.bf16.mxu0 0
        %3720 = vmatpush2.bf16.msra.mxu0 0
        %3721 = vmatprep.subr.bf16.mxu0 0
        %3722 = vmatpush2.bf16.msra.mxu0 0
        %3723 = vmatprep.subr.bf16.mxu0 0
        %3724 = vmatpush2.bf16.msra.mxu0 0
        %3725 = vmatprep.subr.bf16.mxu0 0
        %3726 = vmatpush2.bf16.msra.mxu0 0
        %3727 = vmatprep.subr.bf16.mxu0 0
        %3728 = vmatpush2.bf16.msra.mxu0 0
        %3729 = vmatprep.subr.bf16.mxu0 0
        %3730 = vmatpush2.bf16.msra.mxu0 0
        %3731 = vmatprep.subr.bf16.mxu0 0
        %3732 = vmatpush2.bf16.msra.mxu0 0
        %3733 = vmatprep.mubr.bf16.mxu0 0
        %3734 = vmatmul.mubr.bf16.gmra.mxu0 %v3606
        %v3735 = vpop.f32.mrf.mxu0
        %v3736 = vadd.f32 %v3596, %v3735
        %v3737 = vpop.f32.mrf.mxu0
        %v3738 = vpop.f32.mrf.mxu0
        %v3739 = vadd.f32 %v3596, %v3738
        %v3740 = vpop.f32.mrf.mxu0
        %3741 = vmatprep.mubr.bf16.mxu0 0
        %3742 = vmatmul.mubr.bf16.gmra.mxu0 %v3609
        %v3743 = vpop.f32.mrf.mxu0
        %v3744 = vadd.f32 %v3596, %v3743
        %v3745 = vpop.f32.mrf.mxu0
        %v3746 = vpop.f32.mrf.mxu0
        %v3747 = vadd.f32 %v3596, %v3746
        %v3748 = vpop.f32.mrf.mxu0
        %3749 = vmatprep.mubr.bf16.mxu0 0
        %3750 = vmatmul.mubr.bf16.gmra.mxu0 %v3612
        %v3751 = vpop.f32.mrf.mxu0
        %v3752 = vadd.f32 %v3596, %v3751
        %v3753 = vpop.f32.mrf.mxu0
        %v3754 = vpop.f32.mrf.mxu0
        %v3755 = vadd.f32 %v3596, %v3754
        %v3756 = vpop.f32.mrf.mxu0
        %3757 = vmatprep.mubr.bf16.mxu0 0
        %3758 = vmatmul.mubr.bf16.gmra.mxu0 %v3615
        %v3759 = vpop.f32.mrf.mxu0
        %v3760 = vadd.f32 %v3596, %v3759
        %v3761 = vpop.f32.mrf.mxu0
        %v3762 = vpop.f32.mrf.mxu0
        %v3763 = vadd.f32 %v3596, %v3762
        %v3764 = vpop.f32.mrf.mxu0
        %3765 = vmatprep.mubr.bf16.mxu0 0
        %3766 = vmatmul.mubr.bf16.gmra.mxu0 %v3618
        %v3767 = vpop.f32.mrf.mxu0
        %v3768 = vadd.f32 %v3596, %v3767
        %v3769 = vpop.f32.mrf.mxu0
        %v3770 = vpop.f32.mrf.mxu0
        %v3771 = vadd.f32 %v3596, %v3770
        %v3772 = vpop.f32.mrf.mxu0
        %3773 = vmatprep.mubr.bf16.mxu0 0
        %3774 = vmatmul.mubr.bf16.gmra.mxu0 %v3621
        %v3775 = vpop.f32.mrf.mxu0
        %v3776 = vadd.f32 %v3596, %v3775
        %v3777 = vpop.f32.mrf.mxu0
        %v3778 = vpop.f32.mrf.mxu0
        %v3779 = vadd.f32 %v3596, %v3778
        %v3780 = vpop.f32.mrf.mxu0
        %3781 = vmatprep.mubr.bf16.mxu0 0
        %3782 = vmatmul.mubr.bf16.gmra.mxu0 %v3624
        %v3783 = vpop.f32.mrf.mxu0
        %v3784 = vadd.f32 %v3596, %v3783
        %v3785 = vpop.f32.mrf.mxu0
        %v3786 = vpop.f32.mrf.mxu0
        %v3787 = vadd.f32 %v3596, %v3786
        %v3788 = vpop.f32.mrf.mxu0
        %3789 = vmatprep.mubr.bf16.mxu0 0
        %3790 = vmatmul.mubr.bf16.gmra.mxu0 %v3627
        %v3791 = vpop.f32.mrf.mxu0
        %v3792 = vadd.f32 %v3596, %v3791
        %v3793 = vpop.f32.mrf.mxu0
        %v3794 = vpop.f32.mrf.mxu0
        %v3795 = vadd.f32 %v3596, %v3794
        %v3796 = vpop.f32.mrf.mxu0
        %3797 = vmatprep.mubr.bf16.mxu0 0
        %3798 = vmatmul.mubr.bf16.gmra.mxu0 %v3630
        %v3799 = vpop.f32.mrf.mxu0
        %v3800 = vadd.f32 %v3596, %v3799
        %v3801 = vpop.f32.mrf.mxu0
        %v3802 = vpop.f32.mrf.mxu0
        %v3803 = vadd.f32 %v3596, %v3802
        %v3804 = vpop.f32.mrf.mxu0
        %3805 = vmatprep.mubr.bf16.mxu0 0
        %3806 = vmatmul.mubr.bf16.gmra.mxu0 %v3633
        %v3807 = vpop.f32.mrf.mxu0
        %v3808 = vadd.f32 %v3596, %v3807
        %v3809 = vpop.f32.mrf.mxu0
        %v3810 = vpop.f32.mrf.mxu0
        %v3811 = vadd.f32 %v3596, %v3810
        %v3812 = vpop.f32.mrf.mxu0
        %3813 = vmatprep.mubr.bf16.mxu0 0
        %3814 = vmatmul.mubr.bf16.gmra.mxu0 %v3636
        %v3815 = vpop.f32.mrf.mxu0
        %v3816 = vadd.f32 %v3596, %v3815
        %v3817 = vpop.f32.mrf.mxu0
        %v3818 = vpop.f32.mrf.mxu0
        %v3819 = vadd.f32 %v3596, %v3818
        %v3820 = vpop.f32.mrf.mxu0
        %3821 = vmatprep.mubr.bf16.mxu0 0
        %3822 = vmatmul.mubr.bf16.gmra.mxu0 %v3639
        %v3823 = vpop.f32.mrf.mxu0
        %v3824 = vadd.f32 %v3596, %v3823
        %v3825 = vpop.f32.mrf.mxu0
        %v3826 = vpop.f32.mrf.mxu0
        %v3827 = vadd.f32 %v3596, %v3826
        %v3828 = vpop.f32.mrf.mxu0
        %3829 = vmatprep.mubr.bf16.mxu0 0
        %3830 = vmatmul.mubr.bf16.gmra.mxu0 %v3642
        %v3831 = vpop.f32.mrf.mxu0
        %v3832 = vadd.f32 %v3596, %v3831
        %v3833 = vpop.f32.mrf.mxu0
        %v3834 = vpop.f32.mrf.mxu0
        %v3835 = vadd.f32 %v3596, %v3834
        %v3836 = vpop.f32.mrf.mxu0
        %3837 = vmatprep.mubr.bf16.mxu0 0
        %3838 = vmatmul.mubr.bf16.gmra.mxu0 %v3645
        %v3839 = vpop.f32.mrf.mxu0
        %v3840 = vadd.f32 %v3596, %v3839
        %v3841 = vpop.f32.mrf.mxu0
        %v3842 = vpop.f32.mrf.mxu0
        %v3843 = vadd.f32 %v3596, %v3842
        %v3844 = vpop.f32.mrf.mxu0
        %3845 = vmatprep.mubr.bf16.mxu0 0
        %3846 = vmatmul.mubr.bf16.gmra.mxu0 %v3648
        %v3847 = vpop.f32.mrf.mxu0
        %v3848 = vadd.f32 %v3596, %v3847
        %v3849 = vpop.f32.mrf.mxu0
        %v3850 = vpop.f32.mrf.mxu0
        %v3851 = vadd.f32 %v3596, %v3850
        %v3852 = vpop.f32.mrf.mxu0
        %3853 = vmatprep.mubr.bf16.mxu0 0
        %3854 = vmatmul.mubr.bf16.gmra.mxu0 %v3651
        %v3855 = vpop.f32.mrf.mxu0
        %v3856 = vadd.f32 %v3596, %v3855
        %v3857 = vpop.f32.mrf.mxu0
        %v3858 = vpop.f32.mrf.mxu0
        %v3859 = vadd.f32 %v3596, %v3858
        %v3860 = vpop.f32.mrf.mxu0
        %3861 = vmatprep.mubr.bf16.mxu0 0
        %3862 = vmatmul.mubr.bf16.gmra.mxu0 %v3654
        %v3863 = vpop.f32.mrf.mxu0
        %v3864 = vadd.f32 %v3596, %v3863
        %v3865 = vpop.f32.mrf.mxu0
        %v3866 = vpop.f32.mrf.mxu0
        %v3867 = vadd.f32 %v3596, %v3866
        %v3868 = vpop.f32.mrf.mxu0
        %3869 = vmatprep.mubr.bf16.mxu0 0
        %3870 = vmatmul.mubr.bf16.gmra.mxu0 %v3657
        %v3871 = vpop.f32.mrf.mxu0
        %v3872 = vadd.f32 %v3596, %v3871
        %v3873 = vpop.f32.mrf.mxu0
        %v3874 = vpop.f32.mrf.mxu0
        %v3875 = vadd.f32 %v3596, %v3874
        %v3876 = vpop.f32.mrf.mxu0
        %3877 = vmatprep.mubr.bf16.mxu0 0
        %3878 = vmatmul.mubr.bf16.gmra.mxu0 %v3660
        %v3879 = vpop.f32.mrf.mxu0
        %v3880 = vadd.f32 %v3596, %v3879
        %v3881 = vpop.f32.mrf.mxu0
        %v3882 = vpop.f32.mrf.mxu0
        %v3883 = vadd.f32 %v3596, %v3882
        %v3884 = vpop.f32.mrf.mxu0
        %3885 = vmatprep.mubr.bf16.mxu0 0
        %3886 = vmatmul.mubr.bf16.gmra.mxu0 %v3663
        %v3887 = vpop.f32.mrf.mxu0
        %v3888 = vadd.f32 %v3596, %v3887
        %v3889 = vpop.f32.mrf.mxu0
        %v3890 = vpop.f32.mrf.mxu0
        %v3891 = vadd.f32 %v3596, %v3890
        %v3892 = vpop.f32.mrf.mxu0
        %3893 = vmatprep.mubr.bf16.mxu0 0
        %3894 = vmatmul.mubr.bf16.gmra.mxu0 %v3666
        %v3895 = vpop.f32.mrf.mxu0
        %v3896 = vadd.f32 %v3596, %v3895
        %v3897 = vpop.f32.mrf.mxu0
        %v3898 = vpop.f32.mrf.mxu0
        %v3899 = vadd.f32 %v3596, %v3898
        %v3900 = vpop.f32.mrf.mxu0
        %3901 = vmatprep.mubr.bf16.mxu0 0
        %3902 = vmatmul.mubr.bf16.gmra.mxu0 %v3669
        %v3903 = vpop.f32.mrf.mxu0
        %v3904 = vadd.f32 %v3596, %v3903
        %v3905 = vpop.f32.mrf.mxu0
        %v3906 = vpop.f32.mrf.mxu0
        %v3907 = vadd.f32 %v3596, %v3906
        %v3908 = vpop.f32.mrf.mxu0
        %3909 = vmatprep.mubr.bf16.mxu0 0
        %3910 = vmatmul.mubr.bf16.gmra.mxu0 %v3672
        %v3911 = vpop.f32.mrf.mxu0
        %v3912 = vadd.f32 %v3596, %v3911
        %v3913 = vpop.f32.mrf.mxu0
        %v3914 = vpop.f32.mrf.mxu0
        %v3915 = vadd.f32 %v3596, %v3914
        %v3916 = vpop.f32.mrf.mxu0
        %3917 = vmatprep.mubr.bf16.mxu0 0
        %3918 = vmatmul.mubr.bf16.gmra.mxu0 %v3675
        %v3919 = vpop.f32.mrf.mxu0
        %v3920 = vadd.f32 %v3596, %v3919
        %v3921 = vpop.f32.mrf.mxu0
        %v3922 = vpop.f32.mrf.mxu0
        %v3923 = vadd.f32 %v3596, %v3922
        %v3924 = vpop.f32.mrf.mxu0
        %3925 = vmatprep.mubr.bf16.mxu0 0
        %3926 = vmatmul.mubr.bf16.gmra.mxu0 %v3678
        %v3927 = vpop.f32.mrf.mxu0
        %v3928 = vadd.f32 %v3596, %v3927
        %v3929 = vpop.f32.mrf.mxu0
        %v3930 = vpop.f32.mrf.mxu0
        %v3931 = vadd.f32 %v3596, %v3930
        %v3932 = vpop.f32.mrf.mxu0
        %3933 = vmatprep.mubr.bf16.mxu0 0
        %3934 = vmatmul.mubr.bf16.gmra.mxu0 %v3681
        %v3935 = vpop.f32.mrf.mxu0
        %v3936 = vadd.f32 %v3596, %v3935
        %v3937 = vpop.f32.mrf.mxu0
        %v3938 = vpop.f32.mrf.mxu0
        %v3939 = vadd.f32 %v3596, %v3938
        %v3940 = vpop.f32.mrf.mxu0
        %3941 = vmatprep.mubr.bf16.mxu0 0
        %3942 = vmatmul.mubr.bf16.gmra.mxu0 %v3684
        %v3943 = vpop.f32.mrf.mxu0
        %v3944 = vadd.f32 %v3596, %v3943
        %v3945 = vpop.f32.mrf.mxu0
        %v3946 = vpop.f32.mrf.mxu0
        %v3947 = vadd.f32 %v3596, %v3946
        %v3948 = vpop.f32.mrf.mxu0
        %3949 = vmatprep.mubr.bf16.mxu0 0
        %3950 = vmatmul.mubr.bf16.gmra.mxu0 %v3687
        %v3951 = vpop.f32.mrf.mxu0
        %v3952 = vadd.f32 %v3596, %v3951
        %v3953 = vpop.f32.mrf.mxu0
        %v3954 = vpop.f32.mrf.mxu0
        %v3955 = vadd.f32 %v3596, %v3954
        %v3956 = vpop.f32.mrf.mxu0
        %3957 = vmatprep.mubr.bf16.mxu0 0
        %3958 = vmatmul.mubr.bf16.gmra.mxu0 %v3690
        %v3959 = vpop.f32.mrf.mxu0
        %v3960 = vadd.f32 %v3596, %v3959
        %v3961 = vpop.f32.mrf.mxu0
        %v3962 = vpop.f32.mrf.mxu0
        %v3963 = vadd.f32 %v3596, %v3962
        %v3964 = vpop.f32.mrf.mxu0
        %3965 = vmatprep.mubr.bf16.mxu0 0
        %3966 = vmatmul.mubr.bf16.gmra.mxu0 %v3693
        %v3967 = vpop.f32.mrf.mxu0
        %v3968 = vadd.f32 %v3596, %v3967
        %v3969 = vpop.f32.mrf.mxu0
        %v3970 = vpop.f32.mrf.mxu0
        %v3971 = vadd.f32 %v3596, %v3970
        %v3972 = vpop.f32.mrf.mxu0
        %3973 = vmatprep.mubr.bf16.mxu0 0
        %3974 = vmatmul.mubr.bf16.gmra.mxu0 %v3696
        %v3975 = vpop.f32.mrf.mxu0
        %v3976 = vadd.f32 %v3596, %v3975
        %v3977 = vpop.f32.mrf.mxu0
        %v3978 = vpop.f32.mrf.mxu0
        %v3979 = vadd.f32 %v3596, %v3978
        %v3980 = vpop.f32.mrf.mxu0
        %3981 = vmatprep.mubr.bf16.mxu0 0
        %3982 = vmatmul.mubr.bf16.gmra.mxu0 %v3699
        %v3983 = vpop.f32.mrf.mxu0
        %v3984 = vadd.f32 %v3596, %v3983
        %v3985 = vpop.f32.mrf.mxu0
        %v3986 = vpop.f32.mrf.mxu0
        %v3987 = vadd.f32 %v3596, %v3986
        %v3988 = vpop.f32.mrf.mxu0
        %3989 = vdwg.mxu0
        %vm3990 = vcmask 48128
        %3991 = vst.msk [vmem:[%s362] sm:$0xff] %vm3990, %v3736
        %3992 = vst.msk [vmem:[%s362 + $0x8] sm:$0xff] %vm3990, %v3739
        %3993 = vst.msk [vmem:[%s362 + $0x10] sm:$0xff] %vm3990, %v3744
        %3994 = vst.msk [vmem:[%s362 + $0x18] sm:$0xff] %vm3990, %v3747
        %3995 = vst.msk [vmem:[%s362 + $0x20] sm:$0xff] %vm3990, %v3752
        %3996 = vst.msk [vmem:[%s362 + $0x28] sm:$0xff] %vm3990, %v3755
        %3997 = vst.msk [vmem:[%s362 + $0x30] sm:$0xff] %vm3990, %v3760
        %3998 = vst.msk [vmem:[%s362 + $0x38] sm:$0xff] %vm3990, %v3763
        %3999 = vst.msk [vmem:[%s362 + $0x40] sm:$0xff] %vm3990, %v3768
        %4000 = vst.msk [vmem:[%s362 + $0x48] sm:$0xff] %vm3990, %v3771
        %4001 = vst.msk [vmem:[%s362 + $0x50] sm:$0xff] %vm3990, %v3776
        %4002 = vst.msk [vmem:[%s362 + $0x58] sm:$0xff] %vm3990, %v3779
        %4003 = vst.msk [vmem:[%s362 + $0x60] sm:$0xff] %vm3990, %v3784
        %4004 = vst.msk [vmem:[%s362 + $0x68] sm:$0xff] %vm3990, %v3787
        %4005 = vst.msk [vmem:[%s362 + $0x70] sm:$0xff] %vm3990, %v3792
        %4006 = vst.msk [vmem:[%s362 + $0x78] sm:$0xff] %vm3990, %v3795
        %4007 = vst.msk [vmem:[%s362 + $0x80] sm:$0xff] %vm3990, %v3800
        %4008 = vst.msk [vmem:[%s362 + $0x88] sm:$0xff] %vm3990, %v3803
        %4009 = vst.msk [vmem:[%s362 + $0x90] sm:$0xff] %vm3990, %v3808
        %4010 = vst.msk [vmem:[%s362 + $0x98] sm:$0xff] %vm3990, %v3811
        %4011 = vst.msk [vmem:[%s362 + $0xa0] sm:$0xff] %vm3990, %v3816
        %4012 = vst.msk [vmem:[%s362 + $0xa8] sm:$0xff] %vm3990, %v3819
        %4013 = vst.msk [vmem:[%s362 + $0xb0] sm:$0xff] %vm3990, %v3824
        %4014 = vst.msk [vmem:[%s362 + $0xb8] sm:$0xff] %vm3990, %v3827
        %4015 = vst.msk [vmem:[%s362 + $0xc0] sm:$0xff] %vm3990, %v3832
        %4016 = vst.msk [vmem:[%s362 + $0xc8] sm:$0xff] %vm3990, %v3835
        %4017 = vst.msk [vmem:[%s362 + $0xd0] sm:$0xff] %vm3990, %v3840
        %4018 = vst.msk [vmem:[%s362 + $0xd8] sm:$0xff] %vm3990, %v3843
        %4019 = vst.msk [vmem:[%s362 + $0xe0] sm:$0xff] %vm3990, %v3848
        %4020 = vst.msk [vmem:[%s362 + $0xe8] sm:$0xff] %vm3990, %v3851
        %4021 = vst.msk [vmem:[%s362 + $0xf0] sm:$0xff] %vm3990, %v3856
        %4022 = vst.msk [vmem:[%s362 + $0xf8] sm:$0xff] %vm3990, %v3859
        %4023 = vst.msk [vmem:[%s362 + $0x100] sm:$0xff] %vm3990, %v3864
        %4024 = vst.msk [vmem:[%s362 + $0x108] sm:$0xff] %vm3990, %v3867
        %4025 = vst.msk [vmem:[%s362 + $0x110] sm:$0xff] %vm3990, %v3872
        %4026 = vst.msk [vmem:[%s362 + $0x118] sm:$0xff] %vm3990, %v3875
        %4027 = vst.msk [vmem:[%s362 + $0x120] sm:$0xff] %vm3990, %v3880
        %4028 = vst.msk [vmem:[%s362 + $0x128] sm:$0xff] %vm3990, %v3883
        %4029 = vst.msk [vmem:[%s362 + $0x130] sm:$0xff] %vm3990, %v3888
        %4030 = vst.msk [vmem:[%s362 + $0x138] sm:$0xff] %vm3990, %v3891
        %4031 = vst.msk [vmem:[%s362 + $0x140] sm:$0xff] %vm3990, %v3896
        %4032 = vst.msk [vmem:[%s362 + $0x148] sm:$0xff] %vm3990, %v3899
        %4033 = vst.msk [vmem:[%s362 + $0x150] sm:$0xff] %vm3990, %v3904
        %4034 = vst.msk [vmem:[%s362 + $0x158] sm:$0xff] %vm3990, %v3907
        %4035 = vst.msk [vmem:[%s362 + $0x160] sm:$0xff] %vm3990, %v3912
        %4036 = vst.msk [vmem:[%s362 + $0x168] sm:$0xff] %vm3990, %v3915
        %4037 = vst.msk [vmem:[%s362 + $0x170] sm:$0xff] %vm3990, %v3920
        %4038 = vst.msk [vmem:[%s362 + $0x178] sm:$0xff] %vm3990, %v3923
        %4039 = vst.msk [vmem:[%s362 + $0x180] sm:$0xff] %vm3990, %v3928
        %4040 = vst.msk [vmem:[%s362 + $0x188] sm:$0xff] %vm3990, %v3931
        %4041 = vst.msk [vmem:[%s362 + $0x190] sm:$0xff] %vm3990, %v3936
        %4042 = vst.msk [vmem:[%s362 + $0x198] sm:$0xff] %vm3990, %v3939
        %4043 = vst.msk [vmem:[%s362 + $0x1a0] sm:$0xff] %vm3990, %v3944
        %4044 = vst.msk [vmem:[%s362 + $0x1a8] sm:$0xff] %vm3990, %v3947
        %4045 = vst.msk [vmem:[%s362 + $0x1b0] sm:$0xff] %vm3990, %v3952
        %4046 = vst.msk [vmem:[%s362 + $0x1b8] sm:$0xff] %vm3990, %v3955
        %4047 = vst.msk [vmem:[%s362 + $0x1c0] sm:$0xff] %vm3990, %v3960
        %4048 = vst.msk [vmem:[%s362 + $0x1c8] sm:$0xff] %vm3990, %v3963
        %4049 = vst.msk [vmem:[%s362 + $0x1d0] sm:$0xff] %vm3990, %v3968
        %4050 = vst.msk [vmem:[%s362 + $0x1d8] sm:$0xff] %vm3990, %v3971
        %4051 = vst.msk [vmem:[%s362 + $0x1e0] sm:$0xff] %vm3990, %v3976
        %4052 = vst.msk [vmem:[%s362 + $0x1e8] sm:$0xff] %vm3990, %v3979
        %4053 = vst.msk [vmem:[%s362 + $0x1f0] sm:$0xff] %vm3990, %v3984
        %4054 = vst.msk [vmem:[%s362 + $0x1f8] sm:$0xff] %vm3990, %v3987
        %s4055 = sand.u32 %s227, 1
        %s4056 = sand.u32 %s227, 1
        %s4057 = smul.addr %s4056, 512
        %s4058 = scalar_lea.vmem [#allocation2], %s4057
        // Predicated region
        $region57: #{tpu_custom_call.1} parent=55 // pred_check
          %p4059 = pneg %p237
        $region58: #{tpu_custom_call.1} parent=55 // pred_check_branch
          %4061 = sbr.rel (%p4059) target = $region60
        $region59: #{tpu_custom_call.1} parent=55 // pred_region
          %s4062 = smul.u32 64, %s20
          %s4063 = ssub.s32 75, %s4062
          %p4064 = scmp.lt.s32.totalorder %s4063, 64
          %s4065 = scalar_select %p4064, %s4063, 64
          %s4066 = smul.u32 128, %s4065
          %p4067 = scmp.ne.s32.totalorder 0, %s4066
          %s4068 = smul.addr %s4062, 8
          %s4069 = scalar_lea.vmem %s9, %s4068
          // Predicated region
          $region61: #{tpu_custom_call.1} parent=59 // pred_check
            %p4070 = pneg %p4067
          $region62: #{tpu_custom_call.1} parent=59 // pred_check_branch
            %4072 = sbr.rel (%p4070) target = $region64
          $region63: #{tpu_custom_call.1} parent=59 // pred_region
            // Predicated region
            $region65: #{tpu_custom_call.1} parent=63 // pred_check
              _
            $region66: #{tpu_custom_call.1} parent=63 // pred_check_branch
              %4074 = sbr.rel (0) target = $region68
            $region67: #{tpu_custom_call.1} parent=63 // pred_region
              // Predicated region
              $region87: #{tpu_custom_call.1} parent=67 // pred_check
                _
              $region88: #{tpu_custom_call.1} parent=67 // pred_check_branch
                %4250 = sbr.rel (0) target = $region90
              $region89: #{tpu_custom_call.1} parent=67 // pred_region
                %s4251 = sshrl.u32 %s4065, 6
                // While loop
                $region91: #{tpu_custom_call.1} parent=89 // loop_pre_header
                  _
                $region92: #{tpu_custom_call.1} parent=89 // loop_header
                  %s4253 = sphi 0, %s4255
                  %p4254 = scmp.ge.s32.totalorder %s4253, %s4251
                  %s4258 = sphi 0, %s4391
                  %s4259 = sphi %s4058, %s4394
                  %s4260 = sphi %s4069, %s4395
                $region93: #{tpu_custom_call.1} parent=89 // loop_header_branch
                  %4257 = sbr.rel (%p4254) target = $region97
                $region94: #{tpu_custom_call.1} parent=89 // loop_body
                  %v4261 = vld [vmem:[%s4259] sm:$0xff]
                  %4262 = vst [vmem:[%s4260] sm:$0xff] %v4261
                  %v4263 = vld [vmem:[%s4259 + $0x8] sm:$0xff]
                  %4264 = vst [vmem:[%s4260 + $0x8] sm:$0xff] %v4263
                  %v4265 = vld [vmem:[%s4259 + $0x10] sm:$0xff]
                  %4266 = vst [vmem:[%s4260 + $0x10] sm:$0xff] %v4265
                  %v4267 = vld [vmem:[%s4259 + $0x18] sm:$0xff]
                  %4268 = vst [vmem:[%s4260 + $0x18] sm:$0xff] %v4267
                  %v4269 = vld [vmem:[%s4259 + $0x20] sm:$0xff]
                  %4270 = vst [vmem:[%s4260 + $0x20] sm:$0xff] %v4269
                  %v4271 = vld [vmem:[%s4259 + $0x28] sm:$0xff]
                  %4272 = vst [vmem:[%s4260 + $0x28] sm:$0xff] %v4271
                  %v4273 = vld [vmem:[%s4259 + $0x30] sm:$0xff]
                  %4274 = vst [vmem:[%s4260 + $0x30] sm:$0xff] %v4273
                  %v4275 = vld [vmem:[%s4259 + $0x38] sm:$0xff]
                  %4276 = vst [vmem:[%s4260 + $0x38] sm:$0xff] %v4275
                  %v4277 = vld [vmem:[%s4259 + $0x40] sm:$0xff]
                  %4278 = vst [vmem:[%s4260 + $0x40] sm:$0xff] %v4277
                  %v4279 = vld [vmem:[%s4259 + $0x48] sm:$0xff]
                  %4280 = vst [vmem:[%s4260 + $0x48] sm:$0xff] %v4279
                  %v4281 = vld [vmem:[%s4259 + $0x50] sm:$0xff]
                  %4282 = vst [vmem:[%s4260 + $0x50] sm:$0xff] %v4281
                  %v4283 = vld [vmem:[%s4259 + $0x58] sm:$0xff]
                  %4284 = vst [vmem:[%s4260 + $0x58] sm:$0xff] %v4283
                  %v4285 = vld [vmem:[%s4259 + $0x60] sm:$0xff]
                  %4286 = vst [vmem:[%s4260 + $0x60] sm:$0xff] %v4285
                  %v4287 = vld [vmem:[%s4259 + $0x68] sm:$0xff]
                  %4288 = vst [vmem:[%s4260 + $0x68] sm:$0xff] %v4287
                  %v4289 = vld [vmem:[%s4259 + $0x70] sm:$0xff]
                  %4290 = vst [vmem:[%s4260 + $0x70] sm:$0xff] %v4289
                  %v4291 = vld [vmem:[%s4259 + $0x78] sm:$0xff]
                  %4292 = vst [vmem:[%s4260 + $0x78] sm:$0xff] %v4291
                  %v4293 = vld [vmem:[%s4259 + $0x80] sm:$0xff]
                  %4294 = vst [vmem:[%s4260 + $0x80] sm:$0xff] %v4293
                  %v4295 = vld [vmem:[%s4259 + $0x88] sm:$0xff]
                  %4296 = vst [vmem:[%s4260 + $0x88] sm:$0xff] %v4295
                  %v4297 = vld [vmem:[%s4259 + $0x90] sm:$0xff]
                  %4298 = vst [vmem:[%s4260 + $0x90] sm:$0xff] %v4297
                  %v4299 = vld [vmem:[%s4259 + $0x98] sm:$0xff]
                  %4300 = vst [vmem:[%s4260 + $0x98] sm:$0xff] %v4299
                  %v4301 = vld [vmem:[%s4259 + $0xa0] sm:$0xff]
                  %4302 = vst [vmem:[%s4260 + $0xa0] sm:$0xff] %v4301
                  %v4303 = vld [vmem:[%s4259 + $0xa8] sm:$0xff]
                  %4304 = vst [vmem:[%s4260 + $0xa8] sm:$0xff] %v4303
                  %v4305 = vld [vmem:[%s4259 + $0xb0] sm:$0xff]
                  %4306 = vst [vmem:[%s4260 + $0xb0] sm:$0xff] %v4305
                  %v4307 = vld [vmem:[%s4259 + $0xb8] sm:$0xff]
                  %4308 = vst [vmem:[%s4260 + $0xb8] sm:$0xff] %v4307
                  %v4309 = vld [vmem:[%s4259 + $0xc0] sm:$0xff]
                  %4310 = vst [vmem:[%s4260 + $0xc0] sm:$0xff] %v4309
                  %v4311 = vld [vmem:[%s4259 + $0xc8] sm:$0xff]
                  %4312 = vst [vmem:[%s4260 + $0xc8] sm:$0xff] %v4311
                  %v4313 = vld [vmem:[%s4259 + $0xd0] sm:$0xff]
                  %4314 = vst [vmem:[%s4260 + $0xd0] sm:$0xff] %v4313
                  %v4315 = vld [vmem:[%s4259 + $0xd8] sm:$0xff]
                  %4316 = vst [vmem:[%s4260 + $0xd8] sm:$0xff] %v4315
                  %v4317 = vld [vmem:[%s4259 + $0xe0] sm:$0xff]
                  %4318 = vst [vmem:[%s4260 + $0xe0] sm:$0xff] %v4317
                  %v4319 = vld [vmem:[%s4259 + $0xe8] sm:$0xff]
                  %4320 = vst [vmem:[%s4260 + $0xe8] sm:$0xff] %v4319
                  %v4321 = vld [vmem:[%s4259 + $0xf0] sm:$0xff]
                  %4322 = vst [vmem:[%s4260 + $0xf0] sm:$0xff] %v4321
                  %v4323 = vld [vmem:[%s4259 + $0xf8] sm:$0xff]
                  %4324 = vst [vmem:[%s4260 + $0xf8] sm:$0xff] %v4323
                  %v4325 = vld [vmem:[%s4259 + $0x100] sm:$0xff]
                  %4326 = vst [vmem:[%s4260 + $0x100] sm:$0xff] %v4325
                  %v4327 = vld [vmem:[%s4259 + $0x108] sm:$0xff]
                  %4328 = vst [vmem:[%s4260 + $0x108] sm:$0xff] %v4327
                  %v4329 = vld [vmem:[%s4259 + $0x110] sm:$0xff]
                  %4330 = vst [vmem:[%s4260 + $0x110] sm:$0xff] %v4329
                  %v4331 = vld [vmem:[%s4259 + $0x118] sm:$0xff]
                  %4332 = vst [vmem:[%s4260 + $0x118] sm:$0xff] %v4331
                  %v4333 = vld [vmem:[%s4259 + $0x120] sm:$0xff]
                  %4334 = vst [vmem:[%s4260 + $0x120] sm:$0xff] %v4333
                  %v4335 = vld [vmem:[%s4259 + $0x128] sm:$0xff]
                  %4336 = vst [vmem:[%s4260 + $0x128] sm:$0xff] %v4335
                  %v4337 = vld [vmem:[%s4259 + $0x130] sm:$0xff]
                  %4338 = vst [vmem:[%s4260 + $0x130] sm:$0xff] %v4337
                  %v4339 = vld [vmem:[%s4259 + $0x138] sm:$0xff]
                  %4340 = vst [vmem:[%s4260 + $0x138] sm:$0xff] %v4339
                  %v4341 = vld [vmem:[%s4259 + $0x140] sm:$0xff]
                  %4342 = vst [vmem:[%s4260 + $0x140] sm:$0xff] %v4341
                  %v4343 = vld [vmem:[%s4259 + $0x148] sm:$0xff]
                  %4344 = vst [vmem:[%s4260 + $0x148] sm:$0xff] %v4343
                  %v4345 = vld [vmem:[%s4259 + $0x150] sm:$0xff]
                  %4346 = vst [vmem:[%s4260 + $0x150] sm:$0xff] %v4345
                  %v4347 = vld [vmem:[%s4259 + $0x158] sm:$0xff]
                  %4348 = vst [vmem:[%s4260 + $0x158] sm:$0xff] %v4347
                  %v4349 = vld [vmem:[%s4259 + $0x160] sm:$0xff]
                  %4350 = vst [vmem:[%s4260 + $0x160] sm:$0xff] %v4349
                  %v4351 = vld [vmem:[%s4259 + $0x168] sm:$0xff]
                  %4352 = vst [vmem:[%s4260 + $0x168] sm:$0xff] %v4351
                  %v4353 = vld [vmem:[%s4259 + $0x170] sm:$0xff]
                  %4354 = vst [vmem:[%s4260 + $0x170] sm:$0xff] %v4353
                  %v4355 = vld [vmem:[%s4259 + $0x178] sm:$0xff]
                  %4356 = vst [vmem:[%s4260 + $0x178] sm:$0xff] %v4355
                  %v4357 = vld [vmem:[%s4259 + $0x180] sm:$0xff]
                  %4358 = vst [vmem:[%s4260 + $0x180] sm:$0xff] %v4357
                  %v4359 = vld [vmem:[%s4259 + $0x188] sm:$0xff]
                  %4360 = vst [vmem:[%s4260 + $0x188] sm:$0xff] %v4359
                  %v4361 = vld [vmem:[%s4259 + $0x190] sm:$0xff]
                  %4362 = vst [vmem:[%s4260 + $0x190] sm:$0xff] %v4361
                  %v4363 = vld [vmem:[%s4259 + $0x198] sm:$0xff]
                  %4364 = vst [vmem:[%s4260 + $0x198] sm:$0xff] %v4363
                  %v4365 = vld [vmem:[%s4259 + $0x1a0] sm:$0xff]
                  %4366 = vst [vmem:[%s4260 + $0x1a0] sm:$0xff] %v4365
                  %v4367 = vld [vmem:[%s4259 + $0x1a8] sm:$0xff]
                  %4368 = vst [vmem:[%s4260 + $0x1a8] sm:$0xff] %v4367
                  %v4369 = vld [vmem:[%s4259 + $0x1b0] sm:$0xff]
                  %4370 = vst [vmem:[%s4260 + $0x1b0] sm:$0xff] %v4369
                  %v4371 = vld [vmem:[%s4259 + $0x1b8] sm:$0xff]
                  %4372 = vst [vmem:[%s4260 + $0x1b8] sm:$0xff] %v4371
                  %v4373 = vld [vmem:[%s4259 + $0x1c0] sm:$0xff]
                  %4374 = vst [vmem:[%s4260 + $0x1c0] sm:$0xff] %v4373
                  %v4375 = vld [vmem:[%s4259 + $0x1c8] sm:$0xff]
                  %4376 = vst [vmem:[%s4260 + $0x1c8] sm:$0xff] %v4375
                  %v4377 = vld [vmem:[%s4259 + $0x1d0] sm:$0xff]
                  %4378 = vst [vmem:[%s4260 + $0x1d0] sm:$0xff] %v4377
                  %v4379 = vld [vmem:[%s4259 + $0x1d8] sm:$0xff]
                  %4380 = vst [vmem:[%s4260 + $0x1d8] sm:$0xff] %v4379
                  %v4381 = vld [vmem:[%s4259 + $0x1e0] sm:$0xff]
                  %4382 = vst [vmem:[%s4260 + $0x1e0] sm:$0xff] %v4381
                  %v4383 = vld [vmem:[%s4259 + $0x1e8] sm:$0xff]
                  %4384 = vst [vmem:[%s4260 + $0x1e8] sm:$0xff] %v4383
                  %v4385 = vld [vmem:[%s4259 + $0x1f0] sm:$0xff]
                  %4386 = vst [vmem:[%s4260 + $0x1f0] sm:$0xff] %v4385
                  %v4387 = vld [vmem:[%s4259 + $0x1f8] sm:$0xff]
                  %4388 = vst [vmem:[%s4260 + $0x1f8] sm:$0xff] %v4387
                  %s4389 = sadd.s32 1, %s4258
                  %p4390 = scmp.ge.s32.totalorder %s4389, %s4251
                  %s4391 = scalar_select %p4390, 0, %s4389
                  %s4392 = smul.u32 %s4391, 512
                  %s4393 = smul.u32 %s4391, 512
                  %s4394 = scalar_lea.vmem %s4058, %s4392 [#allocation2]
                  %s4395 = scalar_lea.vmem %s4069, %s4393
                $region95: #{tpu_custom_call.1} parent=89 // loop_footer
                  %s4255 = sadd.s32 %s4253, 1
                $region96: #{tpu_custom_call.1} parent=89 // loop_footer_branch
                  %4252 = sbr.rel target = $region92
                $region97: #{tpu_custom_call.1} parent=89 // loop_exit
                  _
                %s4396 = sshrl.u32 %s4065, 6
                %s4397 = sand.u32 %s4065, 63
                %s4398 = smul.u32 %s4396, 64
                %s4399 = smul.u32 8, %s4398
                %s4400 = scalar_lea.vmem %s4058, %s4399 [#allocation2]
                %s4401 = smul.u32 8, %s4398
                %s4402 = scalar_lea.vmem %s4069, %s4401
                // While loop
                $region98: #{tpu_custom_call.1} parent=89 // loop_pre_header
                  _
                $region99: #{tpu_custom_call.1} parent=89 // loop_header
                  %s4404 = sphi 0, %s4406
                  %p4405 = scmp.ge.s32.totalorder %s4404, %s4397
                  %s4409 = sphi 0, %s4416
                  %s4410 = sphi %s4400, %s4419
                  %s4411 = sphi %s4402, %s4420
                $region100: #{tpu_custom_call.1} parent=89 // loop_header_branch
                  %4408 = sbr.rel (%p4405) target = $region104
                $region101: #{tpu_custom_call.1} parent=89 // loop_body
                  %v4412 = vld [vmem:[%s4410] sm:$0xff]
                  %4413 = vst [vmem:[%s4411] sm:$0xff] %v4412
                  %s4414 = sadd.s32 1, %s4409
                  %p4415 = scmp.ge.s32.totalorder %s4414, %s4397
                  %s4416 = scalar_select %p4415, 0, %s4414
                  %s4417 = smul.u32 %s4416, 8
                  %s4418 = smul.u32 %s4416, 8
                  %s4419 = scalar_lea.vmem %s4400, %s4417 [#allocation2]
                  %s4420 = scalar_lea.vmem %s4402, %s4418
                $region102: #{tpu_custom_call.1} parent=89 // loop_footer
                  %s4406 = sadd.s32 %s4404, 1
                $region103: #{tpu_custom_call.1} parent=89 // loop_footer_branch
                  %4403 = sbr.rel target = $region99
                $region104: #{tpu_custom_call.1} parent=89 // loop_exit
                  _
              $region90: #{tpu_custom_call.1} parent=67 // pred_fallthru
                _
              // Predicated region
              $region105: #{tpu_custom_call.1} parent=67 // pred_check
                _
              $region106: #{tpu_custom_call.1} parent=67 // pred_check_branch
                %4422 = sbr.rel target = $region108
              $region107: #{tpu_custom_call.1} parent=67 // pred_region
                _
              $region108: #{tpu_custom_call.1} parent=67 // pred_fallthru
                _
            $region68: #{tpu_custom_call.1} parent=63 // pred_fallthru
              _
            // Predicated region
            $region69: #{tpu_custom_call.1} parent=63 // pred_check
              _
            $region70: #{tpu_custom_call.1} parent=63 // pred_check_branch
              %4076 = sbr.rel target = $region72
            $region71: #{tpu_custom_call.1} parent=63 // pred_region
              %s4078 = ssub.s32 256, 1
              %s4079 = sshrl.u32 %s4065, 6
              // While loop
              $region73: #{tpu_custom_call.1} parent=71 // loop_pre_header
                _
              $region74: #{tpu_custom_call.1} parent=71 // loop_header
                %s4081 = sphi 0, %s4083
                %p4082 = scmp.ge.s32.totalorder %s4081, %s4079
                %s4086 = sphi 0, %s4219
                %s4087 = sphi %s4058, %s4222
                %s4088 = sphi %s4069, %s4223
              $region75: #{tpu_custom_call.1} parent=71 // loop_header_branch
                %4085 = sbr.rel (%p4082) target = $region79
              $region76: #{tpu_custom_call.1} parent=71 // loop_body
                %v4089 = vld [vmem:[%s4087] sm:%s4078]
                %4090 = vst [vmem:[%s4088] sm:%s4078] %v4089
                %v4091 = vld [vmem:[%s4087 + $0x8] sm:%s4078]
                %4092 = vst [vmem:[%s4088 + $0x8] sm:%s4078] %v4091
                %v4093 = vld [vmem:[%s4087 + $0x10] sm:%s4078]
                %4094 = vst [vmem:[%s4088 + $0x10] sm:%s4078] %v4093
                %v4095 = vld [vmem:[%s4087 + $0x18] sm:%s4078]
                %4096 = vst [vmem:[%s4088 + $0x18] sm:%s4078] %v4095
                %v4097 = vld [vmem:[%s4087 + $0x20] sm:%s4078]
                %4098 = vst [vmem:[%s4088 + $0x20] sm:%s4078] %v4097
                %v4099 = vld [vmem:[%s4087 + $0x28] sm:%s4078]
                %4100 = vst [vmem:[%s4088 + $0x28] sm:%s4078] %v4099
                %v4101 = vld [vmem:[%s4087 + $0x30] sm:%s4078]
                %4102 = vst [vmem:[%s4088 + $0x30] sm:%s4078] %v4101
                %v4103 = vld [vmem:[%s4087 + $0x38] sm:%s4078]
                %4104 = vst [vmem:[%s4088 + $0x38] sm:%s4078] %v4103
                %v4105 = vld [vmem:[%s4087 + $0x40] sm:%s4078]
                %4106 = vst [vmem:[%s4088 + $0x40] sm:%s4078] %v4105
                %v4107 = vld [vmem:[%s4087 + $0x48] sm:%s4078]
                %4108 = vst [vmem:[%s4088 + $0x48] sm:%s4078] %v4107
                %v4109 = vld [vmem:[%s4087 + $0x50] sm:%s4078]
                %4110 = vst [vmem:[%s4088 + $0x50] sm:%s4078] %v4109
                %v4111 = vld [vmem:[%s4087 + $0x58] sm:%s4078]
                %4112 = vst [vmem:[%s4088 + $0x58] sm:%s4078] %v4111
                %v4113 = vld [vmem:[%s4087 + $0x60] sm:%s4078]
                %4114 = vst [vmem:[%s4088 + $0x60] sm:%s4078] %v4113
                %v4115 = vld [vmem:[%s4087 + $0x68] sm:%s4078]
                %4116 = vst [vmem:[%s4088 + $0x68] sm:%s4078] %v4115
                %v4117 = vld [vmem:[%s4087 + $0x70] sm:%s4078]
                %4118 = vst [vmem:[%s4088 + $0x70] sm:%s4078] %v4117
                %v4119 = vld [vmem:[%s4087 + $0x78] sm:%s4078]
                %4120 = vst [vmem:[%s4088 + $0x78] sm:%s4078] %v4119
                %v4121 = vld [vmem:[%s4087 + $0x80] sm:%s4078]
                %4122 = vst [vmem:[%s4088 + $0x80] sm:%s4078] %v4121
                %v4123 = vld [vmem:[%s4087 + $0x88] sm:%s4078]
                %4124 = vst [vmem:[%s4088 + $0x88] sm:%s4078] %v4123
                %v4125 = vld [vmem:[%s4087 + $0x90] sm:%s4078]
                %4126 = vst [vmem:[%s4088 + $0x90] sm:%s4078] %v4125
                %v4127 = vld [vmem:[%s4087 + $0x98] sm:%s4078]
                %4128 = vst [vmem:[%s4088 + $0x98] sm:%s4078] %v4127
                %v4129 = vld [vmem:[%s4087 + $0xa0] sm:%s4078]
                %4130 = vst [vmem:[%s4088 + $0xa0] sm:%s4078] %v4129
                %v4131 = vld [vmem:[%s4087 + $0xa8] sm:%s4078]
                %4132 = vst [vmem:[%s4088 + $0xa8] sm:%s4078] %v4131
                %v4133 = vld [vmem:[%s4087 + $0xb0] sm:%s4078]
                %4134 = vst [vmem:[%s4088 + $0xb0] sm:%s4078] %v4133
                %v4135 = vld [vmem:[%s4087 + $0xb8] sm:%s4078]
                %4136 = vst [vmem:[%s4088 + $0xb8] sm:%s4078] %v4135
                %v4137 = vld [vmem:[%s4087 + $0xc0] sm:%s4078]
                %4138 = vst [vmem:[%s4088 + $0xc0] sm:%s4078] %v4137
                %v4139 = vld [vmem:[%s4087 + $0xc8] sm:%s4078]
                %4140 = vst [vmem:[%s4088 + $0xc8] sm:%s4078] %v4139
                %v4141 = vld [vmem:[%s4087 + $0xd0] sm:%s4078]
                %4142 = vst [vmem:[%s4088 + $0xd0] sm:%s4078] %v4141
                %v4143 = vld [vmem:[%s4087 + $0xd8] sm:%s4078]
                %4144 = vst [vmem:[%s4088 + $0xd8] sm:%s4078] %v4143
                %v4145 = vld [vmem:[%s4087 + $0xe0] sm:%s4078]
                %4146 = vst [vmem:[%s4088 + $0xe0] sm:%s4078] %v4145
                %v4147 = vld [vmem:[%s4087 + $0xe8] sm:%s4078]
                %4148 = vst [vmem:[%s4088 + $0xe8] sm:%s4078] %v4147
                %v4149 = vld [vmem:[%s4087 + $0xf0] sm:%s4078]
                %4150 = vst [vmem:[%s4088 + $0xf0] sm:%s4078] %v4149
                %v4151 = vld [vmem:[%s4087 + $0xf8] sm:%s4078]
                %4152 = vst [vmem:[%s4088 + $0xf8] sm:%s4078] %v4151
                %v4153 = vld [vmem:[%s4087 + $0x100] sm:%s4078]
                %4154 = vst [vmem:[%s4088 + $0x100] sm:%s4078] %v4153
                %v4155 = vld [vmem:[%s4087 + $0x108] sm:%s4078]
                %4156 = vst [vmem:[%s4088 + $0x108] sm:%s4078] %v4155
                %v4157 = vld [vmem:[%s4087 + $0x110] sm:%s4078]
                %4158 = vst [vmem:[%s4088 + $0x110] sm:%s4078] %v4157
                %v4159 = vld [vmem:[%s4087 + $0x118] sm:%s4078]
                %4160 = vst [vmem:[%s4088 + $0x118] sm:%s4078] %v4159
                %v4161 = vld [vmem:[%s4087 + $0x120] sm:%s4078]
                %4162 = vst [vmem:[%s4088 + $0x120] sm:%s4078] %v4161
                %v4163 = vld [vmem:[%s4087 + $0x128] sm:%s4078]
                %4164 = vst [vmem:[%s4088 + $0x128] sm:%s4078] %v4163
                %v4165 = vld [vmem:[%s4087 + $0x130] sm:%s4078]
                %4166 = vst [vmem:[%s4088 + $0x130] sm:%s4078] %v4165
                %v4167 = vld [vmem:[%s4087 + $0x138] sm:%s4078]
                %4168 = vst [vmem:[%s4088 + $0x138] sm:%s4078] %v4167
                %v4169 = vld [vmem:[%s4087 + $0x140] sm:%s4078]
                %4170 = vst [vmem:[%s4088 + $0x140] sm:%s4078] %v4169
                %v4171 = vld [vmem:[%s4087 + $0x148] sm:%s4078]
                %4172 = vst [vmem:[%s4088 + $0x148] sm:%s4078] %v4171
                %v4173 = vld [vmem:[%s4087 + $0x150] sm:%s4078]
                %4174 = vst [vmem:[%s4088 + $0x150] sm:%s4078] %v4173
                %v4175 = vld [vmem:[%s4087 + $0x158] sm:%s4078]
                %4176 = vst [vmem:[%s4088 + $0x158] sm:%s4078] %v4175
                %v4177 = vld [vmem:[%s4087 + $0x160] sm:%s4078]
                %4178 = vst [vmem:[%s4088 + $0x160] sm:%s4078] %v4177
                %v4179 = vld [vmem:[%s4087 + $0x168] sm:%s4078]
                %4180 = vst [vmem:[%s4088 + $0x168] sm:%s4078] %v4179
                %v4181 = vld [vmem:[%s4087 + $0x170] sm:%s4078]
                %4182 = vst [vmem:[%s4088 + $0x170] sm:%s4078] %v4181
                %v4183 = vld [vmem:[%s4087 + $0x178] sm:%s4078]
                %4184 = vst [vmem:[%s4088 + $0x178] sm:%s4078] %v4183
                %v4185 = vld [vmem:[%s4087 + $0x180] sm:%s4078]
                %4186 = vst [vmem:[%s4088 + $0x180] sm:%s4078] %v4185
                %v4187 = vld [vmem:[%s4087 + $0x188] sm:%s4078]
                %4188 = vst [vmem:[%s4088 + $0x188] sm:%s4078] %v4187
                %v4189 = vld [vmem:[%s4087 + $0x190] sm:%s4078]
                %4190 = vst [vmem:[%s4088 + $0x190] sm:%s4078] %v4189
                %v4191 = vld [vmem:[%s4087 + $0x198] sm:%s4078]
                %4192 = vst [vmem:[%s4088 + $0x198] sm:%s4078] %v4191
                %v4193 = vld [vmem:[%s4087 + $0x1a0] sm:%s4078]
                %4194 = vst [vmem:[%s4088 + $0x1a0] sm:%s4078] %v4193
                %v4195 = vld [vmem:[%s4087 + $0x1a8] sm:%s4078]
                %4196 = vst [vmem:[%s4088 + $0x1a8] sm:%s4078] %v4195
                %v4197 = vld [vmem:[%s4087 + $0x1b0] sm:%s4078]
                %4198 = vst [vmem:[%s4088 + $0x1b0] sm:%s4078] %v4197
                %v4199 = vld [vmem:[%s4087 + $0x1b8] sm:%s4078]
                %4200 = vst [vmem:[%s4088 + $0x1b8] sm:%s4078] %v4199
                %v4201 = vld [vmem:[%s4087 + $0x1c0] sm:%s4078]
                %4202 = vst [vmem:[%s4088 + $0x1c0] sm:%s4078] %v4201
                %v4203 = vld [vmem:[%s4087 + $0x1c8] sm:%s4078]
                %4204 = vst [vmem:[%s4088 + $0x1c8] sm:%s4078] %v4203
                %v4205 = vld [vmem:[%s4087 + $0x1d0] sm:%s4078]
                %4206 = vst [vmem:[%s4088 + $0x1d0] sm:%s4078] %v4205
                %v4207 = vld [vmem:[%s4087 + $0x1d8] sm:%s4078]
                %4208 = vst [vmem:[%s4088 + $0x1d8] sm:%s4078] %v4207
                %v4209 = vld [vmem:[%s4087 + $0x1e0] sm:%s4078]
                %4210 = vst [vmem:[%s4088 + $0x1e0] sm:%s4078] %v4209
                %v4211 = vld [vmem:[%s4087 + $0x1e8] sm:%s4078]
                %4212 = vst [vmem:[%s4088 + $0x1e8] sm:%s4078] %v4211
                %v4213 = vld [vmem:[%s4087 + $0x1f0] sm:%s4078]
                %4214 = vst [vmem:[%s4088 + $0x1f0] sm:%s4078] %v4213
                %v4215 = vld [vmem:[%s4087 + $0x1f8] sm:%s4078]
                %4216 = vst [vmem:[%s4088 + $0x1f8] sm:%s4078] %v4215
                %s4217 = sadd.s32 1, %s4086
                %p4218 = scmp.ge.s32.totalorder %s4217, %s4079
                %s4219 = scalar_select %p4218, 0, %s4217
                %s4220 = smul.u32 %s4219, 512
                %s4221 = smul.u32 %s4219, 512
                %s4222 = scalar_lea.vmem %s4058, %s4220 [#allocation2]
                %s4223 = scalar_lea.vmem %s4069, %s4221
              $region77: #{tpu_custom_call.1} parent=71 // loop_footer
                %s4083 = sadd.s32 %s4081, 1
              $region78: #{tpu_custom_call.1} parent=71 // loop_footer_branch
                %4080 = sbr.rel target = $region74
              $region79: #{tpu_custom_call.1} parent=71 // loop_exit
                _
              %s4224 = sshrl.u32 %s4065, 6
              %s4225 = sand.u32 %s4065, 63
              %s4226 = smul.u32 %s4224, 64
              %s4227 = smul.u32 8, %s4226
              %s4228 = scalar_lea.vmem %s4058, %s4227 [#allocation2]
              %s4229 = smul.u32 8, %s4226
              %s4230 = scalar_lea.vmem %s4069, %s4229
              // While loop
              $region80: #{tpu_custom_call.1} parent=71 // loop_pre_header
                _
              $region81: #{tpu_custom_call.1} parent=71 // loop_header
                %s4232 = sphi 0, %s4234
                %p4233 = scmp.ge.s32.totalorder %s4232, %s4225
                %s4237 = sphi 0, %s4244
                %s4238 = sphi %s4228, %s4247
                %s4239 = sphi %s4230, %s4248
              $region82: #{tpu_custom_call.1} parent=71 // loop_header_branch
                %4236 = sbr.rel (%p4233) target = $region86
              $region83: #{tpu_custom_call.1} parent=71 // loop_body
                %v4240 = vld [vmem:[%s4238] sm:%s4078]
                %4241 = vst [vmem:[%s4239] sm:%s4078] %v4240
                %s4242 = sadd.s32 1, %s4237
                %p4243 = scmp.ge.s32.totalorder %s4242, %s4225
                %s4244 = scalar_select %p4243, 0, %s4242
                %s4245 = smul.u32 %s4244, 8
                %s4246 = smul.u32 %s4244, 8
                %s4247 = scalar_lea.vmem %s4228, %s4245 [#allocation2]
                %s4248 = scalar_lea.vmem %s4230, %s4246
              $region84: #{tpu_custom_call.1} parent=71 // loop_footer
                %s4234 = sadd.s32 %s4232, 1
              $region85: #{tpu_custom_call.1} parent=71 // loop_footer_branch
                %4231 = sbr.rel target = $region81
              $region86: #{tpu_custom_call.1} parent=71 // loop_exit
                _
            $region72: #{tpu_custom_call.1} parent=63 // pred_fallthru
              _
          $region64: #{tpu_custom_call.1} parent=59 // pred_fallthru
            _
          %4423 = vnop
        $region60: #{tpu_custom_call.1} parent=55 // pred_fallthru
          _
      $region56: #{tpu_custom_call.1} parent=5 // pred_fallthru
        _
      %p4424 = scmp.le.s32.totalorder 2, %s15
      // Predicated region
      $region109: #{tpu_custom_call.1} parent=5 // pred_check
        %p4425 = pneg %p4424
      $region110: #{tpu_custom_call.1} parent=5 // pred_check_branch
        %4427 = sbr.rel (%p4425) target = $region112
      $region111: #{tpu_custom_call.1} parent=5 // pred_region
        %s4428 = ssub.s32 %s15, 2
        // Predicated region
        $region113: #{tpu_custom_call.1} parent=111 // pred_check
          %p4429 = pneg %p243
        $region114: #{tpu_custom_call.1} parent=111 // pred_check_branch
          %4431 = sbr.rel (%p4429) target = $region116
        $region115: #{tpu_custom_call.1} parent=111 // pred_region
          %s4432 = sand.u32 %s228, 1
          %s4433 = sand.u32 %s228, 1
          %s4434 = smul.addr %s4433, 512
          %s4435 = scalar_lea.vmem [#allocation2], %s4434
        $region116: #{tpu_custom_call.1} parent=111 // pred_fallthru
          _
      $region112: #{tpu_custom_call.1} parent=5 // pred_fallthru
        _
    $region6: #{tpu_custom_call.1} parent=1 // loop_footer
      %s19 = sadd.s32 1, %s15
    $region7: #{tpu_custom_call.1} parent=1 // loop_footer_branch
      %14 = sbr.rel target = $region3
    $region8: #{tpu_custom_call.1} parent=1 // loop_exit
      _

</llo_original>
